<compile_context>
chip_gen: v7x
topology: tpu7x:2x2x1
jax: 0.10.0
libtpu: 0.0.40
codegen_flags: <defaults>
</compile_context>

<pallas_src>
import jax
import jax.numpy as jnp
from jax.experimental import pallas as pl
from jax.experimental.pallas import tpu as pltpu

NUM1 = 512      # latent dim (input to linear1)
NUM2 = 1024     # hidden dim
OUT = 784       # 28*28 output pixels
OUT_PAD = 896   # 7 * 128, lane-dense padded output width


def _round_up(n, m):
    return ((n + m - 1) // m) * m


def _gen_model_kernel(x_ref, w1_ref, b1_ref, w2_ref, b2_ref, o_ref):
    # linear1: (TB, 512)bf16 @ (512, 1024)bf16 -> f32 accumulate
    h = jnp.dot(x_ref[...], w1_ref[...], preferred_element_type=jnp.float32)
    h = h + b1_ref[...]                       # f32 bias add (VPU)
    # LeakyReLU, PyTorch default negative_slope = 0.01, in f32
    h = jnp.where(h > 0, h, 0.01 * h)
    # linear2: (TB, 1024)bf16 @ (1024, 896)bf16 -> f32 accumulate
    y = jnp.dot(h.astype(jnp.bfloat16), w2_ref[...],
                preferred_element_type=jnp.float32)
    y = y + b2_ref[...]                       # f32 bias add
    o_ref[...] = y.astype(o_ref.dtype)


def gen_model_forward(x, w1, b1, w2, b2):
    """Generator MLP forward on TPU via a batch-tiled Pallas kernel.

    x  : (B, 512)  float32 latent noise
    w1 : (512, 1024) float32, b1 : (1, 1024) float32
    w2 : (1024, 784) float32, b2 : (1, 784)  float32
    returns (B, 784) float32
    """
    B = x.shape[0]

    # Batch tile: 256 rows per grid step for throughput; small batches round up
    # to a sublane multiple (8) and run as a single grid step.
    tb = 256 if B >= 256 else _round_up(B, 8)
    Bp = _round_up(B, tb)

    # bf16 operands for the MXU (f32 accumulate inside the kernel). Cast once
    # here so the HBM copies are half-size. Biases stay f32.
    x_bf = x.astype(jnp.bfloat16)
    if Bp != B:
        x_bf = jnp.pad(x_bf, ((0, Bp - B), (0, 0)))
    w1_bf = w1.astype(jnp.bfloat16)
    w2_bf = jnp.pad(w2.astype(jnp.bfloat16), ((0, 0), (0, OUT_PAD - OUT)))
    b2_p = jnp.pad(b2, ((0, 0), (0, OUT_PAD - OUT)))

    out_padded = pl.pallas_call(
        _gen_model_kernel,
        out_shape=jax.ShapeDtypeStruct((Bp, OUT_PAD), jnp.float32),
        grid=(Bp // tb,),
        in_specs=[
            pl.BlockSpec((tb, NUM1), lambda i: (i, 0)),       # x tile (pipelined)
            pl.BlockSpec((NUM1, NUM2), lambda i: (0, 0)),     # w1 resident
            pl.BlockSpec((1, NUM2), lambda i: (0, 0)),        # b1 resident
            pl.BlockSpec((NUM2, OUT_PAD), lambda i: (0, 0)),  # w2 resident
            pl.BlockSpec((1, OUT_PAD), lambda i: (0, 0)),     # b2 resident
        ],
        out_specs=pl.BlockSpec((tb, OUT_PAD), lambda i: (i, 0)),
        compiler_params=pltpu.CompilerParams(
            dimension_semantics=("parallel",),   # shards batch tiles across v7x's 2 TCs
            vmem_limit_bytes=24 << 20,
        ),
    )(x_bf, w1_bf, b1, w2_bf, b2_p)

    # Drop batch padding and the lane padding of the output features.
    return out_padded[:B, :OUT]


def init_params(key):
    """Deterministic parameter init mimicking nn.Linear's U(-1/sqrt(fan_in), +)."""
    k1, k2, k3, k4 = jax.random.split(key, 4)
    bound1 = 1.0 / jnp.sqrt(jnp.float32(NUM1))
    bound2 = 1.0 / jnp.sqrt(jnp.float32(NUM2))
    w1 = jax.random.uniform(k1, (NUM1, NUM2), jnp.float32, -bound1, bound1)
    b1 = jax.random.uniform(k2, (1, NUM2), jnp.float32, -bound1, bound1)
    w2 = jax.random.uniform(k3, (NUM2, OUT), jnp.float32, -bound2, bound2)
    b2 = jax.random.uniform(k4, (1, OUT), jnp.float32, -bound2, bound2)
    return w1, b1, w2, b2


if __name__ == "__main__":
    key = jax.random.PRNGKey(0)
    k_params, k_noise = jax.random.split(key)

    w1, b1, w2, b2 = init_params(k_params)

    # forward(size): only size[0] (batch) is used; noise sampling is glue and
    # done in plain JAX with a deterministic key (matches torch.randn inside
    # the module's forward).
    batch = 8
    x = jax.random.normal(k_noise, (batch, NUM1), dtype=jnp.float32)

    out = gen_model_forward(x, w1, b1, w2, b2)
    out = jax.block_until_ready(out)
    assert out.shape == (batch, OUT)

    # Reference check in plain JAX using the same bf16 operands / f32 accumulate
    # so the comparison is numerically apples-to-apples.
    x_bf = x.astype(jnp.bfloat16)
    w1_bf = w1.astype(jnp.bfloat16)
    w2_bf = w2.astype(jnp.bfloat16)
    h_ref = jnp.dot(x_bf, w1_bf, preferred_element_type=jnp.float32) + b1
    h_ref = jnp.where(h_ref > 0, h_ref, 0.01 * h_ref)
    y_ref = jnp.dot(h_ref.astype(jnp.bfloat16), w2_bf,
                    preferred_element_type=jnp.float32) + b2
    assert jnp.allclose(out, y_ref, atol=2e-2, rtol=2e-2)

    print("KERNEL_OK")
</pallas_src>

<mosaic_0001>
module attributes {stable_mosaic.version = 11 : i64} {
  func.func @_gen_model_kernel(%arg0: i32, %arg1: memref<8x512xbf16, #tpu.memory_space<vmem>>, %arg2: memref<512x1024xbf16, #tpu.memory_space<vmem>>, %arg3: memref<1x1024xf32, #tpu.memory_space<vmem>>, %arg4: memref<1024x896xbf16, #tpu.memory_space<vmem>>, %arg5: memref<1x896xf32, #tpu.memory_space<vmem>>, %arg6: memref<8x896xf32, #tpu.memory_space<vmem>>) attributes {dimension_semantics = [#tpu.dimension_semantics<parallel>], iteration_bounds = array<i64: 1>, scalar_prefetch = 0 : i64, scratch_operands = 0 : i64, tpu.core_type = #tpu.core_type<tc>, window_params = [{transform_indices = @transform_0, window_bounds = array<i64: 8, 512>}, {pipeline_mode = #tpu.pipeline_mode<synchronous>, transform_indices = @transform_1, window_bounds = array<i64: 512, 1024>}, {pipeline_mode = #tpu.pipeline_mode<synchronous>, transform_indices = @transform_2, window_bounds = array<i64: 1, 1024>}, {pipeline_mode = #tpu.pipeline_mode<synchronous>, transform_indices = @transform_3, window_bounds = array<i64: 1024, 896>}, {pipeline_mode = #tpu.pipeline_mode<synchronous>, transform_indices = @transform_4, window_bounds = array<i64: 1, 896>}, {transform_indices = @transform_5, window_bounds = array<i64: 8, 896>}]} {
    %c0 = arith.constant 0 : index
    %c0_0 = arith.constant 0 : index
    %0 = vector.load %arg1[%c0, %c0_0] : memref<8x512xbf16, #tpu.memory_space<vmem>>, vector<8x512xbf16>
    %c0_1 = arith.constant 0 : index
    %c0_2 = arith.constant 0 : index
    %1 = vector.load %arg2[%c0_1, %c0_2] : memref<512x1024xbf16, #tpu.memory_space<vmem>>, vector<512x1024xbf16>
    %cst = arith.constant dense<0.000000e+00> : vector<8x1024xf32>
    %2 = tpu.matmul %0, %1, %cst {dimension_numbers = #tpu.dot_dimension_numbers<[1], [0], [0], [1], [0, 0, 1, 1], [], []>} : vector<8x512xbf16>, vector<512x1024xbf16>, vector<8x1024xf32> -> vector<8x1024xf32>
    %c0_3 = arith.constant 0 : index
    %c0_4 = arith.constant 0 : index
    %3 = vector.load %arg3[%c0_3, %c0_4] : memref<1x1024xf32, #tpu.memory_space<vmem>>, vector<1x1024xf32>
    %4 = vector.broadcast %3 : vector<1x1024xf32> to vector<8x1024xf32>
    %5 = arith.addf %2, %4 : vector<8x1024xf32>
    %cst_5 = arith.constant 0.000000e+00 : f32
    %6 = vector.broadcast %cst_5 : f32 to vector<8x1024xf32>
    %7 = arith.cmpf ogt, %5, %6 : vector<8x1024xf32>
    %cst_6 = arith.constant 0.00999999977 : f32
    %8 = vector.broadcast %cst_6 : f32 to vector<8x1024xf32>
    %9 = arith.mulf %8, %5 : vector<8x1024xf32>
    %10 = arith.select %7, %5, %9 : vector<8x1024xi1>, vector<8x1024xf32>
    %11 = arith.truncf %10 : vector<8x1024xf32> to vector<8x1024xbf16>
    %c0_7 = arith.constant 0 : index
    %c0_8 = arith.constant 0 : index
    %12 = vector.load %arg4[%c0_7, %c0_8] : memref<1024x896xbf16, #tpu.memory_space<vmem>>, vector<1024x896xbf16>
    %cst_9 = arith.constant dense<0.000000e+00> : vector<8x896xf32>
    %13 = tpu.matmul %11, %12, %cst_9 {dimension_numbers = #tpu.dot_dimension_numbers<[1], [0], [0], [1], [0, 0, 1, 1], [], []>} : vector<8x1024xbf16>, vector<1024x896xbf16>, vector<8x896xf32> -> vector<8x896xf32>
    %c0_10 = arith.constant 0 : index
    %c0_11 = arith.constant 0 : index
    %14 = vector.load %arg5[%c0_10, %c0_11] : memref<1x896xf32, #tpu.memory_space<vmem>>, vector<1x896xf32>
    %15 = vector.broadcast %14 : vector<1x896xf32> to vector<8x896xf32>
    %16 = arith.addf %13, %15 : vector<8x896xf32>
    %c0_12 = arith.constant 0 : index
    %c0_13 = arith.constant 0 : index
    %17 = vector.load %arg6[%c0_12, %c0_13] : memref<8x896xf32, #tpu.memory_space<vmem>>, vector<8x896xf32>
    tpu.vector_store %arg6[%c0_12, %c0_13], %16 {strides = array<i32>} : memref<8x896xf32, #tpu.memory_space<vmem>>, vector<8x896xf32>,
    return
  }
  func.func @transform_0(%arg0: i32) -> (i32, i32) {
    %c0_i32 = arith.constant 0 : i32
    %c0_i32_0 = arith.constant 0 : i32
    return %arg0, %c0_i32 : i32, i32
  }
  func.func @transform_1(%arg0: i32) -> (i32, i32) {
    %c0_i32 = arith.constant 0 : i32
    %c0_i32_0 = arith.constant 0 : i32
    %c0_i32_1 = arith.constant 0 : i32
    return %c0_i32, %c0_i32_0 : i32, i32
  }
  func.func @transform_2(%arg0: i32) -> (i32, i32) {
    %c0_i32 = arith.constant 0 : i32
    %c0_i32_0 = arith.constant 0 : i32
    %c0_i32_1 = arith.constant 0 : i32
    return %c0_i32, %c0_i32_0 : i32, i32
  }
  func.func @transform_3(%arg0: i32) -> (i32, i32) {
    %c0_i32 = arith.constant 0 : i32
    %c0_i32_0 = arith.constant 0 : i32
    %c0_i32_1 = arith.constant 0 : i32
    return %c0_i32, %c0_i32_0 : i32, i32
  }
  func.func @transform_4(%arg0: i32) -> (i32, i32) {
    %c0_i32 = arith.constant 0 : i32
    %c0_i32_0 = arith.constant 0 : i32
    %c0_i32_1 = arith.constant 0 : i32
    return %c0_i32, %c0_i32_0 : i32, i32
  }
  func.func @transform_5(%arg0: i32) -> (i32, i32) {
    %c0_i32 = arith.constant 0 : i32
    %c0_i32_0 = arith.constant 0 : i32
    return %arg0, %c0_i32 : i32, i32
  }
}

</mosaic_0001>

<llo_original>
// kernel: tpu_custom_call.1
$region0: #{tpu_custom_call.1}
  #allocation0 [shape = 'u32[]', space=smem, size = 0x4, offset = 0x4, fixed_abs, tag = 'smem constant byte address 0x4 - core index']
  #allocation1 [shape = 'u32[144,128]{1,0:T(1,128)}', space=vmem, size = 0x12000, scoped, tag = 'internal scratch']
  %s0 = inlined_call_operand.hbm [shape: bf16[8,512], index: 0, kind: input, shape index: {}]
  %s1 = inlined_call_operand.hbm [shape: bf16[512,1024], index: 1, kind: input, shape index: {}]
  %s2 = inlined_call_operand.hbm [shape: f32[1,1024], index: 2, kind: input, shape index: {}]
  %s3 = inlined_call_operand.hbm [shape: bf16[1024,896], index: 3, kind: input, shape index: {}]
  %s4 = inlined_call_operand.hbm [shape: f32[1,896], index: 4, kind: input, shape index: {}]
  %s5 = inlined_call_operand.hbm [shape: f32[8,896], index: 5, kind: output, shape index: {}]
  %s6 = sld [smem:[#allocation0]]
  $region50: #{tpu_custom_call.1} parent=0
    _
  %s8 = ssub.s32 1, %s6
  %s9 = scalar_select 0, %s8, %s6
  $region1: #{tpu_custom_call.1} parent=0
    #allocation2 [shape = 'u8[8192]{0}', space=vmem, size = 0x2000, scoped, tag = 'input window, operand 0, single buffered']
    #allocation3 [shape = 's32[1]{0}', space=sflag, size = 0x4, scoped, tag = 'scoped memory for tpu_custom_call.1']
    #allocation4 [shape = 's32[1]{0}', space=sflag, size = 0x4, scoped, tag = 'scoped memory for tpu_custom_call.1']
    #allocation5 [shape = 'u8[1048576]{0}', space=vmem, size = 0x100000, scoped, tag = 'input window, operand 1, single buffered']
    #allocation6 [shape = 's32[1]{0}', space=sflag, size = 0x4, scoped, tag = 'scoped memory for tpu_custom_call.1']
    #allocation7 [shape = 'u8[4096]{0}', space=vmem, size = 0x1000, scoped, tag = 'input window, operand 2, single buffered']
    #allocation8 [shape = 'u8[1835008]{0}', space=vmem, size = 0x1c0000, scoped, tag = 'input window, operand 3, single buffered']
    #allocation9 [shape = 's32[1]{0}', space=sflag, size = 0x4, scoped, tag = 'scoped memory for tpu_custom_call.1']
    #allocation10 [shape = 'u8[3584]{0}', space=vmem, size = 0x1000, scoped, tag = 'input window, operand 4, single buffered']
    #allocation11 [shape = 'u8[28672]{0}', space=vmem, size = 0x7000, scoped, tag = 'output window, operand 0, single buffered']
    %10 = vsyncpa [#allocation3], 0
    %11 = vsyncpa [#allocation6], 0
    %12 = vsyncpa [#allocation9], 0
    %13 = vsyncpa [#allocation4], 0
    // Predicated region
    $region2: #{tpu_custom_call.1} parent=1 // pred_check
      _
    $region3: #{tpu_custom_call.1} parent=1 // pred_check_branch
      %15 = sbr.rel (0) target = $region5
    $region4: #{tpu_custom_call.1} parent=1 // pred_region
      %s17 = ssub.s32 256, 256
      %18 = vsyncadd [#allocation3], %s17
      %s20 = sshll.u32 [#allocation2], 4
      %s21 = int_to_ptr.vmem [resolvable:$true] %s20
      %23 = dma.hbm_to_vmem [thread:$0]  %s0, 256, %s21, [#allocation3]
    $region5: #{tpu_custom_call.1} parent=1 // pred_fallthru
      _
    // Predicated region
    $region6: #{tpu_custom_call.1} parent=1 // pred_check
      _
    $region7: #{tpu_custom_call.1} parent=1 // pred_check_branch
      %25 = sbr.rel (0) target = $region9
    $region8: #{tpu_custom_call.1} parent=1 // pred_region
      %s27 = ssub.s32 32768, 32768
      %28 = vsyncadd [#allocation6], %s27
      %s29 = sshll.u32 [#allocation5], 4
      %s30 = int_to_ptr.vmem [resolvable:$true] %s29
      %35 = dma.hbm_to_vmem [thread:$0]  %s1, 32768, %s30, [#allocation6], 512, 512, 32
    $region9: #{tpu_custom_call.1} parent=1 // pred_fallthru
      _
    // Predicated region
    $region10: #{tpu_custom_call.1} parent=1 // pred_check
      _
    $region11: #{tpu_custom_call.1} parent=1 // pred_check_branch
      %37 = sbr.rel (0) target = $region13
    $region12: #{tpu_custom_call.1} parent=1 // pred_region
      %s39 = ssub.s32 128, 128
      %40 = vsyncadd [#allocation6], %s39
      %s42 = sshll.u32 [#allocation7], 4
      %s43 = int_to_ptr.vmem [resolvable:$true] %s42
      %45 = dma.hbm_to_vmem [thread:$0]  %s2, 128, %s43, [#allocation6]
    $region13: #{tpu_custom_call.1} parent=1 // pred_fallthru
      _
    // Predicated region
    $region14: #{tpu_custom_call.1} parent=1 // pred_check
      _
    $region15: #{tpu_custom_call.1} parent=1 // pred_check_branch
      %47 = sbr.rel (0) target = $region17
    $region16: #{tpu_custom_call.1} parent=1 // pred_region
      %s49 = ssub.s32 57344, 57344
      %50 = vsyncadd [#allocation9], %s49
      %s51 = sshll.u32 [#allocation8], 4
      %s52 = int_to_ptr.vmem [resolvable:$true] %s51
      %57 = dma.hbm_to_vmem [thread:$0]  %s3, 57344, %s52, [#allocation9], 448, 448, 28
    $region17: #{tpu_custom_call.1} parent=1 // pred_fallthru
      _
    // Predicated region
    $region18: #{tpu_custom_call.1} parent=1 // pred_check
      _
    $region19: #{tpu_custom_call.1} parent=1 // pred_check_branch
      %59 = sbr.rel (0) target = $region21
    $region20: #{tpu_custom_call.1} parent=1 // pred_region
      %s61 = ssub.s32 112, 112
      %62 = vsyncadd [#allocation9], %s61
      %s64 = sshll.u32 [#allocation10], 4
      %s65 = int_to_ptr.vmem [resolvable:$true] %s64
      %67 = dma.hbm_to_vmem [thread:$0]  %s4, 112, %s65, [#allocation9]
    $region21: #{tpu_custom_call.1} parent=1 // pred_fallthru
      _
    // Predicated region
    $region22: #{tpu_custom_call.1} parent=1 // pred_check
      _
    $region23: #{tpu_custom_call.1} parent=1 // pred_check_branch
      %69 = sbr.rel (0) target = $region25
    $region24: #{tpu_custom_call.1} parent=1 // pred_region
      %70 = dma.done [#allocation3], 256
    $region25: #{tpu_custom_call.1} parent=1 // pred_fallthru
      _
    // Predicated region
    $region26: #{tpu_custom_call.1} parent=1 // pred_check
      _
    $region27: #{tpu_custom_call.1} parent=1 // pred_check_branch
      %72 = sbr.rel (0) target = $region29
    $region28: #{tpu_custom_call.1} parent=1 // pred_region
      %73 = dma.done [#allocation6], 32768
    $region29: #{tpu_custom_call.1} parent=1 // pred_fallthru
      _
    // Predicated region
    $region30: #{tpu_custom_call.1} parent=1 // pred_check
      _
    $region31: #{tpu_custom_call.1} parent=1 // pred_check_branch
      %75 = sbr.rel (0) target = $region33
    $region32: #{tpu_custom_call.1} parent=1 // pred_region
      %76 = dma.done [#allocation6], 128
    $region33: #{tpu_custom_call.1} parent=1 // pred_fallthru
      _
    // Predicated region
    $region34: #{tpu_custom_call.1} parent=1 // pred_check
      _
    $region35: #{tpu_custom_call.1} parent=1 // pred_check_branch
      %78 = sbr.rel (0) target = $region37
    $region36: #{tpu_custom_call.1} parent=1 // pred_region
      %79 = dma.done [#allocation9], 57344
    $region37: #{tpu_custom_call.1} parent=1 // pred_fallthru
      _
    // Predicated region
    $region38: #{tpu_custom_call.1} parent=1 // pred_check
      _
    $region39: #{tpu_custom_call.1} parent=1 // pred_check_branch
      %81 = sbr.rel (0) target = $region41
    $region40: #{tpu_custom_call.1} parent=1 // pred_region
      %82 = dma.done [#allocation9], 112
    $region41: #{tpu_custom_call.1} parent=1 // pred_fallthru
      _
    %v84 = vld [vmem:[#allocation2] sm:$0xff]
    %v85 = vld [vmem:[#allocation2 + $0x8] sm:$0xff]
    %v86 = vld [vmem:[#allocation5] sm:$0xff]
    %v87 = vld [vmem:[#allocation5 + $0x8] sm:$0xff]
    %v88 = vld [vmem:[#allocation5 + $0x10] sm:$0xff]
    %v89 = vld [vmem:[#allocation5 + $0x18] sm:$0xff]
    %v90 = vld [vmem:[#allocation5 + $0x20] sm:$0xff]
    %v91 = vld [vmem:[#allocation5 + $0x28] sm:$0xff]
    %v92 = vld [vmem:[#allocation5 + $0x30] sm:$0xff]
    %v93 = vld [vmem:[#allocation5 + $0x38] sm:$0xff]
    %v94 = vld [vmem:[#allocation5 + $0x40] sm:$0xff]
    %v95 = vld [vmem:[#allocation5 + $0x48] sm:$0xff]
    %v96 = vld [vmem:[#allocation5 + $0x50] sm:$0xff]
    %v97 = vld [vmem:[#allocation5 + $0x58] sm:$0xff]
    %v98 = vld [vmem:[#allocation5 + $0x60] sm:$0xff]
    %v99 = vld [vmem:[#allocation5 + $0x68] sm:$0xff]
    %v100 = vld [vmem:[#allocation5 + $0x70] sm:$0xff]
    %v101 = vld [vmem:[#allocation5 + $0x78] sm:$0xff]
    %v102 = vld [vmem:[#allocation5 + $0x80] sm:$0xff]
    %v103 = vld [vmem:[#allocation5 + $0x88] sm:$0xff]
    %v104 = vld [vmem:[#allocation5 + $0x90] sm:$0xff]
    %v105 = vld [vmem:[#allocation5 + $0x98] sm:$0xff]
    %v106 = vld [vmem:[#allocation5 + $0xa0] sm:$0xff]
    %v107 = vld [vmem:[#allocation5 + $0xa8] sm:$0xff]
    %v108 = vld [vmem:[#allocation5 + $0xb0] sm:$0xff]
    %v109 = vld [vmem:[#allocation5 + $0xb8] sm:$0xff]
    %v110 = vld [vmem:[#allocation5 + $0xc0] sm:$0xff]
    %v111 = vld [vmem:[#allocation5 + $0xc8] sm:$0xff]
    %v112 = vld [vmem:[#allocation5 + $0xd0] sm:$0xff]
    %v113 = vld [vmem:[#allocation5 + $0xd8] sm:$0xff]
    %v114 = vld [vmem:[#allocation5 + $0xe0] sm:$0xff]
    %v115 = vld [vmem:[#allocation5 + $0xe8] sm:$0xff]
    %v116 = vld [vmem:[#allocation5 + $0xf0] sm:$0xff]
    %v117 = vld [vmem:[#allocation5 + $0xf8] sm:$0xff]
    %v118 = vld [vmem:[#allocation5 + $0x100] sm:$0xff]
    %v119 = vld [vmem:[#allocation5 + $0x108] sm:$0xff]
    %v120 = vld [vmem:[#allocation5 + $0x110] sm:$0xff]
    %v121 = vld [vmem:[#allocation5 + $0x118] sm:$0xff]
    %v122 = vld [vmem:[#allocation5 + $0x120] sm:$0xff]
    %v123 = vld [vmem:[#allocation5 + $0x128] sm:$0xff]
    %v124 = vld [vmem:[#allocation5 + $0x130] sm:$0xff]
    %v125 = vld [vmem:[#allocation5 + $0x138] sm:$0xff]
    %v126 = vld [vmem:[#allocation5 + $0x140] sm:$0xff]
    %v127 = vld [vmem:[#allocation5 + $0x148] sm:$0xff]
    %v128 = vld [vmem:[#allocation5 + $0x150] sm:$0xff]
    %v129 = vld [vmem:[#allocation5 + $0x158] sm:$0xff]
    %v130 = vld [vmem:[#allocation5 + $0x160] sm:$0xff]
    %v131 = vld [vmem:[#allocation5 + $0x168] sm:$0xff]
    %v132 = vld [vmem:[#allocation5 + $0x170] sm:$0xff]
    %v133 = vld [vmem:[#allocation5 + $0x178] sm:$0xff]
    %v134 = vld [vmem:[#allocation5 + $0x180] sm:$0xff]
    %v135 = vld [vmem:[#allocation5 + $0x188] sm:$0xff]
    %v136 = vld [vmem:[#allocation5 + $0x190] sm:$0xff]
    %v137 = vld [vmem:[#allocation5 + $0x198] sm:$0xff]
    %v138 = vld [vmem:[#allocation5 + $0x1a0] sm:$0xff]
    %v139 = vld [vmem:[#allocation5 + $0x1a8] sm:$0xff]
    %v140 = vld [vmem:[#allocation5 + $0x1b0] sm:$0xff]
    %v141 = vld [vmem:[#allocation5 + $0x1b8] sm:$0xff]
    %v142 = vld [vmem:[#allocation5 + $0x1c0] sm:$0xff]
    %v143 = vld [vmem:[#allocation5 + $0x1c8] sm:$0xff]
    %v144 = vld [vmem:[#allocation5 + $0x1d0] sm:$0xff]
    %v145 = vld [vmem:[#allocation5 + $0x1d8] sm:$0xff]
    %v146 = vld [vmem:[#allocation5 + $0x1e0] sm:$0xff]
    %v147 = vld [vmem:[#allocation5 + $0x1e8] sm:$0xff]
    %v148 = vld [vmem:[#allocation5 + $0x1f0] sm:$0xff]
    %v149 = vld [vmem:[#allocation5 + $0x1f8] sm:$0xff]
    %v150 = vld [vmem:[#allocation5 + $0x200] sm:$0xff]
    %v151 = vld [vmem:[#allocation5 + $0x208] sm:$0xff]
    %v152 = vld [vmem:[#allocation5 + $0x210] sm:$0xff]
    %v153 = vld [vmem:[#allocation5 + $0x218] sm:$0xff]
    %v154 = vld [vmem:[#allocation5 + $0x220] sm:$0xff]
    %v155 = vld [vmem:[#allocation5 + $0x228] sm:$0xff]
    %v156 = vld [vmem:[#allocation5 + $0x230] sm:$0xff]
    %v157 = vld [vmem:[#allocation5 + $0x238] sm:$0xff]
    %v158 = vld [vmem:[#allocation5 + $0x240] sm:$0xff]
    %v159 = vld [vmem:[#allocation5 + $0x248] sm:$0xff]
    %v160 = vld [vmem:[#allocation5 + $0x250] sm:$0xff]
    %v161 = vld [vmem:[#allocation5 + $0x258] sm:$0xff]
    %v162 = vld [vmem:[#allocation5 + $0x260] sm:$0xff]
    %v163 = vld [vmem:[#allocation5 + $0x268] sm:$0xff]
    %v164 = vld [vmem:[#allocation5 + $0x270] sm:$0xff]
    %v165 = vld [vmem:[#allocation5 + $0x278] sm:$0xff]
    %v166 = vld [vmem:[#allocation5 + $0x280] sm:$0xff]
    %v167 = vld [vmem:[#allocation5 + $0x288] sm:$0xff]
    %v168 = vld [vmem:[#allocation5 + $0x290] sm:$0xff]
    %v169 = vld [vmem:[#allocation5 + $0x298] sm:$0xff]
    %v170 = vld [vmem:[#allocation5 + $0x2a0] sm:$0xff]
    %v171 = vld [vmem:[#allocation5 + $0x2a8] sm:$0xff]
    %v172 = vld [vmem:[#allocation5 + $0x2b0] sm:$0xff]
    %v173 = vld [vmem:[#allocation5 + $0x2b8] sm:$0xff]
    %v174 = vld [vmem:[#allocation5 + $0x2c0] sm:$0xff]
    %v175 = vld [vmem:[#allocation5 + $0x2c8] sm:$0xff]
    %v176 = vld [vmem:[#allocation5 + $0x2d0] sm:$0xff]
    %v177 = vld [vmem:[#allocation5 + $0x2d8] sm:$0xff]
    %v178 = vld [vmem:[#allocation5 + $0x2e0] sm:$0xff]
    %v179 = vld [vmem:[#allocation5 + $0x2e8] sm:$0xff]
    %v180 = vld [vmem:[#allocation5 + $0x2f0] sm:$0xff]
    %v181 = vld [vmem:[#allocation5 + $0x2f8] sm:$0xff]
    %v182 = vld [vmem:[#allocation5 + $0x300] sm:$0xff]
    %v183 = vld [vmem:[#allocation5 + $0x308] sm:$0xff]
    %v184 = vld [vmem:[#allocation5 + $0x310] sm:$0xff]
    %v185 = vld [vmem:[#allocation5 + $0x318] sm:$0xff]
    %v186 = vld [vmem:[#allocation5 + $0x320] sm:$0xff]
    %v187 = vld [vmem:[#allocation5 + $0x328] sm:$0xff]
    %v188 = vld [vmem:[#allocation5 + $0x330] sm:$0xff]
    %v189 = vld [vmem:[#allocation5 + $0x338] sm:$0xff]
    %v190 = vld [vmem:[#allocation5 + $0x340] sm:$0xff]
    %v191 = vld [vmem:[#allocation5 + $0x348] sm:$0xff]
    %v192 = vld [vmem:[#allocation5 + $0x350] sm:$0xff]
    %v193 = vld [vmem:[#allocation5 + $0x358] sm:$0xff]
    %v194 = vld [vmem:[#allocation5 + $0x360] sm:$0xff]
    %v195 = vld [vmem:[#allocation5 + $0x368] sm:$0xff]
    %v196 = vld [vmem:[#allocation5 + $0x370] sm:$0xff]
    %v197 = vld [vmem:[#allocation5 + $0x378] sm:$0xff]
    %v198 = vld [vmem:[#allocation5 + $0x380] sm:$0xff]
    %v199 = vld [vmem:[#allocation5 + $0x388] sm:$0xff]
    %v200 = vld [vmem:[#allocation5 + $0x390] sm:$0xff]
    %v201 = vld [vmem:[#allocation5 + $0x398] sm:$0xff]
    %v202 = vld [vmem:[#allocation5 + $0x3a0] sm:$0xff]
    %v203 = vld [vmem:[#allocation5 + $0x3a8] sm:$0xff]
    %v204 = vld [vmem:[#allocation5 + $0x3b0] sm:$0xff]
    %v205 = vld [vmem:[#allocation5 + $0x3b8] sm:$0xff]
    %v206 = vld [vmem:[#allocation5 + $0x3c0] sm:$0xff]
    %v207 = vld [vmem:[#allocation5 + $0x3c8] sm:$0xff]
    %v208 = vld [vmem:[#allocation5 + $0x3d0] sm:$0xff]
    %v209 = vld [vmem:[#allocation5 + $0x3d8] sm:$0xff]
    %v210 = vld [vmem:[#allocation5 + $0x3e0] sm:$0xff]
    %v211 = vld [vmem:[#allocation5 + $0x3e8] sm:$0xff]
    %v212 = vld [vmem:[#allocation5 + $0x3f0] sm:$0xff]
    %v213 = vld [vmem:[#allocation5 + $0x3f8] sm:$0xff]
    %v214 = vld [vmem:[#allocation5 + $0x400] sm:$0xff]
    %v215 = vld [vmem:[#allocation5 + $0x408] sm:$0xff]
    %v216 = vld [vmem:[#allocation5 + $0x410] sm:$0xff]
    %v217 = vld [vmem:[#allocation5 + $0x418] sm:$0xff]
    %v218 = vld [vmem:[#allocation5 + $0x420] sm:$0xff]
    %v219 = vld [vmem:[#allocation5 + $0x428] sm:$0xff]
    %v220 = vld [vmem:[#allocation5 + $0x430] sm:$0xff]
    %v221 = vld [vmem:[#allocation5 + $0x438] sm:$0xff]
    %v222 = vld [vmem:[#allocation5 + $0x440] sm:$0xff]
    %v223 = vld [vmem:[#allocation5 + $0x448] sm:$0xff]
    %v224 = vld [vmem:[#allocation5 + $0x450] sm:$0xff]
    %v225 = vld [vmem:[#allocation5 + $0x458] sm:$0xff]
    %v226 = vld [vmem:[#allocation5 + $0x460] sm:$0xff]
    %v227 = vld [vmem:[#allocation5 + $0x468] sm:$0xff]
    %v228 = vld [vmem:[#allocation5 + $0x470] sm:$0xff]
    %v229 = vld [vmem:[#allocation5 + $0x478] sm:$0xff]
    %v230 = vld [vmem:[#allocation5 + $0x480] sm:$0xff]
    %v231 = vld [vmem:[#allocation5 + $0x488] sm:$0xff]
    %v232 = vld [vmem:[#allocation5 + $0x490] sm:$0xff]
    %v233 = vld [vmem:[#allocation5 + $0x498] sm:$0xff]
    %v234 = vld [vmem:[#allocation5 + $0x4a0] sm:$0xff]
    %v235 = vld [vmem:[#allocation5 + $0x4a8] sm:$0xff]
    %v236 = vld [vmem:[#allocation5 + $0x4b0] sm:$0xff]
    %v237 = vld [vmem:[#allocation5 + $0x4b8] sm:$0xff]
    %v238 = vld [vmem:[#allocation5 + $0x4c0] sm:$0xff]
    %v239 = vld [vmem:[#allocation5 + $0x4c8] sm:$0xff]
    %v240 = vld [vmem:[#allocation5 + $0x4d0] sm:$0xff]
    %v241 = vld [vmem:[#allocation5 + $0x4d8] sm:$0xff]
    %v242 = vld [vmem:[#allocation5 + $0x4e0] sm:$0xff]
    %v243 = vld [vmem:[#allocation5 + $0x4e8] sm:$0xff]
    %v244 = vld [vmem:[#allocation5 + $0x4f0] sm:$0xff]
    %v245 = vld [vmem:[#allocation5 + $0x4f8] sm:$0xff]
    %v246 = vld [vmem:[#allocation5 + $0x500] sm:$0xff]
    %v247 = vld [vmem:[#allocation5 + $0x508] sm:$0xff]
    %v248 = vld [vmem:[#allocation5 + $0x510] sm:$0xff]
    %v249 = vld [vmem:[#allocation5 + $0x518] sm:$0xff]
    %v250 = vld [vmem:[#allocation5 + $0x520] sm:$0xff]
    %v251 = vld [vmem:[#allocation5 + $0x528] sm:$0xff]
    %v252 = vld [vmem:[#allocation5 + $0x530] sm:$0xff]
    %v253 = vld [vmem:[#allocation5 + $0x538] sm:$0xff]
    %v254 = vld [vmem:[#allocation5 + $0x540] sm:$0xff]
    %v255 = vld [vmem:[#allocation5 + $0x548] sm:$0xff]
    %v256 = vld [vmem:[#allocation5 + $0x550] sm:$0xff]
    %v257 = vld [vmem:[#allocation5 + $0x558] sm:$0xff]
    %v258 = vld [vmem:[#allocation5 + $0x560] sm:$0xff]
    %v259 = vld [vmem:[#allocation5 + $0x568] sm:$0xff]
    %v260 = vld [vmem:[#allocation5 + $0x570] sm:$0xff]
    %v261 = vld [vmem:[#allocation5 + $0x578] sm:$0xff]
    %v262 = vld [vmem:[#allocation5 + $0x580] sm:$0xff]
    %v263 = vld [vmem:[#allocation5 + $0x588] sm:$0xff]
    %v264 = vld [vmem:[#allocation5 + $0x590] sm:$0xff]
    %v265 = vld [vmem:[#allocation5 + $0x598] sm:$0xff]
    %v266 = vld [vmem:[#allocation5 + $0x5a0] sm:$0xff]
    %v267 = vld [vmem:[#allocation5 + $0x5a8] sm:$0xff]
    %v268 = vld [vmem:[#allocation5 + $0x5b0] sm:$0xff]
    %v269 = vld [vmem:[#allocation5 + $0x5b8] sm:$0xff]
    %v270 = vld [vmem:[#allocation5 + $0x5c0] sm:$0xff]
    %v271 = vld [vmem:[#allocation5 + $0x5c8] sm:$0xff]
    %v272 = vld [vmem:[#allocation5 + $0x5d0] sm:$0xff]
    %v273 = vld [vmem:[#allocation5 + $0x5d8] sm:$0xff]
    %v274 = vld [vmem:[#allocation5 + $0x5e0] sm:$0xff]
    %v275 = vld [vmem:[#allocation5 + $0x5e8] sm:$0xff]
    %v276 = vld [vmem:[#allocation5 + $0x5f0] sm:$0xff]
    %v277 = vld [vmem:[#allocation5 + $0x5f8] sm:$0xff]
    %v278 = vld [vmem:[#allocation5 + $0x600] sm:$0xff]
    %v279 = vld [vmem:[#allocation5 + $0x608] sm:$0xff]
    %v280 = vld [vmem:[#allocation5 + $0x610] sm:$0xff]
    %v281 = vld [vmem:[#allocation5 + $0x618] sm:$0xff]
    %v282 = vld [vmem:[#allocation5 + $0x620] sm:$0xff]
    %v283 = vld [vmem:[#allocation5 + $0x628] sm:$0xff]
    %v284 = vld [vmem:[#allocation5 + $0x630] sm:$0xff]
    %v285 = vld [vmem:[#allocation5 + $0x638] sm:$0xff]
    %v286 = vld [vmem:[#allocation5 + $0x640] sm:$0xff]
    %v287 = vld [vmem:[#allocation5 + $0x648] sm:$0xff]
    %v288 = vld [vmem:[#allocation5 + $0x650] sm:$0xff]
    %v289 = vld [vmem:[#allocation5 + $0x658] sm:$0xff]
    %v290 = vld [vmem:[#allocation5 + $0x660] sm:$0xff]
    %v291 = vld [vmem:[#allocation5 + $0x668] sm:$0xff]
    %v292 = vld [vmem:[#allocation5 + $0x670] sm:$0xff]
    %v293 = vld [vmem:[#allocation5 + $0x678] sm:$0xff]
    %v294 = vld [vmem:[#allocation5 + $0x680] sm:$0xff]
    %v295 = vld [vmem:[#allocation5 + $0x688] sm:$0xff]
    %v296 = vld [vmem:[#allocation5 + $0x690] sm:$0xff]
    %v297 = vld [vmem:[#allocation5 + $0x698] sm:$0xff]
    %v298 = vld [vmem:[#allocation5 + $0x6a0] sm:$0xff]
    %v299 = vld [vmem:[#allocation5 + $0x6a8] sm:$0xff]
    %v300 = vld [vmem:[#allocation5 + $0x6b0] sm:$0xff]
    %v301 = vld [vmem:[#allocation5 + $0x6b8] sm:$0xff]
    %v302 = vld [vmem:[#allocation5 + $0x6c0] sm:$0xff]
    %v303 = vld [vmem:[#allocation5 + $0x6c8] sm:$0xff]
    %v304 = vld [vmem:[#allocation5 + $0x6d0] sm:$0xff]
    %v305 = vld [vmem:[#allocation5 + $0x6d8] sm:$0xff]
    %v306 = vld [vmem:[#allocation5 + $0x6e0] sm:$0xff]
    %v307 = vld [vmem:[#allocation5 + $0x6e8] sm:$0xff]
    %v308 = vld [vmem:[#allocation5 + $0x6f0] sm:$0xff]
    %v309 = vld [vmem:[#allocation5 + $0x6f8] sm:$0xff]
    %v310 = vld [vmem:[#allocation5 + $0x700] sm:$0xff]
    %v311 = vld [vmem:[#allocation5 + $0x708] sm:$0xff]
    %v312 = vld [vmem:[#allocation5 + $0x710] sm:$0xff]
    %v313 = vld [vmem:[#allocation5 + $0x718] sm:$0xff]
    %v314 = vld [vmem:[#allocation5 + $0x720] sm:$0xff]
    %v315 = vld [vmem:[#allocation5 + $0x728] sm:$0xff]
    %v316 = vld [vmem:[#allocation5 + $0x730] sm:$0xff]
    %v317 = vld [vmem:[#allocation5 + $0x738] sm:$0xff]
    %v318 = vld [vmem:[#allocation5 + $0x740] sm:$0xff]
    %v319 = vld [vmem:[#allocation5 + $0x748] sm:$0xff]
    %v320 = vld [vmem:[#allocation5 + $0x750] sm:$0xff]
    %v321 = vld [vmem:[#allocation5 + $0x758] sm:$0xff]
    %v322 = vld [vmem:[#allocation5 + $0x760] sm:$0xff]
    %v323 = vld [vmem:[#allocation5 + $0x768] sm:$0xff]
    %v324 = vld [vmem:[#allocation5 + $0x770] sm:$0xff]
    %v325 = vld [vmem:[#allocation5 + $0x778] sm:$0xff]
    %v326 = vld [vmem:[#allocation5 + $0x780] sm:$0xff]
    %v327 = vld [vmem:[#allocation5 + $0x788] sm:$0xff]
    %v328 = vld [vmem:[#allocation5 + $0x790] sm:$0xff]
    %v329 = vld [vmem:[#allocation5 + $0x798] sm:$0xff]
    %v330 = vld [vmem:[#allocation5 + $0x7a0] sm:$0xff]
    %v331 = vld [vmem:[#allocation5 + $0x7a8] sm:$0xff]
    %v332 = vld [vmem:[#allocation5 + $0x7b0] sm:$0xff]
    %v333 = vld [vmem:[#allocation5 + $0x7b8] sm:$0xff]
    %v334 = vld [vmem:[#allocation5 + $0x7c0] sm:$0xff]
    %v335 = vld [vmem:[#allocation5 + $0x7c8] sm:$0xff]
    %v336 = vld [vmem:[#allocation5 + $0x7d0] sm:$0xff]
    %v337 = vld [vmem:[#allocation5 + $0x7d8] sm:$0xff]
    %v338 = vld [vmem:[#allocation5 + $0x7e0] sm:$0xff]
    %v339 = vld [vmem:[#allocation5 + $0x7e8] sm:$0xff]
    %v340 = vld [vmem:[#allocation5 + $0x7f0] sm:$0xff]
    %v341 = vld [vmem:[#allocation5 + $0x7f8] sm:$0xff]
    %v342 = vld [vmem:[#allocation7] sm:$0xff]
    %v344 = vlaneseq
    %v345 = vshrl.u32 %v344, 7
    %v346 = vsub.s32 0, %v345
    %v347 = vrot.slane %v342, %v346
    %v348 = vlaneseq
    %v349 = vshrl.u32 %v348, 7
    %v350 = vsub.s32 1, %v349
    %v351 = vrot.slane %v342, %v350
    %v352 = vlaneseq
    %v353 = vshrl.u32 %v352, 7
    %v354 = vsub.s32 2, %v353
    %v355 = vrot.slane %v342, %v354
    %v356 = vlaneseq
    %v357 = vshrl.u32 %v356, 7
    %v358 = vsub.s32 3, %v357
    %v359 = vrot.slane %v342, %v358
    %v360 = vlaneseq
    %v361 = vshrl.u32 %v360, 7
    %v362 = vsub.s32 4, %v361
    %v363 = vrot.slane %v342, %v362
    %v364 = vlaneseq
    %v365 = vshrl.u32 %v364, 7
    %v366 = vsub.s32 5, %v365
    %v367 = vrot.slane %v342, %v366
    %v368 = vlaneseq
    %v369 = vshrl.u32 %v368, 7
    %v370 = vsub.s32 6, %v369
    %v371 = vrot.slane %v342, %v370
    %v372 = vlaneseq
    %v373 = vshrl.u32 %v372, 7
    %v374 = vsub.s32 7, %v373
    %v375 = vrot.slane %v342, %v374
    %v386 = vunpack.c.l.b16 %v84
    %v387 = vunpack.c.h.b16 %v84
    %v388 = vunpack.c.l.b16 %v85
    %v389 = vunpack.c.h.b16 %v85
    %v390 = vpack.c.b16 %v386, %v386
    %v391 = vpack.c.b16 %v387, %v387
    %v392 = vpack.c.b16 %v388, %v388
    %v393 = vpack.c.b16 %v389, %v389
    %v654 = vunpack.c.l.b16 %v86
    %v655 = vunpack.c.h.b16 %v86
    %v656 = vunpack.c.l.b16 %v87
    %v657 = vunpack.c.h.b16 %v87
    %v658 = vunpack.c.l.b16 %v88
    %v659 = vunpack.c.h.b16 %v88
    %v660 = vunpack.c.l.b16 %v89
    %v661 = vunpack.c.h.b16 %v89
    %v662 = vunpack.c.l.b16 %v90
    %v663 = vunpack.c.h.b16 %v90
    %v664 = vunpack.c.l.b16 %v91
    %v665 = vunpack.c.h.b16 %v91
    %v666 = vunpack.c.l.b16 %v92
    %v667 = vunpack.c.h.b16 %v92
    %v668 = vunpack.c.l.b16 %v93
    %v669 = vunpack.c.h.b16 %v93
    %v670 = vunpack.c.l.b16 %v94
    %v671 = vunpack.c.h.b16 %v94
    %v672 = vunpack.c.l.b16 %v95
    %v673 = vunpack.c.h.b16 %v95
    %v674 = vunpack.c.l.b16 %v96
    %v675 = vunpack.c.h.b16 %v96
    %v676 = vunpack.c.l.b16 %v97
    %v677 = vunpack.c.h.b16 %v97
    %v678 = vunpack.c.l.b16 %v98
    %v679 = vunpack.c.h.b16 %v98
    %v680 = vunpack.c.l.b16 %v99
    %v681 = vunpack.c.h.b16 %v99
    %v682 = vunpack.c.l.b16 %v100
    %v683 = vunpack.c.h.b16 %v100
    %v684 = vunpack.c.l.b16 %v101
    %v685 = vunpack.c.h.b16 %v101
    %v686 = vunpack.c.l.b16 %v102
    %v687 = vunpack.c.h.b16 %v102
    %v688 = vunpack.c.l.b16 %v103
    %v689 = vunpack.c.h.b16 %v103
    %v690 = vunpack.c.l.b16 %v104
    %v691 = vunpack.c.h.b16 %v104
    %v692 = vunpack.c.l.b16 %v105
    %v693 = vunpack.c.h.b16 %v105
    %v694 = vunpack.c.l.b16 %v106
    %v695 = vunpack.c.h.b16 %v106
    %v696 = vunpack.c.l.b16 %v107
    %v697 = vunpack.c.h.b16 %v107
    %v698 = vunpack.c.l.b16 %v108
    %v699 = vunpack.c.h.b16 %v108
    %v700 = vunpack.c.l.b16 %v109
    %v701 = vunpack.c.h.b16 %v109
    %v702 = vunpack.c.l.b16 %v110
    %v703 = vunpack.c.h.b16 %v110
    %v704 = vunpack.c.l.b16 %v111
    %v705 = vunpack.c.h.b16 %v111
    %v706 = vunpack.c.l.b16 %v112
    %v707 = vunpack.c.h.b16 %v112
    %v708 = vunpack.c.l.b16 %v113
    %v709 = vunpack.c.h.b16 %v113
    %v710 = vunpack.c.l.b16 %v114
    %v711 = vunpack.c.h.b16 %v114
    %v712 = vunpack.c.l.b16 %v115
    %v713 = vunpack.c.h.b16 %v115
    %v714 = vunpack.c.l.b16 %v116
    %v715 = vunpack.c.h.b16 %v116
    %v716 = vunpack.c.l.b16 %v117
    %v717 = vunpack.c.h.b16 %v117
    %v718 = vunpack.c.l.b16 %v118
    %v719 = vunpack.c.h.b16 %v118
    %v720 = vunpack.c.l.b16 %v119
    %v721 = vunpack.c.h.b16 %v119
    %v722 = vunpack.c.l.b16 %v120
    %v723 = vunpack.c.h.b16 %v120
    %v724 = vunpack.c.l.b16 %v121
    %v725 = vunpack.c.h.b16 %v121
    %v726 = vunpack.c.l.b16 %v122
    %v727 = vunpack.c.h.b16 %v122
    %v728 = vunpack.c.l.b16 %v123
    %v729 = vunpack.c.h.b16 %v123
    %v730 = vunpack.c.l.b16 %v124
    %v731 = vunpack.c.h.b16 %v124
    %v732 = vunpack.c.l.b16 %v125
    %v733 = vunpack.c.h.b16 %v125
    %v734 = vunpack.c.l.b16 %v126
    %v735 = vunpack.c.h.b16 %v126
    %v736 = vunpack.c.l.b16 %v127
    %v737 = vunpack.c.h.b16 %v127
    %v738 = vunpack.c.l.b16 %v128
    %v739 = vunpack.c.h.b16 %v128
    %v740 = vunpack.c.l.b16 %v129
    %v741 = vunpack.c.h.b16 %v129
    %v742 = vunpack.c.l.b16 %v130
    %v743 = vunpack.c.h.b16 %v130
    %v744 = vunpack.c.l.b16 %v131
    %v745 = vunpack.c.h.b16 %v131
    %v746 = vunpack.c.l.b16 %v132
    %v747 = vunpack.c.h.b16 %v132
    %v748 = vunpack.c.l.b16 %v133
    %v749 = vunpack.c.h.b16 %v133
    %v750 = vunpack.c.l.b16 %v134
    %v751 = vunpack.c.h.b16 %v134
    %v752 = vunpack.c.l.b16 %v135
    %v753 = vunpack.c.h.b16 %v135
    %v754 = vunpack.c.l.b16 %v136
    %v755 = vunpack.c.h.b16 %v136
    %v756 = vunpack.c.l.b16 %v137
    %v757 = vunpack.c.h.b16 %v137
    %v758 = vunpack.c.l.b16 %v138
    %v759 = vunpack.c.h.b16 %v138
    %v760 = vunpack.c.l.b16 %v139
    %v761 = vunpack.c.h.b16 %v139
    %v762 = vunpack.c.l.b16 %v140
    %v763 = vunpack.c.h.b16 %v140
    %v764 = vunpack.c.l.b16 %v141
    %v765 = vunpack.c.h.b16 %v141
    %v766 = vunpack.c.l.b16 %v142
    %v767 = vunpack.c.h.b16 %v142
    %v768 = vunpack.c.l.b16 %v143
    %v769 = vunpack.c.h.b16 %v143
    %v770 = vunpack.c.l.b16 %v144
    %v771 = vunpack.c.h.b16 %v144
    %v772 = vunpack.c.l.b16 %v145
    %v773 = vunpack.c.h.b16 %v145
    %v774 = vunpack.c.l.b16 %v146
    %v775 = vunpack.c.h.b16 %v146
    %v776 = vunpack.c.l.b16 %v147
    %v777 = vunpack.c.h.b16 %v147
    %v778 = vunpack.c.l.b16 %v148
    %v779 = vunpack.c.h.b16 %v148
    %v780 = vunpack.c.l.b16 %v149
    %v781 = vunpack.c.h.b16 %v149
    %v782 = vunpack.c.l.b16 %v150
    %v783 = vunpack.c.h.b16 %v150
    %v784 = vunpack.c.l.b16 %v151
    %v785 = vunpack.c.h.b16 %v151
    %v786 = vunpack.c.l.b16 %v152
    %v787 = vunpack.c.h.b16 %v152
    %v788 = vunpack.c.l.b16 %v153
    %v789 = vunpack.c.h.b16 %v153
    %v790 = vunpack.c.l.b16 %v154
    %v791 = vunpack.c.h.b16 %v154
    %v792 = vunpack.c.l.b16 %v155
    %v793 = vunpack.c.h.b16 %v155
    %v794 = vunpack.c.l.b16 %v156
    %v795 = vunpack.c.h.b16 %v156
    %v796 = vunpack.c.l.b16 %v157
    %v797 = vunpack.c.h.b16 %v157
    %v798 = vunpack.c.l.b16 %v158
    %v799 = vunpack.c.h.b16 %v158
    %v800 = vunpack.c.l.b16 %v159
    %v801 = vunpack.c.h.b16 %v159
    %v802 = vunpack.c.l.b16 %v160
    %v803 = vunpack.c.h.b16 %v160
    %v804 = vunpack.c.l.b16 %v161
    %v805 = vunpack.c.h.b16 %v161
    %v806 = vunpack.c.l.b16 %v162
    %v807 = vunpack.c.h.b16 %v162
    %v808 = vunpack.c.l.b16 %v163
    %v809 = vunpack.c.h.b16 %v163
    %v810 = vunpack.c.l.b16 %v164
    %v811 = vunpack.c.h.b16 %v164
    %v812 = vunpack.c.l.b16 %v165
    %v813 = vunpack.c.h.b16 %v165
    %v814 = vunpack.c.l.b16 %v166
    %v815 = vunpack.c.h.b16 %v166
    %v816 = vunpack.c.l.b16 %v167
    %v817 = vunpack.c.h.b16 %v167
    %v818 = vunpack.c.l.b16 %v168
    %v819 = vunpack.c.h.b16 %v168
    %v820 = vunpack.c.l.b16 %v169
    %v821 = vunpack.c.h.b16 %v169
    %v822 = vunpack.c.l.b16 %v170
    %v823 = vunpack.c.h.b16 %v170
    %v824 = vunpack.c.l.b16 %v171
    %v825 = vunpack.c.h.b16 %v171
    %v826 = vunpack.c.l.b16 %v172
    %v827 = vunpack.c.h.b16 %v172
    %v828 = vunpack.c.l.b16 %v173
    %v829 = vunpack.c.h.b16 %v173
    %v830 = vunpack.c.l.b16 %v174
    %v831 = vunpack.c.h.b16 %v174
    %v832 = vunpack.c.l.b16 %v175
    %v833 = vunpack.c.h.b16 %v175
    %v834 = vunpack.c.l.b16 %v176
    %v835 = vunpack.c.h.b16 %v176
    %v836 = vunpack.c.l.b16 %v177
    %v837 = vunpack.c.h.b16 %v177
    %v838 = vunpack.c.l.b16 %v178
    %v839 = vunpack.c.h.b16 %v178
    %v840 = vunpack.c.l.b16 %v179
    %v841 = vunpack.c.h.b16 %v179
    %v842 = vunpack.c.l.b16 %v180
    %v843 = vunpack.c.h.b16 %v180
    %v844 = vunpack.c.l.b16 %v181
    %v845 = vunpack.c.h.b16 %v181
    %v846 = vunpack.c.l.b16 %v182
    %v847 = vunpack.c.h.b16 %v182
    %v848 = vunpack.c.l.b16 %v183
    %v849 = vunpack.c.h.b16 %v183
    %v850 = vunpack.c.l.b16 %v184
    %v851 = vunpack.c.h.b16 %v184
    %v852 = vunpack.c.l.b16 %v185
    %v853 = vunpack.c.h.b16 %v185
    %v854 = vunpack.c.l.b16 %v186
    %v855 = vunpack.c.h.b16 %v186
    %v856 = vunpack.c.l.b16 %v187
    %v857 = vunpack.c.h.b16 %v187
    %v858 = vunpack.c.l.b16 %v188
    %v859 = vunpack.c.h.b16 %v188
    %v860 = vunpack.c.l.b16 %v189
    %v861 = vunpack.c.h.b16 %v189
    %v862 = vunpack.c.l.b16 %v190
    %v863 = vunpack.c.h.b16 %v190
    %v864 = vunpack.c.l.b16 %v191
    %v865 = vunpack.c.h.b16 %v191
    %v866 = vunpack.c.l.b16 %v192
    %v867 = vunpack.c.h.b16 %v192
    %v868 = vunpack.c.l.b16 %v193
    %v869 = vunpack.c.h.b16 %v193
    %v870 = vunpack.c.l.b16 %v194
    %v871 = vunpack.c.h.b16 %v194
    %v872 = vunpack.c.l.b16 %v195
    %v873 = vunpack.c.h.b16 %v195
    %v874 = vunpack.c.l.b16 %v196
    %v875 = vunpack.c.h.b16 %v196
    %v876 = vunpack.c.l.b16 %v197
    %v877 = vunpack.c.h.b16 %v197
    %v878 = vunpack.c.l.b16 %v198
    %v879 = vunpack.c.h.b16 %v198
    %v880 = vunpack.c.l.b16 %v199
    %v881 = vunpack.c.h.b16 %v199
    %v882 = vunpack.c.l.b16 %v200
    %v883 = vunpack.c.h.b16 %v200
    %v884 = vunpack.c.l.b16 %v201
    %v885 = vunpack.c.h.b16 %v201
    %v886 = vunpack.c.l.b16 %v202
    %v887 = vunpack.c.h.b16 %v202
    %v888 = vunpack.c.l.b16 %v203
    %v889 = vunpack.c.h.b16 %v203
    %v890 = vunpack.c.l.b16 %v204
    %v891 = vunpack.c.h.b16 %v204
    %v892 = vunpack.c.l.b16 %v205
    %v893 = vunpack.c.h.b16 %v205
    %v894 = vunpack.c.l.b16 %v206
    %v895 = vunpack.c.h.b16 %v206
    %v896 = vunpack.c.l.b16 %v207
    %v897 = vunpack.c.h.b16 %v207
    %v898 = vunpack.c.l.b16 %v208
    %v899 = vunpack.c.h.b16 %v208
    %v900 = vunpack.c.l.b16 %v209
    %v901 = vunpack.c.h.b16 %v209
    %v902 = vunpack.c.l.b16 %v210
    %v903 = vunpack.c.h.b16 %v210
    %v904 = vunpack.c.l.b16 %v211
    %v905 = vunpack.c.h.b16 %v211
    %v906 = vunpack.c.l.b16 %v212
    %v907 = vunpack.c.h.b16 %v212
    %v908 = vunpack.c.l.b16 %v213
    %v909 = vunpack.c.h.b16 %v213
    %v910 = vunpack.c.l.b16 %v214
    %v911 = vunpack.c.h.b16 %v214
    %v912 = vunpack.c.l.b16 %v215
    %v913 = vunpack.c.h.b16 %v215
    %v914 = vunpack.c.l.b16 %v216
    %v915 = vunpack.c.h.b16 %v216
    %v916 = vunpack.c.l.b16 %v217
    %v917 = vunpack.c.h.b16 %v217
    %v918 = vunpack.c.l.b16 %v218
    %v919 = vunpack.c.h.b16 %v218
    %v920 = vunpack.c.l.b16 %v219
    %v921 = vunpack.c.h.b16 %v219
    %v922 = vunpack.c.l.b16 %v220
    %v923 = vunpack.c.h.b16 %v220
    %v924 = vunpack.c.l.b16 %v221
    %v925 = vunpack.c.h.b16 %v221
    %v926 = vunpack.c.l.b16 %v222
    %v927 = vunpack.c.h.b16 %v222
    %v928 = vunpack.c.l.b16 %v223
    %v929 = vunpack.c.h.b16 %v223
    %v930 = vunpack.c.l.b16 %v224
    %v931 = vunpack.c.h.b16 %v224
    %v932 = vunpack.c.l.b16 %v225
    %v933 = vunpack.c.h.b16 %v225
    %v934 = vunpack.c.l.b16 %v226
    %v935 = vunpack.c.h.b16 %v226
    %v936 = vunpack.c.l.b16 %v227
    %v937 = vunpack.c.h.b16 %v227
    %v938 = vunpack.c.l.b16 %v228
    %v939 = vunpack.c.h.b16 %v228
    %v940 = vunpack.c.l.b16 %v229
    %v941 = vunpack.c.h.b16 %v229
    %v942 = vunpack.c.l.b16 %v230
    %v943 = vunpack.c.h.b16 %v230
    %v944 = vunpack.c.l.b16 %v231
    %v945 = vunpack.c.h.b16 %v231
    %v946 = vunpack.c.l.b16 %v232
    %v947 = vunpack.c.h.b16 %v232
    %v948 = vunpack.c.l.b16 %v233
    %v949 = vunpack.c.h.b16 %v233
    %v950 = vunpack.c.l.b16 %v234
    %v951 = vunpack.c.h.b16 %v234
    %v952 = vunpack.c.l.b16 %v235
    %v953 = vunpack.c.h.b16 %v235
    %v954 = vunpack.c.l.b16 %v236
    %v955 = vunpack.c.h.b16 %v236
    %v956 = vunpack.c.l.b16 %v237
    %v957 = vunpack.c.h.b16 %v237
    %v958 = vunpack.c.l.b16 %v238
    %v959 = vunpack.c.h.b16 %v238
    %v960 = vunpack.c.l.b16 %v239
    %v961 = vunpack.c.h.b16 %v239
    %v962 = vunpack.c.l.b16 %v240
    %v963 = vunpack.c.h.b16 %v240
    %v964 = vunpack.c.l.b16 %v241
    %v965 = vunpack.c.h.b16 %v241
    %v966 = vunpack.c.l.b16 %v242
    %v967 = vunpack.c.h.b16 %v242
    %v968 = vunpack.c.l.b16 %v243
    %v969 = vunpack.c.h.b16 %v243
    %v970 = vunpack.c.l.b16 %v244
    %v971 = vunpack.c.h.b16 %v244
    %v972 = vunpack.c.l.b16 %v245
    %v973 = vunpack.c.h.b16 %v245
    %v974 = vunpack.c.l.b16 %v246
    %v975 = vunpack.c.h.b16 %v246
    %v976 = vunpack.c.l.b16 %v247
    %v977 = vunpack.c.h.b16 %v247
    %v978 = vunpack.c.l.b16 %v248
    %v979 = vunpack.c.h.b16 %v248
    %v980 = vunpack.c.l.b16 %v249
    %v981 = vunpack.c.h.b16 %v249
    %v982 = vunpack.c.l.b16 %v250
    %v983 = vunpack.c.h.b16 %v250
    %v984 = vunpack.c.l.b16 %v251
    %v985 = vunpack.c.h.b16 %v251
    %v986 = vunpack.c.l.b16 %v252
    %v987 = vunpack.c.h.b16 %v252
    %v988 = vunpack.c.l.b16 %v253
    %v989 = vunpack.c.h.b16 %v253
    %v990 = vunpack.c.l.b16 %v254
    %v991 = vunpack.c.h.b16 %v254
    %v992 = vunpack.c.l.b16 %v255
    %v993 = vunpack.c.h.b16 %v255
    %v994 = vunpack.c.l.b16 %v256
    %v995 = vunpack.c.h.b16 %v256
    %v996 = vunpack.c.l.b16 %v257
    %v997 = vunpack.c.h.b16 %v257
    %v998 = vunpack.c.l.b16 %v258
    %v999 = vunpack.c.h.b16 %v258
    %v1000 = vunpack.c.l.b16 %v259
    %v1001 = vunpack.c.h.b16 %v259
    %v1002 = vunpack.c.l.b16 %v260
    %v1003 = vunpack.c.h.b16 %v260
    %v1004 = vunpack.c.l.b16 %v261
    %v1005 = vunpack.c.h.b16 %v261
    %v1006 = vunpack.c.l.b16 %v262
    %v1007 = vunpack.c.h.b16 %v262
    %v1008 = vunpack.c.l.b16 %v263
    %v1009 = vunpack.c.h.b16 %v263
    %v1010 = vunpack.c.l.b16 %v264
    %v1011 = vunpack.c.h.b16 %v264
    %v1012 = vunpack.c.l.b16 %v265
    %v1013 = vunpack.c.h.b16 %v265
    %v1014 = vunpack.c.l.b16 %v266
    %v1015 = vunpack.c.h.b16 %v266
    %v1016 = vunpack.c.l.b16 %v267
    %v1017 = vunpack.c.h.b16 %v267
    %v1018 = vunpack.c.l.b16 %v268
    %v1019 = vunpack.c.h.b16 %v268
    %v1020 = vunpack.c.l.b16 %v269
    %v1021 = vunpack.c.h.b16 %v269
    %v1022 = vunpack.c.l.b16 %v270
    %v1023 = vunpack.c.h.b16 %v270
    %v1024 = vunpack.c.l.b16 %v271
    %v1025 = vunpack.c.h.b16 %v271
    %v1026 = vunpack.c.l.b16 %v272
    %v1027 = vunpack.c.h.b16 %v272
    %v1028 = vunpack.c.l.b16 %v273
    %v1029 = vunpack.c.h.b16 %v273
    %v1030 = vunpack.c.l.b16 %v274
    %v1031 = vunpack.c.h.b16 %v274
    %v1032 = vunpack.c.l.b16 %v275
    %v1033 = vunpack.c.h.b16 %v275
    %v1034 = vunpack.c.l.b16 %v276
    %v1035 = vunpack.c.h.b16 %v276
    %v1036 = vunpack.c.l.b16 %v277
    %v1037 = vunpack.c.h.b16 %v277
    %v1038 = vunpack.c.l.b16 %v278
    %v1039 = vunpack.c.h.b16 %v278
    %v1040 = vunpack.c.l.b16 %v279
    %v1041 = vunpack.c.h.b16 %v279
    %v1042 = vunpack.c.l.b16 %v280
    %v1043 = vunpack.c.h.b16 %v280
    %v1044 = vunpack.c.l.b16 %v281
    %v1045 = vunpack.c.h.b16 %v281
    %v1046 = vunpack.c.l.b16 %v282
    %v1047 = vunpack.c.h.b16 %v282
    %v1048 = vunpack.c.l.b16 %v283
    %v1049 = vunpack.c.h.b16 %v283
    %v1050 = vunpack.c.l.b16 %v284
    %v1051 = vunpack.c.h.b16 %v284
    %v1052 = vunpack.c.l.b16 %v285
    %v1053 = vunpack.c.h.b16 %v285
    %v1054 = vunpack.c.l.b16 %v286
    %v1055 = vunpack.c.h.b16 %v286
    %v1056 = vunpack.c.l.b16 %v287
    %v1057 = vunpack.c.h.b16 %v287
    %v1058 = vunpack.c.l.b16 %v288
    %v1059 = vunpack.c.h.b16 %v288
    %v1060 = vunpack.c.l.b16 %v289
    %v1061 = vunpack.c.h.b16 %v289
    %v1062 = vunpack.c.l.b16 %v290
    %v1063 = vunpack.c.h.b16 %v290
    %v1064 = vunpack.c.l.b16 %v291
    %v1065 = vunpack.c.h.b16 %v291
    %v1066 = vunpack.c.l.b16 %v292
    %v1067 = vunpack.c.h.b16 %v292
    %v1068 = vunpack.c.l.b16 %v293
    %v1069 = vunpack.c.h.b16 %v293
    %v1070 = vunpack.c.l.b16 %v294
    %v1071 = vunpack.c.h.b16 %v294
    %v1072 = vunpack.c.l.b16 %v295
    %v1073 = vunpack.c.h.b16 %v295
    %v1074 = vunpack.c.l.b16 %v296
    %v1075 = vunpack.c.h.b16 %v296
    %v1076 = vunpack.c.l.b16 %v297
    %v1077 = vunpack.c.h.b16 %v297
    %v1078 = vunpack.c.l.b16 %v298
    %v1079 = vunpack.c.h.b16 %v298
    %v1080 = vunpack.c.l.b16 %v299
    %v1081 = vunpack.c.h.b16 %v299
    %v1082 = vunpack.c.l.b16 %v300
    %v1083 = vunpack.c.h.b16 %v300
    %v1084 = vunpack.c.l.b16 %v301
    %v1085 = vunpack.c.h.b16 %v301
    %v1086 = vunpack.c.l.b16 %v302
    %v1087 = vunpack.c.h.b16 %v302
    %v1088 = vunpack.c.l.b16 %v303
    %v1089 = vunpack.c.h.b16 %v303
    %v1090 = vunpack.c.l.b16 %v304
    %v1091 = vunpack.c.h.b16 %v304
    %v1092 = vunpack.c.l.b16 %v305
    %v1093 = vunpack.c.h.b16 %v305
    %v1094 = vunpack.c.l.b16 %v306
    %v1095 = vunpack.c.h.b16 %v306
    %v1096 = vunpack.c.l.b16 %v307
    %v1097 = vunpack.c.h.b16 %v307
    %v1098 = vunpack.c.l.b16 %v308
    %v1099 = vunpack.c.h.b16 %v308
    %v1100 = vunpack.c.l.b16 %v309
    %v1101 = vunpack.c.h.b16 %v309
    %v1102 = vunpack.c.l.b16 %v310
    %v1103 = vunpack.c.h.b16 %v310
    %v1104 = vunpack.c.l.b16 %v311
    %v1105 = vunpack.c.h.b16 %v311
    %v1106 = vunpack.c.l.b16 %v312
    %v1107 = vunpack.c.h.b16 %v312
    %v1108 = vunpack.c.l.b16 %v313
    %v1109 = vunpack.c.h.b16 %v313
    %v1110 = vunpack.c.l.b16 %v314
    %v1111 = vunpack.c.h.b16 %v314
    %v1112 = vunpack.c.l.b16 %v315
    %v1113 = vunpack.c.h.b16 %v315
    %v1114 = vunpack.c.l.b16 %v316
    %v1115 = vunpack.c.h.b16 %v316
    %v1116 = vunpack.c.l.b16 %v317
    %v1117 = vunpack.c.h.b16 %v317
    %v1118 = vunpack.c.l.b16 %v318
    %v1119 = vunpack.c.h.b16 %v318
    %v1120 = vunpack.c.l.b16 %v319
    %v1121 = vunpack.c.h.b16 %v319
    %v1122 = vunpack.c.l.b16 %v320
    %v1123 = vunpack.c.h.b16 %v320
    %v1124 = vunpack.c.l.b16 %v321
    %v1125 = vunpack.c.h.b16 %v321
    %v1126 = vunpack.c.l.b16 %v322
    %v1127 = vunpack.c.h.b16 %v322
    %v1128 = vunpack.c.l.b16 %v323
    %v1129 = vunpack.c.h.b16 %v323
    %v1130 = vunpack.c.l.b16 %v324
    %v1131 = vunpack.c.h.b16 %v324
    %v1132 = vunpack.c.l.b16 %v325
    %v1133 = vunpack.c.h.b16 %v325
    %v1134 = vunpack.c.l.b16 %v326
    %v1135 = vunpack.c.h.b16 %v326
    %v1136 = vunpack.c.l.b16 %v327
    %v1137 = vunpack.c.h.b16 %v327
    %v1138 = vunpack.c.l.b16 %v328
    %v1139 = vunpack.c.h.b16 %v328
    %v1140 = vunpack.c.l.b16 %v329
    %v1141 = vunpack.c.h.b16 %v329
    %v1142 = vunpack.c.l.b16 %v330
    %v1143 = vunpack.c.h.b16 %v330
    %v1144 = vunpack.c.l.b16 %v331
    %v1145 = vunpack.c.h.b16 %v331
    %v1146 = vunpack.c.l.b16 %v332
    %v1147 = vunpack.c.h.b16 %v332
    %v1148 = vunpack.c.l.b16 %v333
    %v1149 = vunpack.c.h.b16 %v333
    %v1150 = vunpack.c.l.b16 %v334
    %v1151 = vunpack.c.h.b16 %v334
    %v1152 = vunpack.c.l.b16 %v335
    %v1153 = vunpack.c.h.b16 %v335
    %v1154 = vunpack.c.l.b16 %v336
    %v1155 = vunpack.c.h.b16 %v336
    %v1156 = vunpack.c.l.b16 %v337
    %v1157 = vunpack.c.h.b16 %v337
    %v1158 = vunpack.c.l.b16 %v338
    %v1159 = vunpack.c.h.b16 %v338
    %v1160 = vunpack.c.l.b16 %v339
    %v1161 = vunpack.c.h.b16 %v339
    %v1162 = vunpack.c.l.b16 %v340
    %v1163 = vunpack.c.h.b16 %v340
    %v1164 = vunpack.c.l.b16 %v341
    %v1165 = vunpack.c.h.b16 %v341
    %v1166 = vpack.c.b16 %v662, %v654
    %v1167 = vpack.c.b16 %v663, %v655
    %v1168 = vpack.c.b16 %v664, %v656
    %v1169 = vpack.c.b16 %v665, %v657
    %v1170 = vpack.c.b16 %v666, %v658
    %v1171 = vpack.c.b16 %v667, %v659
    %v1172 = vpack.c.b16 %v668, %v660
    %v1173 = vpack.c.b16 %v669, %v661
    %v1174 = vpack.c.b16 %v678, %v670
    %v1175 = vpack.c.b16 %v679, %v671
    %v1176 = vpack.c.b16 %v680, %v672
    %v1177 = vpack.c.b16 %v681, %v673
    %v1178 = vpack.c.b16 %v682, %v674
    %v1179 = vpack.c.b16 %v683, %v675
    %v1180 = vpack.c.b16 %v684, %v676
    %v1181 = vpack.c.b16 %v685, %v677
    %v1182 = vpack.c.b16 %v694, %v686
    %v1183 = vpack.c.b16 %v695, %v687
    %v1184 = vpack.c.b16 %v696, %v688
    %v1185 = vpack.c.b16 %v697, %v689
    %v1186 = vpack.c.b16 %v698, %v690
    %v1187 = vpack.c.b16 %v699, %v691
    %v1188 = vpack.c.b16 %v700, %v692
    %v1189 = vpack.c.b16 %v701, %v693
    %v1190 = vpack.c.b16 %v710, %v702
    %v1191 = vpack.c.b16 %v711, %v703
    %v1192 = vpack.c.b16 %v712, %v704
    %v1193 = vpack.c.b16 %v713, %v705
    %v1194 = vpack.c.b16 %v714, %v706
    %v1195 = vpack.c.b16 %v715, %v707
    %v1196 = vpack.c.b16 %v716, %v708
    %v1197 = vpack.c.b16 %v717, %v709
    %v1198 = vpack.c.b16 %v726, %v718
    %v1199 = vpack.c.b16 %v727, %v719
    %v1200 = vpack.c.b16 %v728, %v720
    %v1201 = vpack.c.b16 %v729, %v721
    %v1202 = vpack.c.b16 %v730, %v722
    %v1203 = vpack.c.b16 %v731, %v723
    %v1204 = vpack.c.b16 %v732, %v724
    %v1205 = vpack.c.b16 %v733, %v725
    %v1206 = vpack.c.b16 %v742, %v734
    %v1207 = vpack.c.b16 %v743, %v735
    %v1208 = vpack.c.b16 %v744, %v736
    %v1209 = vpack.c.b16 %v745, %v737
    %v1210 = vpack.c.b16 %v746, %v738
    %v1211 = vpack.c.b16 %v747, %v739
    %v1212 = vpack.c.b16 %v748, %v740
    %v1213 = vpack.c.b16 %v749, %v741
    %v1214 = vpack.c.b16 %v758, %v750
    %v1215 = vpack.c.b16 %v759, %v751
    %v1216 = vpack.c.b16 %v760, %v752
    %v1217 = vpack.c.b16 %v761, %v753
    %v1218 = vpack.c.b16 %v762, %v754
    %v1219 = vpack.c.b16 %v763, %v755
    %v1220 = vpack.c.b16 %v764, %v756
    %v1221 = vpack.c.b16 %v765, %v757
    %v1222 = vpack.c.b16 %v774, %v766
    %v1223 = vpack.c.b16 %v775, %v767
    %v1224 = vpack.c.b16 %v776, %v768
    %v1225 = vpack.c.b16 %v777, %v769
    %v1226 = vpack.c.b16 %v778, %v770
    %v1227 = vpack.c.b16 %v779, %v771
    %v1228 = vpack.c.b16 %v780, %v772
    %v1229 = vpack.c.b16 %v781, %v773
    %v1230 = vpack.c.b16 %v790, %v782
    %v1231 = vpack.c.b16 %v791, %v783
    %v1232 = vpack.c.b16 %v792, %v784
    %v1233 = vpack.c.b16 %v793, %v785
    %v1234 = vpack.c.b16 %v794, %v786
    %v1235 = vpack.c.b16 %v795, %v787
    %v1236 = vpack.c.b16 %v796, %v788
    %v1237 = vpack.c.b16 %v797, %v789
    %v1238 = vpack.c.b16 %v806, %v798
    %v1239 = vpack.c.b16 %v807, %v799
    %v1240 = vpack.c.b16 %v808, %v800
    %v1241 = vpack.c.b16 %v809, %v801
    %v1242 = vpack.c.b16 %v810, %v802
    %v1243 = vpack.c.b16 %v811, %v803
    %v1244 = vpack.c.b16 %v812, %v804
    %v1245 = vpack.c.b16 %v813, %v805
    %v1246 = vpack.c.b16 %v822, %v814
    %v1247 = vpack.c.b16 %v823, %v815
    %v1248 = vpack.c.b16 %v824, %v816
    %v1249 = vpack.c.b16 %v825, %v817
    %v1250 = vpack.c.b16 %v826, %v818
    %v1251 = vpack.c.b16 %v827, %v819
    %v1252 = vpack.c.b16 %v828, %v820
    %v1253 = vpack.c.b16 %v829, %v821
    %v1254 = vpack.c.b16 %v838, %v830
    %v1255 = vpack.c.b16 %v839, %v831
    %v1256 = vpack.c.b16 %v840, %v832
    %v1257 = vpack.c.b16 %v841, %v833
    %v1258 = vpack.c.b16 %v842, %v834
    %v1259 = vpack.c.b16 %v843, %v835
    %v1260 = vpack.c.b16 %v844, %v836
    %v1261 = vpack.c.b16 %v845, %v837
    %v1262 = vpack.c.b16 %v854, %v846
    %v1263 = vpack.c.b16 %v855, %v847
    %v1264 = vpack.c.b16 %v856, %v848
    %v1265 = vpack.c.b16 %v857, %v849
    %v1266 = vpack.c.b16 %v858, %v850
    %v1267 = vpack.c.b16 %v859, %v851
    %v1268 = vpack.c.b16 %v860, %v852
    %v1269 = vpack.c.b16 %v861, %v853
    %v1270 = vpack.c.b16 %v870, %v862
    %v1271 = vpack.c.b16 %v871, %v863
    %v1272 = vpack.c.b16 %v872, %v864
    %v1273 = vpack.c.b16 %v873, %v865
    %v1274 = vpack.c.b16 %v874, %v866
    %v1275 = vpack.c.b16 %v875, %v867
    %v1276 = vpack.c.b16 %v876, %v868
    %v1277 = vpack.c.b16 %v877, %v869
    %v1278 = vpack.c.b16 %v886, %v878
    %v1279 = vpack.c.b16 %v887, %v879
    %v1280 = vpack.c.b16 %v888, %v880
    %v1281 = vpack.c.b16 %v889, %v881
    %v1282 = vpack.c.b16 %v890, %v882
    %v1283 = vpack.c.b16 %v891, %v883
    %v1284 = vpack.c.b16 %v892, %v884
    %v1285 = vpack.c.b16 %v893, %v885
    %v1286 = vpack.c.b16 %v902, %v894
    %v1287 = vpack.c.b16 %v903, %v895
    %v1288 = vpack.c.b16 %v904, %v896
    %v1289 = vpack.c.b16 %v905, %v897
    %v1290 = vpack.c.b16 %v906, %v898
    %v1291 = vpack.c.b16 %v907, %v899
    %v1292 = vpack.c.b16 %v908, %v900
    %v1293 = vpack.c.b16 %v909, %v901
    %v1294 = vpack.c.b16 %v918, %v910
    %v1295 = vpack.c.b16 %v919, %v911
    %v1296 = vpack.c.b16 %v920, %v912
    %v1297 = vpack.c.b16 %v921, %v913
    %v1298 = vpack.c.b16 %v922, %v914
    %v1299 = vpack.c.b16 %v923, %v915
    %v1300 = vpack.c.b16 %v924, %v916
    %v1301 = vpack.c.b16 %v925, %v917
    %v1302 = vpack.c.b16 %v934, %v926
    %v1303 = vpack.c.b16 %v935, %v927
    %v1304 = vpack.c.b16 %v936, %v928
    %v1305 = vpack.c.b16 %v937, %v929
    %v1306 = vpack.c.b16 %v938, %v930
    %v1307 = vpack.c.b16 %v939, %v931
    %v1308 = vpack.c.b16 %v940, %v932
    %v1309 = vpack.c.b16 %v941, %v933
    %v1310 = vpack.c.b16 %v950, %v942
    %v1311 = vpack.c.b16 %v951, %v943
    %v1312 = vpack.c.b16 %v952, %v944
    %v1313 = vpack.c.b16 %v953, %v945
    %v1314 = vpack.c.b16 %v954, %v946
    %v1315 = vpack.c.b16 %v955, %v947
    %v1316 = vpack.c.b16 %v956, %v948
    %v1317 = vpack.c.b16 %v957, %v949
    %v1318 = vpack.c.b16 %v966, %v958
    %v1319 = vpack.c.b16 %v967, %v959
    %v1320 = vpack.c.b16 %v968, %v960
    %v1321 = vpack.c.b16 %v969, %v961
    %v1322 = vpack.c.b16 %v970, %v962
    %v1323 = vpack.c.b16 %v971, %v963
    %v1324 = vpack.c.b16 %v972, %v964
    %v1325 = vpack.c.b16 %v973, %v965
    %v1326 = vpack.c.b16 %v982, %v974
    %v1327 = vpack.c.b16 %v983, %v975
    %v1328 = vpack.c.b16 %v984, %v976
    %v1329 = vpack.c.b16 %v985, %v977
    %v1330 = vpack.c.b16 %v986, %v978
    %v1331 = vpack.c.b16 %v987, %v979
    %v1332 = vpack.c.b16 %v988, %v980
    %v1333 = vpack.c.b16 %v989, %v981
    %v1334 = vpack.c.b16 %v998, %v990
    %v1335 = vpack.c.b16 %v999, %v991
    %v1336 = vpack.c.b16 %v1000, %v992
    %v1337 = vpack.c.b16 %v1001, %v993
    %v1338 = vpack.c.b16 %v1002, %v994
    %v1339 = vpack.c.b16 %v1003, %v995
    %v1340 = vpack.c.b16 %v1004, %v996
    %v1341 = vpack.c.b16 %v1005, %v997
    %v1342 = vpack.c.b16 %v1014, %v1006
    %v1343 = vpack.c.b16 %v1015, %v1007
    %v1344 = vpack.c.b16 %v1016, %v1008
    %v1345 = vpack.c.b16 %v1017, %v1009
    %v1346 = vpack.c.b16 %v1018, %v1010
    %v1347 = vpack.c.b16 %v1019, %v1011
    %v1348 = vpack.c.b16 %v1020, %v1012
    %v1349 = vpack.c.b16 %v1021, %v1013
    %v1350 = vpack.c.b16 %v1030, %v1022
    %v1351 = vpack.c.b16 %v1031, %v1023
    %v1352 = vpack.c.b16 %v1032, %v1024
    %v1353 = vpack.c.b16 %v1033, %v1025
    %v1354 = vpack.c.b16 %v1034, %v1026
    %v1355 = vpack.c.b16 %v1035, %v1027
    %v1356 = vpack.c.b16 %v1036, %v1028
    %v1357 = vpack.c.b16 %v1037, %v1029
    %v1358 = vpack.c.b16 %v1046, %v1038
    %v1359 = vpack.c.b16 %v1047, %v1039
    %v1360 = vpack.c.b16 %v1048, %v1040
    %v1361 = vpack.c.b16 %v1049, %v1041
    %v1362 = vpack.c.b16 %v1050, %v1042
    %v1363 = vpack.c.b16 %v1051, %v1043
    %v1364 = vpack.c.b16 %v1052, %v1044
    %v1365 = vpack.c.b16 %v1053, %v1045
    %v1366 = vpack.c.b16 %v1062, %v1054
    %v1367 = vpack.c.b16 %v1063, %v1055
    %v1368 = vpack.c.b16 %v1064, %v1056
    %v1369 = vpack.c.b16 %v1065, %v1057
    %v1370 = vpack.c.b16 %v1066, %v1058
    %v1371 = vpack.c.b16 %v1067, %v1059
    %v1372 = vpack.c.b16 %v1068, %v1060
    %v1373 = vpack.c.b16 %v1069, %v1061
    %v1374 = vpack.c.b16 %v1078, %v1070
    %v1375 = vpack.c.b16 %v1079, %v1071
    %v1376 = vpack.c.b16 %v1080, %v1072
    %v1377 = vpack.c.b16 %v1081, %v1073
    %v1378 = vpack.c.b16 %v1082, %v1074
    %v1379 = vpack.c.b16 %v1083, %v1075
    %v1380 = vpack.c.b16 %v1084, %v1076
    %v1381 = vpack.c.b16 %v1085, %v1077
    %v1382 = vpack.c.b16 %v1094, %v1086
    %v1383 = vpack.c.b16 %v1095, %v1087
    %v1384 = vpack.c.b16 %v1096, %v1088
    %v1385 = vpack.c.b16 %v1097, %v1089
    %v1386 = vpack.c.b16 %v1098, %v1090
    %v1387 = vpack.c.b16 %v1099, %v1091
    %v1388 = vpack.c.b16 %v1100, %v1092
    %v1389 = vpack.c.b16 %v1101, %v1093
    %v1390 = vpack.c.b16 %v1110, %v1102
    %v1391 = vpack.c.b16 %v1111, %v1103
    %v1392 = vpack.c.b16 %v1112, %v1104
    %v1393 = vpack.c.b16 %v1113, %v1105
    %v1394 = vpack.c.b16 %v1114, %v1106
    %v1395 = vpack.c.b16 %v1115, %v1107
    %v1396 = vpack.c.b16 %v1116, %v1108
    %v1397 = vpack.c.b16 %v1117, %v1109
    %v1398 = vpack.c.b16 %v1126, %v1118
    %v1399 = vpack.c.b16 %v1127, %v1119
    %v1400 = vpack.c.b16 %v1128, %v1120
    %v1401 = vpack.c.b16 %v1129, %v1121
    %v1402 = vpack.c.b16 %v1130, %v1122
    %v1403 = vpack.c.b16 %v1131, %v1123
    %v1404 = vpack.c.b16 %v1132, %v1124
    %v1405 = vpack.c.b16 %v1133, %v1125
    %v1406 = vpack.c.b16 %v1142, %v1134
    %v1407 = vpack.c.b16 %v1143, %v1135
    %v1408 = vpack.c.b16 %v1144, %v1136
    %v1409 = vpack.c.b16 %v1145, %v1137
    %v1410 = vpack.c.b16 %v1146, %v1138
    %v1411 = vpack.c.b16 %v1147, %v1139
    %v1412 = vpack.c.b16 %v1148, %v1140
    %v1413 = vpack.c.b16 %v1149, %v1141
    %v1414 = vpack.c.b16 %v1158, %v1150
    %v1415 = vpack.c.b16 %v1159, %v1151
    %v1416 = vpack.c.b16 %v1160, %v1152
    %v1417 = vpack.c.b16 %v1161, %v1153
    %v1418 = vpack.c.b16 %v1162, %v1154
    %v1419 = vpack.c.b16 %v1163, %v1155
    %v1420 = vpack.c.b16 %v1164, %v1156
    %v1421 = vpack.c.b16 %v1165, %v1157
    %1678 = vmatprep.subr.bf16.mxu0 %v1167
    %1679 = vmatpush1.bf16.msra.mxu0 %v1166
    %1680 = vmatprep.subr.bf16.mxu0 %v1175
    %1681 = vmatpush1.bf16.msra.mxu0 %v1174
    %1682 = vmatprep.subr.bf16.mxu0 %v1183
    %1683 = vmatpush1.bf16.msra.mxu0 %v1182
    %1684 = vmatprep.subr.bf16.mxu0 %v1191
    %1685 = vmatpush1.bf16.msra.mxu0 %v1190
    %1686 = vmatprep.subr.bf16.mxu0 %v1199
    %1687 = vmatpush1.bf16.msra.mxu0 %v1198
    %1688 = vmatprep.subr.bf16.mxu0 %v1207
    %1689 = vmatpush1.bf16.msra.mxu0 %v1206
    %1690 = vmatprep.subr.bf16.mxu0 %v1215
    %1691 = vmatpush1.bf16.msra.mxu0 %v1214
    %1692 = vmatprep.subr.bf16.mxu0 %v1223
    %1693 = vmatpush1.bf16.msra.mxu0 %v1222
    %1694 = vmatprep.subr.bf16.mxu0 %v1231
    %1695 = vmatpush1.bf16.msra.mxu0 %v1230
    %1696 = vmatprep.subr.bf16.mxu0 %v1239
    %1697 = vmatpush1.bf16.msra.mxu0 %v1238
    %1698 = vmatprep.subr.bf16.mxu0 %v1247
    %1699 = vmatpush1.bf16.msra.mxu0 %v1246
    %1700 = vmatprep.subr.bf16.mxu0 %v1255
    %1701 = vmatpush1.bf16.msra.mxu0 %v1254
    %1702 = vmatprep.subr.bf16.mxu0 %v1263
    %1703 = vmatpush1.bf16.msra.mxu0 %v1262
    %1704 = vmatprep.subr.bf16.mxu0 %v1271
    %1705 = vmatpush1.bf16.msra.mxu0 %v1270
    %1706 = vmatprep.subr.bf16.mxu0 %v1279
    %1707 = vmatpush1.bf16.msra.mxu0 %v1278
    %1708 = vmatprep.subr.bf16.mxu0 %v1287
    %1709 = vmatpush1.bf16.msra.mxu0 %v1286
    %1710 = vmatprep.mubr.bf16.mxu0 %v391
    %1711 = vmatmul.mubr.bf16.gmra.mrb[0].mxu0 %v390
    %v1712 = vpop.f32.mrb[0].mxu0
    %v1713 = vadd.f32 %v347, %v1712
    %v1714 = vpop.f32.mrb[0].mxu0
    %v1715 = vadd.f32 %v351, %v1714
    %v1716 = vpop.f32.mrb[0].mxu0
    %v1717 = vpop.f32.mrb[0].mxu0
    %1718 = vdwg.mxu0
    %1719 = vmatprep.subr.bf16.mxu0 %v1295
    %1720 = vmatpush1.bf16.msra.mxu0 %v1294
    %1721 = vmatprep.subr.bf16.mxu0 %v1303
    %1722 = vmatpush1.bf16.msra.mxu0 %v1302
    %1723 = vmatprep.subr.bf16.mxu0 %v1311
    %1724 = vmatpush1.bf16.msra.mxu0 %v1310
    %1725 = vmatprep.subr.bf16.mxu0 %v1319
    %1726 = vmatpush1.bf16.msra.mxu0 %v1318
    %1727 = vmatprep.subr.bf16.mxu0 %v1327
    %1728 = vmatpush1.bf16.msra.mxu0 %v1326
    %1729 = vmatprep.subr.bf16.mxu0 %v1335
    %1730 = vmatpush1.bf16.msra.mxu0 %v1334
    %1731 = vmatprep.subr.bf16.mxu0 %v1343
    %1732 = vmatpush1.bf16.msra.mxu0 %v1342
    %1733 = vmatprep.subr.bf16.mxu0 %v1351
    %1734 = vmatpush1.bf16.msra.mxu0 %v1350
    %1735 = vmatprep.subr.bf16.mxu0 %v1359
    %1736 = vmatpush1.bf16.msra.mxu0 %v1358
    %1737 = vmatprep.subr.bf16.mxu0 %v1367
    %1738 = vmatpush1.bf16.msra.mxu0 %v1366
    %1739 = vmatprep.subr.bf16.mxu0 %v1375
    %1740 = vmatpush1.bf16.msra.mxu0 %v1374
    %1741 = vmatprep.subr.bf16.mxu0 %v1383
    %1742 = vmatpush1.bf16.msra.mxu0 %v1382
    %1743 = vmatprep.subr.bf16.mxu0 %v1391
    %1744 = vmatpush1.bf16.msra.mxu0 %v1390
    %1745 = vmatprep.subr.bf16.mxu0 %v1399
    %1746 = vmatpush1.bf16.msra.mxu0 %v1398
    %1747 = vmatprep.subr.bf16.mxu0 %v1407
    %1748 = vmatpush1.bf16.msra.mxu0 %v1406
    %1749 = vmatprep.subr.bf16.mxu0 %v1415
    %1750 = vmatpush1.bf16.msra.mxu0 %v1414
    %1751 = vmatprep.mubr.bf16.mxu0 %v393
    %1752 = vmatmul.mubr.bf16.gmra.mrb[0].mxu0 %v392
    %v1753 = vpop.f32.mrb[0].mxu0
    %v1754 = vadd.f32 %v1713, %v1753
    %v1755 = vpop.f32.mrb[0].mxu0
    %v1756 = vadd.f32 %v1715, %v1755
    %v1757 = vpop.f32.mrb[0].mxu0
    %v1758 = vpop.f32.mrb[0].mxu0
    %1759 = vdwg.mxu0
    %1760 = vmatprep.subr.bf16.mxu0 %v1169
    %1761 = vmatpush1.bf16.msra.mxu0 %v1168
    %1762 = vmatprep.subr.bf16.mxu0 %v1177
    %1763 = vmatpush1.bf16.msra.mxu0 %v1176
    %1764 = vmatprep.subr.bf16.mxu0 %v1185
    %1765 = vmatpush1.bf16.msra.mxu0 %v1184
    %1766 = vmatprep.subr.bf16.mxu0 %v1193
    %1767 = vmatpush1.bf16.msra.mxu0 %v1192
    %1768 = vmatprep.subr.bf16.mxu0 %v1201
    %1769 = vmatpush1.bf16.msra.mxu0 %v1200
    %1770 = vmatprep.subr.bf16.mxu0 %v1209
    %1771 = vmatpush1.bf16.msra.mxu0 %v1208
    %1772 = vmatprep.subr.bf16.mxu0 %v1217
    %1773 = vmatpush1.bf16.msra.mxu0 %v1216
    %1774 = vmatprep.subr.bf16.mxu0 %v1225
    %1775 = vmatpush1.bf16.msra.mxu0 %v1224
    %1776 = vmatprep.subr.bf16.mxu0 %v1233
    %1777 = vmatpush1.bf16.msra.mxu0 %v1232
    %1778 = vmatprep.subr.bf16.mxu0 %v1241
    %1779 = vmatpush1.bf16.msra.mxu0 %v1240
    %1780 = vmatprep.subr.bf16.mxu0 %v1249
    %1781 = vmatpush1.bf16.msra.mxu0 %v1248
    %1782 = vmatprep.subr.bf16.mxu0 %v1257
    %1783 = vmatpush1.bf16.msra.mxu0 %v1256
    %1784 = vmatprep.subr.bf16.mxu0 %v1265
    %1785 = vmatpush1.bf16.msra.mxu0 %v1264
    %1786 = vmatprep.subr.bf16.mxu0 %v1273
    %1787 = vmatpush1.bf16.msra.mxu0 %v1272
    %1788 = vmatprep.subr.bf16.mxu0 %v1281
    %1789 = vmatpush1.bf16.msra.mxu0 %v1280
    %1790 = vmatprep.subr.bf16.mxu0 %v1289
    %1791 = vmatpush1.bf16.msra.mxu0 %v1288
    %1792 = vmatprep.mubr.bf16.mxu0 %v391
    %1793 = vmatmul.mubr.bf16.gmra.mrb[0].mxu0 %v390
    %v1794 = vpop.f32.mrb[0].mxu0
    %v1795 = vadd.f32 %v355, %v1794
    %v1796 = vpop.f32.mrb[0].mxu0
    %v1797 = vadd.f32 %v359, %v1796
    %v1798 = vpop.f32.mrb[0].mxu0
    %v1799 = vpop.f32.mrb[0].mxu0
    %1800 = vdwg.mxu0
    %1801 = vmatprep.subr.bf16.mxu0 %v1297
    %1802 = vmatpush1.bf16.msra.mxu0 %v1296
    %1803 = vmatprep.subr.bf16.mxu0 %v1305
    %1804 = vmatpush1.bf16.msra.mxu0 %v1304
    %1805 = vmatprep.subr.bf16.mxu0 %v1313
    %1806 = vmatpush1.bf16.msra.mxu0 %v1312
    %1807 = vmatprep.subr.bf16.mxu0 %v1321
    %1808 = vmatpush1.bf16.msra.mxu0 %v1320
    %1809 = vmatprep.subr.bf16.mxu0 %v1329
    %1810 = vmatpush1.bf16.msra.mxu0 %v1328
    %1811 = vmatprep.subr.bf16.mxu0 %v1337
    %1812 = vmatpush1.bf16.msra.mxu0 %v1336
    %1813 = vmatprep.subr.bf16.mxu0 %v1345
    %1814 = vmatpush1.bf16.msra.mxu0 %v1344
    %1815 = vmatprep.subr.bf16.mxu0 %v1353
    %1816 = vmatpush1.bf16.msra.mxu0 %v1352
    %1817 = vmatprep.subr.bf16.mxu0 %v1361
    %1818 = vmatpush1.bf16.msra.mxu0 %v1360
    %1819 = vmatprep.subr.bf16.mxu0 %v1369
    %1820 = vmatpush1.bf16.msra.mxu0 %v1368
    %1821 = vmatprep.subr.bf16.mxu0 %v1377
    %1822 = vmatpush1.bf16.msra.mxu0 %v1376
    %1823 = vmatprep.subr.bf16.mxu0 %v1385
    %1824 = vmatpush1.bf16.msra.mxu0 %v1384
    %1825 = vmatprep.subr.bf16.mxu0 %v1393
    %1826 = vmatpush1.bf16.msra.mxu0 %v1392
    %1827 = vmatprep.subr.bf16.mxu0 %v1401
    %1828 = vmatpush1.bf16.msra.mxu0 %v1400
    %1829 = vmatprep.subr.bf16.mxu0 %v1409
    %1830 = vmatpush1.bf16.msra.mxu0 %v1408
    %1831 = vmatprep.subr.bf16.mxu0 %v1417
    %1832 = vmatpush1.bf16.msra.mxu0 %v1416
    %1833 = vmatprep.mubr.bf16.mxu0 %v393
    %1834 = vmatmul.mubr.bf16.gmra.mrb[0].mxu0 %v392
    %v1835 = vpop.f32.mrb[0].mxu0
    %v1836 = vadd.f32 %v1795, %v1835
    %v1837 = vpop.f32.mrb[0].mxu0
    %v1838 = vadd.f32 %v1797, %v1837
    %v1839 = vpop.f32.mrb[0].mxu0
    %v1840 = vpop.f32.mrb[0].mxu0
    %1841 = vdwg.mxu0
    %1842 = vmatprep.subr.bf16.mxu0 %v1171
    %1843 = vmatpush1.bf16.msra.mxu0 %v1170
    %1844 = vmatprep.subr.bf16.mxu0 %v1179
    %1845 = vmatpush1.bf16.msra.mxu0 %v1178
    %1846 = vmatprep.subr.bf16.mxu0 %v1187
    %1847 = vmatpush1.bf16.msra.mxu0 %v1186
    %1848 = vmatprep.subr.bf16.mxu0 %v1195
    %1849 = vmatpush1.bf16.msra.mxu0 %v1194
    %1850 = vmatprep.subr.bf16.mxu0 %v1203
    %1851 = vmatpush1.bf16.msra.mxu0 %v1202
    %1852 = vmatprep.subr.bf16.mxu0 %v1211
    %1853 = vmatpush1.bf16.msra.mxu0 %v1210
    %1854 = vmatprep.subr.bf16.mxu0 %v1219
    %1855 = vmatpush1.bf16.msra.mxu0 %v1218
    %1856 = vmatprep.subr.bf16.mxu0 %v1227
    %1857 = vmatpush1.bf16.msra.mxu0 %v1226
    %1858 = vmatprep.subr.bf16.mxu0 %v1235
    %1859 = vmatpush1.bf16.msra.mxu0 %v1234
    %1860 = vmatprep.subr.bf16.mxu0 %v1243
    %1861 = vmatpush1.bf16.msra.mxu0 %v1242
    %1862 = vmatprep.subr.bf16.mxu0 %v1251
    %1863 = vmatpush1.bf16.msra.mxu0 %v1250
    %1864 = vmatprep.subr.bf16.mxu0 %v1259
    %1865 = vmatpush1.bf16.msra.mxu0 %v1258
    %1866 = vmatprep.subr.bf16.mxu0 %v1267
    %1867 = vmatpush1.bf16.msra.mxu0 %v1266
    %1868 = vmatprep.subr.bf16.mxu0 %v1275
    %1869 = vmatpush1.bf16.msra.mxu0 %v1274
    %1870 = vmatprep.subr.bf16.mxu0 %v1283
    %1871 = vmatpush1.bf16.msra.mxu0 %v1282
    %1872 = vmatprep.subr.bf16.mxu0 %v1291
    %1873 = vmatpush1.bf16.msra.mxu0 %v1290
    %1874 = vmatprep.mubr.bf16.mxu0 %v391
    %1875 = vmatmul.mubr.bf16.gmra.mrb[0].mxu0 %v390
    %v1876 = vpop.f32.mrb[0].mxu0
    %v1877 = vadd.f32 %v363, %v1876
    %v1878 = vpop.f32.mrb[0].mxu0
    %v1879 = vadd.f32 %v367, %v1878
    %v1880 = vpop.f32.mrb[0].mxu0
    %v1881 = vpop.f32.mrb[0].mxu0
    %1882 = vdwg.mxu0
    %1883 = vmatprep.subr.bf16.mxu0 %v1299
    %1884 = vmatpush1.bf16.msra.mxu0 %v1298
    %1885 = vmatprep.subr.bf16.mxu0 %v1307
    %1886 = vmatpush1.bf16.msra.mxu0 %v1306
    %1887 = vmatprep.subr.bf16.mxu0 %v1315
    %1888 = vmatpush1.bf16.msra.mxu0 %v1314
    %1889 = vmatprep.subr.bf16.mxu0 %v1323
    %1890 = vmatpush1.bf16.msra.mxu0 %v1322
    %1891 = vmatprep.subr.bf16.mxu0 %v1331
    %1892 = vmatpush1.bf16.msra.mxu0 %v1330
    %1893 = vmatprep.subr.bf16.mxu0 %v1339
    %1894 = vmatpush1.bf16.msra.mxu0 %v1338
    %1895 = vmatprep.subr.bf16.mxu0 %v1347
    %1896 = vmatpush1.bf16.msra.mxu0 %v1346
    %1897 = vmatprep.subr.bf16.mxu0 %v1355
    %1898 = vmatpush1.bf16.msra.mxu0 %v1354
    %1899 = vmatprep.subr.bf16.mxu0 %v1363
    %1900 = vmatpush1.bf16.msra.mxu0 %v1362
    %1901 = vmatprep.subr.bf16.mxu0 %v1371
    %1902 = vmatpush1.bf16.msra.mxu0 %v1370
    %1903 = vmatprep.subr.bf16.mxu0 %v1379
    %1904 = vmatpush1.bf16.msra.mxu0 %v1378
    %1905 = vmatprep.subr.bf16.mxu0 %v1387
    %1906 = vmatpush1.bf16.msra.mxu0 %v1386
    %1907 = vmatprep.subr.bf16.mxu0 %v1395
    %1908 = vmatpush1.bf16.msra.mxu0 %v1394
    %1909 = vmatprep.subr.bf16.mxu0 %v1403
    %1910 = vmatpush1.bf16.msra.mxu0 %v1402
    %1911 = vmatprep.subr.bf16.mxu0 %v1411
    %1912 = vmatpush1.bf16.msra.mxu0 %v1410
    %1913 = vmatprep.subr.bf16.mxu0 %v1419
    %1914 = vmatpush1.bf16.msra.mxu0 %v1418
    %1915 = vmatprep.mubr.bf16.mxu0 %v393
    %1916 = vmatmul.mubr.bf16.gmra.mrb[0].mxu0 %v392
    %v1917 = vpop.f32.mrb[0].mxu0
    %v1918 = vadd.f32 %v1877, %v1917
    %v1919 = vpop.f32.mrb[0].mxu0
    %v1920 = vadd.f32 %v1879, %v1919
    %v1921 = vpop.f32.mrb[0].mxu0
    %v1922 = vpop.f32.mrb[0].mxu0
    %1923 = vdwg.mxu0
    %1924 = vmatprep.subr.bf16.mxu0 %v1173
    %1925 = vmatpush1.bf16.msra.mxu0 %v1172
    %1926 = vmatprep.subr.bf16.mxu0 %v1181
    %1927 = vmatpush1.bf16.msra.mxu0 %v1180
    %1928 = vmatprep.subr.bf16.mxu0 %v1189
    %1929 = vmatpush1.bf16.msra.mxu0 %v1188
    %1930 = vmatprep.subr.bf16.mxu0 %v1197
    %1931 = vmatpush1.bf16.msra.mxu0 %v1196
    %1932 = vmatprep.subr.bf16.mxu0 %v1205
    %1933 = vmatpush1.bf16.msra.mxu0 %v1204
    %1934 = vmatprep.subr.bf16.mxu0 %v1213
    %1935 = vmatpush1.bf16.msra.mxu0 %v1212
    %1936 = vmatprep.subr.bf16.mxu0 %v1221
    %1937 = vmatpush1.bf16.msra.mxu0 %v1220
    %1938 = vmatprep.subr.bf16.mxu0 %v1229
    %1939 = vmatpush1.bf16.msra.mxu0 %v1228
    %1940 = vmatprep.subr.bf16.mxu0 %v1237
    %1941 = vmatpush1.bf16.msra.mxu0 %v1236
    %1942 = vmatprep.subr.bf16.mxu0 %v1245
    %1943 = vmatpush1.bf16.msra.mxu0 %v1244
    %1944 = vmatprep.subr.bf16.mxu0 %v1253
    %1945 = vmatpush1.bf16.msra.mxu0 %v1252
    %1946 = vmatprep.subr.bf16.mxu0 %v1261
    %1947 = vmatpush1.bf16.msra.mxu0 %v1260
    %1948 = vmatprep.subr.bf16.mxu0 %v1269
    %1949 = vmatpush1.bf16.msra.mxu0 %v1268
    %1950 = vmatprep.subr.bf16.mxu0 %v1277
    %1951 = vmatpush1.bf16.msra.mxu0 %v1276
    %1952 = vmatprep.subr.bf16.mxu0 %v1285
    %1953 = vmatpush1.bf16.msra.mxu0 %v1284
    %1954 = vmatprep.subr.bf16.mxu0 %v1293
    %1955 = vmatpush1.bf16.msra.mxu0 %v1292
    %1956 = vmatprep.mubr.bf16.mxu0 %v391
    %1957 = vmatmul.mubr.bf16.gmra.mrb[0].mxu0 %v390
    %v1958 = vpop.f32.mrb[0].mxu0
    %v1959 = vadd.f32 %v371, %v1958
    %v1960 = vpop.f32.mrb[0].mxu0
    %v1961 = vadd.f32 %v375, %v1960
    %v1962 = vpop.f32.mrb[0].mxu0
    %v1963 = vpop.f32.mrb[0].mxu0
    %1964 = vdwg.mxu0
    %1965 = vmatprep.subr.bf16.mxu0 %v1301
    %1966 = vmatpush1.bf16.msra.mxu0 %v1300
    %1967 = vmatprep.subr.bf16.mxu0 %v1309
    %1968 = vmatpush1.bf16.msra.mxu0 %v1308
    %1969 = vmatprep.subr.bf16.mxu0 %v1317
    %1970 = vmatpush1.bf16.msra.mxu0 %v1316
    %1971 = vmatprep.subr.bf16.mxu0 %v1325
    %1972 = vmatpush1.bf16.msra.mxu0 %v1324
    %1973 = vmatprep.subr.bf16.mxu0 %v1333
    %1974 = vmatpush1.bf16.msra.mxu0 %v1332
    %1975 = vmatprep.subr.bf16.mxu0 %v1341
    %1976 = vmatpush1.bf16.msra.mxu0 %v1340
    %1977 = vmatprep.subr.bf16.mxu0 %v1349
    %1978 = vmatpush1.bf16.msra.mxu0 %v1348
    %1979 = vmatprep.subr.bf16.mxu0 %v1357
    %1980 = vmatpush1.bf16.msra.mxu0 %v1356
    %1981 = vmatprep.subr.bf16.mxu0 %v1365
    %1982 = vmatpush1.bf16.msra.mxu0 %v1364
    %1983 = vmatprep.subr.bf16.mxu0 %v1373
    %1984 = vmatpush1.bf16.msra.mxu0 %v1372
    %1985 = vmatprep.subr.bf16.mxu0 %v1381
    %1986 = vmatpush1.bf16.msra.mxu0 %v1380
    %1987 = vmatprep.subr.bf16.mxu0 %v1389
    %1988 = vmatpush1.bf16.msra.mxu0 %v1388
    %1989 = vmatprep.subr.bf16.mxu0 %v1397
    %1990 = vmatpush1.bf16.msra.mxu0 %v1396
    %1991 = vmatprep.subr.bf16.mxu0 %v1405
    %1992 = vmatpush1.bf16.msra.mxu0 %v1404
    %1993 = vmatprep.subr.bf16.mxu0 %v1413
    %1994 = vmatpush1.bf16.msra.mxu0 %v1412
    %1995 = vmatprep.subr.bf16.mxu0 %v1421
    %1996 = vmatpush1.bf16.msra.mxu0 %v1420
    %1997 = vmatprep.mubr.bf16.mxu0 %v393
    %1998 = vmatmul.mubr.bf16.gmra.mrb[0].mxu0 %v392
    %v1999 = vpop.f32.mrb[0].mxu0
    %v2000 = vadd.f32 %v1959, %v1999
    %v2001 = vpop.f32.mrb[0].mxu0
    %v2002 = vadd.f32 %v1961, %v2001
    %v2003 = vpop.f32.mrb[0].mxu0
    %v2004 = vpop.f32.mrb[0].mxu0
    %2005 = vdwg.mxu0
    %vm2006 = vcmp.gt.f32.partialorder %v1754, 0.0
    %vm2007 = vcmp.gt.f32.partialorder %v1756, 0.0
    %vm2008 = vcmp.gt.f32.partialorder %v1836, 0.0
    %vm2009 = vcmp.gt.f32.partialorder %v1838, 0.0
    %vm2010 = vcmp.gt.f32.partialorder %v1918, 0.0
    %vm2011 = vcmp.gt.f32.partialorder %v1920, 0.0
    %vm2012 = vcmp.gt.f32.partialorder %v2000, 0.0
    %vm2013 = vcmp.gt.f32.partialorder %v2002, 0.0
    %v2014 = vmul.f32 %v1754, 0.01
    %v2015 = vmul.f32 %v1756, 0.01
    %v2016 = vmul.f32 %v1836, 0.01
    %v2017 = vmul.f32 %v1838, 0.01
    %v2018 = vmul.f32 %v1918, 0.01
    %v2019 = vmul.f32 %v1920, 0.01
    %v2020 = vmul.f32 %v2000, 0.01
    %v2021 = vmul.f32 %v2002, 0.01
    %v2022 = vsel %vm2006, %v1754, %v2014
    %v2023 = vsel %vm2007, %v1756, %v2015
    %v2024 = vsel %vm2008, %v1836, %v2016
    %v2025 = vsel %vm2009, %v1838, %v2017
    %v2026 = vsel %vm2010, %v1918, %v2018
    %v2027 = vsel %vm2011, %v1920, %v2019
    %v2028 = vsel %vm2012, %v2000, %v2020
    %v2029 = vsel %vm2013, %v2002, %v2021
    %v2030 = vpack.c.bf16 %v2022, %v2022
    %v2031 = vpack.c.bf16 %v2023, %v2023
    %v2032 = vpack.c.bf16 %v2024, %v2024
    %v2033 = vpack.c.bf16 %v2025, %v2025
    %v2034 = vpack.c.bf16 %v2026, %v2026
    %v2035 = vpack.c.bf16 %v2027, %v2027
    %v2036 = vpack.c.bf16 %v2028, %v2028
    %v2037 = vpack.c.bf16 %v2029, %v2029
    %v2038 = vld [vmem:[#allocation8] sm:$0xff]
    %v2039 = vld [vmem:[#allocation8 + $0x8] sm:$0xff]
    %v2040 = vld [vmem:[#allocation8 + $0x10] sm:$0xff]
    %v2041 = vld [vmem:[#allocation8 + $0x18] sm:$0xf]
    %v2042 = vld [vmem:[#allocation8 + $0x1c] sm:$0xff]
    %v2043 = vld [vmem:[#allocation8 + $0x24] sm:$0xff]
    %v2044 = vld [vmem:[#allocation8 + $0x2c] sm:$0xff]
    %v2045 = vld [vmem:[#allocation8 + $0x34] sm:$0xf]
    %v2046 = vld [vmem:[#allocation8 + $0x38] sm:$0xff]
    %v2047 = vld [vmem:[#allocation8 + $0x40] sm:$0xff]
    %v2048 = vld [vmem:[#allocation8 + $0x48] sm:$0xff]
    %v2049 = vld [vmem:[#allocation8 + $0x50] sm:$0xf]
    %v2050 = vld [vmem:[#allocation8 + $0x54] sm:$0xff]
    %v2051 = vld [vmem:[#allocation8 + $0x5c] sm:$0xff]
    %v2052 = vld [vmem:[#allocation8 + $0x64] sm:$0xff]
    %v2053 = vld [vmem:[#allocation8 + $0x6c] sm:$0xf]
    %v2054 = vld [vmem:[#allocation8 + $0x70] sm:$0xff]
    %v2055 = vld [vmem:[#allocation8 + $0x78] sm:$0xff]
    %v2056 = vld [vmem:[#allocation8 + $0x80] sm:$0xff]
    %v2057 = vld [vmem:[#allocation8 + $0x88] sm:$0xf]
    %v2058 = vld [vmem:[#allocation8 + $0x8c] sm:$0xff]
    %v2059 = vld [vmem:[#allocation8 + $0x94] sm:$0xff]
    %v2060 = vld [vmem:[#allocation8 + $0x9c] sm:$0xff]
    %v2061 = vld [vmem:[#allocation8 + $0xa4] sm:$0xf]
    %v2062 = vld [vmem:[#allocation8 + $0xa8] sm:$0xff]
    %v2063 = vld [vmem:[#allocation8 + $0xb0] sm:$0xff]
    %v2064 = vld [vmem:[#allocation8 + $0xb8] sm:$0xff]
    %v2065 = vld [vmem:[#allocation8 + $0xc0] sm:$0xf]
    %v2066 = vld [vmem:[#allocation8 + $0xc4] sm:$0xff]
    %v2067 = vld [vmem:[#allocation8 + $0xcc] sm:$0xff]
    %v2068 = vld [vmem:[#allocation8 + $0xd4] sm:$0xff]
    %v2069 = vld [vmem:[#allocation8 + $0xdc] sm:$0xf]
    %v2070 = vld [vmem:[#allocation8 + $0xe0] sm:$0xff]
    %v2071 = vld [vmem:[#allocation8 + $0xe8] sm:$0xff]
    %v2072 = vld [vmem:[#allocation8 + $0xf0] sm:$0xff]
    %v2073 = vld [vmem:[#allocation8 + $0xf8] sm:$0xf]
    %v2074 = vld [vmem:[#allocation8 + $0xfc] sm:$0xff]
    %v2075 = vld [vmem:[#allocation8 + $0x104] sm:$0xff]
    %v2076 = vld [vmem:[#allocation8 + $0x10c] sm:$0xff]
    %v2077 = vld [vmem:[#allocation8 + $0x114] sm:$0xf]
    %v2078 = vld [vmem:[#allocation8 + $0x118] sm:$0xff]
    %v2079 = vld [vmem:[#allocation8 + $0x120] sm:$0xff]
    %v2080 = vld [vmem:[#allocation8 + $0x128] sm:$0xff]
    %v2081 = vld [vmem:[#allocation8 + $0x130] sm:$0xf]
    %v2082 = vld [vmem:[#allocation8 + $0x134] sm:$0xff]
    %v2083 = vld [vmem:[#allocation8 + $0x13c] sm:$0xff]
    %v2084 = vld [vmem:[#allocation8 + $0x144] sm:$0xff]
    %v2085 = vld [vmem:[#allocation8 + $0x14c] sm:$0xf]
    %v2086 = vld [vmem:[#allocation8 + $0x150] sm:$0xff]
    %v2087 = vld [vmem:[#allocation8 + $0x158] sm:$0xff]
    %v2088 = vld [vmem:[#allocation8 + $0x160] sm:$0xff]
    %v2089 = vld [vmem:[#allocation8 + $0x168] sm:$0xf]
    %v2090 = vld [vmem:[#allocation8 + $0x16c] sm:$0xff]
    %v2091 = vld [vmem:[#allocation8 + $0x174] sm:$0xff]
    %v2092 = vld [vmem:[#allocation8 + $0x17c] sm:$0xff]
    %v2093 = vld [vmem:[#allocation8 + $0x184] sm:$0xf]
    %v2094 = vld [vmem:[#allocation8 + $0x188] sm:$0xff]
    %v2095 = vld [vmem:[#allocation8 + $0x190] sm:$0xff]
    %v2096 = vld [vmem:[#allocation8 + $0x198] sm:$0xff]
    %v2097 = vld [vmem:[#allocation8 + $0x1a0] sm:$0xf]
    %v2098 = vld [vmem:[#allocation8 + $0x1a4] sm:$0xff]
    %v2099 = vld [vmem:[#allocation8 + $0x1ac] sm:$0xff]
    %v2100 = vld [vmem:[#allocation8 + $0x1b4] sm:$0xff]
    %v2101 = vld [vmem:[#allocation8 + $0x1bc] sm:$0xf]
    %v2102 = vld [vmem:[#allocation8 + $0x1c0] sm:$0xff]
    %v2103 = vld [vmem:[#allocation8 + $0x1c8] sm:$0xff]
    %v2104 = vld [vmem:[#allocation8 + $0x1d0] sm:$0xff]
    %v2105 = vld [vmem:[#allocation8 + $0x1d8] sm:$0xf]
    %v2106 = vld [vmem:[#allocation8 + $0x1dc] sm:$0xff]
    %v2107 = vld [vmem:[#allocation8 + $0x1e4] sm:$0xff]
    %v2108 = vld [vmem:[#allocation8 + $0x1ec] sm:$0xff]
    %v2109 = vld [vmem:[#allocation8 + $0x1f4] sm:$0xf]
    %v2110 = vld [vmem:[#allocation8 + $0x1f8] sm:$0xff]
    %v2111 = vld [vmem:[#allocation8 + $0x200] sm:$0xff]
    %v2112 = vld [vmem:[#allocation8 + $0x208] sm:$0xff]
    %v2113 = vld [vmem:[#allocation8 + $0x210] sm:$0xf]
    %v2114 = vld [vmem:[#allocation8 + $0x214] sm:$0xff]
    %v2115 = vld [vmem:[#allocation8 + $0x21c] sm:$0xff]
    %v2116 = vld [vmem:[#allocation8 + $0x224] sm:$0xff]
    %v2117 = vld [vmem:[#allocation8 + $0x22c] sm:$0xf]
    %v2118 = vld [vmem:[#allocation8 + $0x230] sm:$0xff]
    %v2119 = vld [vmem:[#allocation8 + $0x238] sm:$0xff]
    %v2120 = vld [vmem:[#allocation8 + $0x240] sm:$0xff]
    %v2121 = vld [vmem:[#allocation8 + $0x248] sm:$0xf]
    %v2122 = vld [vmem:[#allocation8 + $0x24c] sm:$0xff]
    %v2123 = vld [vmem:[#allocation8 + $0x254] sm:$0xff]
    %v2124 = vld [vmem:[#allocation8 + $0x25c] sm:$0xff]
    %v2125 = vld [vmem:[#allocation8 + $0x264] sm:$0xf]
    %v2126 = vld [vmem:[#allocation8 + $0x268] sm:$0xff]
    %v2127 = vld [vmem:[#allocation8 + $0x270] sm:$0xff]
    %v2128 = vld [vmem:[#allocation8 + $0x278] sm:$0xff]
    %v2129 = vld [vmem:[#allocation8 + $0x280] sm:$0xf]
    %v2130 = vld [vmem:[#allocation8 + $0x284] sm:$0xff]
    %v2131 = vld [vmem:[#allocation8 + $0x28c] sm:$0xff]
    %v2132 = vld [vmem:[#allocation8 + $0x294] sm:$0xff]
    %v2133 = vld [vmem:[#allocation8 + $0x29c] sm:$0xf]
    %v2134 = vld [vmem:[#allocation8 + $0x2a0] sm:$0xff]
    %v2135 = vld [vmem:[#allocation8 + $0x2a8] sm:$0xff]
    %v2136 = vld [vmem:[#allocation8 + $0x2b0] sm:$0xff]
    %v2137 = vld [vmem:[#allocation8 + $0x2b8] sm:$0xf]
    %v2138 = vld [vmem:[#allocation8 + $0x2bc] sm:$0xff]
    %v2139 = vld [vmem:[#allocation8 + $0x2c4] sm:$0xff]
    %v2140 = vld [vmem:[#allocation8 + $0x2cc] sm:$0xff]
    %v2141 = vld [vmem:[#allocation8 + $0x2d4] sm:$0xf]
    %v2142 = vld [vmem:[#allocation8 + $0x2d8] sm:$0xff]
    %v2143 = vld [vmem:[#allocation8 + $0x2e0] sm:$0xff]
    %v2144 = vld [vmem:[#allocation8 + $0x2e8] sm:$0xff]
    %v2145 = vld [vmem:[#allocation8 + $0x2f0] sm:$0xf]
    %v2146 = vld [vmem:[#allocation8 + $0x2f4] sm:$0xff]
    %v2147 = vld [vmem:[#allocation8 + $0x2fc] sm:$0xff]
    %v2148 = vld [vmem:[#allocation8 + $0x304] sm:$0xff]
    %v2149 = vld [vmem:[#allocation8 + $0x30c] sm:$0xf]
    %v2150 = vld [vmem:[#allocation8 + $0x310] sm:$0xff]
    %v2151 = vld [vmem:[#allocation8 + $0x318] sm:$0xff]
    %v2152 = vld [vmem:[#allocation8 + $0x320] sm:$0xff]
    %v2153 = vld [vmem:[#allocation8 + $0x328] sm:$0xf]
    %v2154 = vld [vmem:[#allocation8 + $0x32c] sm:$0xff]
    %v2155 = vld [vmem:[#allocation8 + $0x334] sm:$0xff]
    %v2156 = vld [vmem:[#allocation8 + $0x33c] sm:$0xff]
    %v2157 = vld [vmem:[#allocation8 + $0x344] sm:$0xf]
    %v2158 = vld [vmem:[#allocation8 + $0x348] sm:$0xff]
    %v2159 = vld [vmem:[#allocation8 + $0x350] sm:$0xff]
    %v2160 = vld [vmem:[#allocation8 + $0x358] sm:$0xff]
    %v2161 = vld [vmem:[#allocation8 + $0x360] sm:$0xf]
    %v2162 = vld [vmem:[#allocation8 + $0x364] sm:$0xff]
    %v2163 = vld [vmem:[#allocation8 + $0x36c] sm:$0xff]
    %v2164 = vld [vmem:[#allocation8 + $0x374] sm:$0xff]
    %v2165 = vld [vmem:[#allocation8 + $0x37c] sm:$0xf]
    %v2166 = vld [vmem:[#allocation8 + $0x380] sm:$0xff]
    %v2167 = vld [vmem:[#allocation8 + $0x388] sm:$0xff]
    %v2168 = vld [vmem:[#allocation8 + $0x390] sm:$0xff]
    %v2169 = vld [vmem:[#allocation8 + $0x398] sm:$0xf]
    %v2170 = vld [vmem:[#allocation8 + $0x39c] sm:$0xff]
    %v2171 = vld [vmem:[#allocation8 + $0x3a4] sm:$0xff]
    %v2172 = vld [vmem:[#allocation8 + $0x3ac] sm:$0xff]
    %v2173 = vld [vmem:[#allocation8 + $0x3b4] sm:$0xf]
    %v2174 = vld [vmem:[#allocation8 + $0x3b8] sm:$0xff]
    %v2175 = vld [vmem:[#allocation8 + $0x3c0] sm:$0xff]
    %v2176 = vld [vmem:[#allocation8 + $0x3c8] sm:$0xff]
    %v2177 = vld [vmem:[#allocation8 + $0x3d0] sm:$0xf]
    %v2178 = vld [vmem:[#allocation8 + $0x3d4] sm:$0xff]
    %v2179 = vld [vmem:[#allocation8 + $0x3dc] sm:$0xff]
    %v2180 = vld [vmem:[#allocation8 + $0x3e4] sm:$0xff]
    %v2181 = vld [vmem:[#allocation8 + $0x3ec] sm:$0xf]
    %v2182 = vld [vmem:[#allocation8 + $0x3f0] sm:$0xff]
    %v2183 = vld [vmem:[#allocation8 + $0x3f8] sm:$0xff]
    %v2184 = vld [vmem:[#allocation8 + $0x400] sm:$0xff]
    %v2185 = vld [vmem:[#allocation8 + $0x408] sm:$0xf]
    %v2186 = vld [vmem:[#allocation8 + $0x40c] sm:$0xff]
    %v2187 = vld [vmem:[#allocation8 + $0x414] sm:$0xff]
    %v2188 = vld [vmem:[#allocation8 + $0x41c] sm:$0xff]
    %v2189 = vld [vmem:[#allocation8 + $0x424] sm:$0xf]
    %v2190 = vld [vmem:[#allocation8 + $0x428] sm:$0xff]
    %v2191 = vld [vmem:[#allocation8 + $0x430] sm:$0xff]
    %v2192 = vld [vmem:[#allocation8 + $0x438] sm:$0xff]
    %v2193 = vld [vmem:[#allocation8 + $0x440] sm:$0xf]
    %v2194 = vld [vmem:[#allocation8 + $0x444] sm:$0xff]
    %v2195 = vld [vmem:[#allocation8 + $0x44c] sm:$0xff]
    %v2196 = vld [vmem:[#allocation8 + $0x454] sm:$0xff]
    %v2197 = vld [vmem:[#allocation8 + $0x45c] sm:$0xf]
    %v2198 = vld [vmem:[#allocation8 + $0x460] sm:$0xff]
    %v2199 = vld [vmem:[#allocation8 + $0x468] sm:$0xff]
    %v2200 = vld [vmem:[#allocation8 + $0x470] sm:$0xff]
    %v2201 = vld [vmem:[#allocation8 + $0x478] sm:$0xf]
    %v2202 = vld [vmem:[#allocation8 + $0x47c] sm:$0xff]
    %v2203 = vld [vmem:[#allocation8 + $0x484] sm:$0xff]
    %v2204 = vld [vmem:[#allocation8 + $0x48c] sm:$0xff]
    %v2205 = vld [vmem:[#allocation8 + $0x494] sm:$0xf]
    %v2206 = vld [vmem:[#allocation8 + $0x498] sm:$0xff]
    %v2207 = vld [vmem:[#allocation8 + $0x4a0] sm:$0xff]
    %v2208 = vld [vmem:[#allocation8 + $0x4a8] sm:$0xff]
    %v2209 = vld [vmem:[#allocation8 + $0x4b0] sm:$0xf]
    %v2210 = vld [vmem:[#allocation8 + $0x4b4] sm:$0xff]
    %v2211 = vld [vmem:[#allocation8 + $0x4bc] sm:$0xff]
    %v2212 = vld [vmem:[#allocation8 + $0x4c4] sm:$0xff]
    %v2213 = vld [vmem:[#allocation8 + $0x4cc] sm:$0xf]
    %v2214 = vld [vmem:[#allocation8 + $0x4d0] sm:$0xff]
    %v2215 = vld [vmem:[#allocation8 + $0x4d8] sm:$0xff]
    %v2216 = vld [vmem:[#allocation8 + $0x4e0] sm:$0xff]
    %v2217 = vld [vmem:[#allocation8 + $0x4e8] sm:$0xf]
    %v2218 = vld [vmem:[#allocation8 + $0x4ec] sm:$0xff]
    %v2219 = vld [vmem:[#allocation8 + $0x4f4] sm:$0xff]
    %v2220 = vld [vmem:[#allocation8 + $0x4fc] sm:$0xff]
    %v2221 = vld [vmem:[#allocation8 + $0x504] sm:$0xf]
    %v2222 = vld [vmem:[#allocation8 + $0x508] sm:$0xff]
    %v2223 = vld [vmem:[#allocation8 + $0x510] sm:$0xff]
    %v2224 = vld [vmem:[#allocation8 + $0x518] sm:$0xff]
    %v2225 = vld [vmem:[#allocation8 + $0x520] sm:$0xf]
    %v2226 = vld [vmem:[#allocation8 + $0x524] sm:$0xff]
    %v2227 = vld [vmem:[#allocation8 + $0x52c] sm:$0xff]
    %v2228 = vld [vmem:[#allocation8 + $0x534] sm:$0xff]
    %v2229 = vld [vmem:[#allocation8 + $0x53c] sm:$0xf]
    %v2230 = vld [vmem:[#allocation8 + $0x540] sm:$0xff]
    %v2231 = vld [vmem:[#allocation8 + $0x548] sm:$0xff]
    %v2232 = vld [vmem:[#allocation8 + $0x550] sm:$0xff]
    %v2233 = vld [vmem:[#allocation8 + $0x558] sm:$0xf]
    %v2234 = vld [vmem:[#allocation8 + $0x55c] sm:$0xff]
    %v2235 = vld [vmem:[#allocation8 + $0x564] sm:$0xff]
    %v2236 = vld [vmem:[#allocation8 + $0x56c] sm:$0xff]
    %v2237 = vld [vmem:[#allocation8 + $0x574] sm:$0xf]
    %v2238 = vld [vmem:[#allocation8 + $0x578] sm:$0xff]
    %v2239 = vld [vmem:[#allocation8 + $0x580] sm:$0xff]
    %v2240 = vld [vmem:[#allocation8 + $0x588] sm:$0xff]
    %v2241 = vld [vmem:[#allocation8 + $0x590] sm:$0xf]
    %v2242 = vld [vmem:[#allocation8 + $0x594] sm:$0xff]
    %v2243 = vld [vmem:[#allocation8 + $0x59c] sm:$0xff]
    %v2244 = vld [vmem:[#allocation8 + $0x5a4] sm:$0xff]
    %v2245 = vld [vmem:[#allocation8 + $0x5ac] sm:$0xf]
    %v2246 = vld [vmem:[#allocation8 + $0x5b0] sm:$0xff]
    %v2247 = vld [vmem:[#allocation8 + $0x5b8] sm:$0xff]
    %v2248 = vld [vmem:[#allocation8 + $0x5c0] sm:$0xff]
    %v2249 = vld [vmem:[#allocation8 + $0x5c8] sm:$0xf]
    %v2250 = vld [vmem:[#allocation8 + $0x5cc] sm:$0xff]
    %v2251 = vld [vmem:[#allocation8 + $0x5d4] sm:$0xff]
    %v2252 = vld [vmem:[#allocation8 + $0x5dc] sm:$0xff]
    %v2253 = vld [vmem:[#allocation8 + $0x5e4] sm:$0xf]
    %v2254 = vld [vmem:[#allocation8 + $0x5e8] sm:$0xff]
    %v2255 = vld [vmem:[#allocation8 + $0x5f0] sm:$0xff]
    %v2256 = vld [vmem:[#allocation8 + $0x5f8] sm:$0xff]
    %v2257 = vld [vmem:[#allocation8 + $0x600] sm:$0xf]
    %v2258 = vld [vmem:[#allocation8 + $0x604] sm:$0xff]
    %v2259 = vld [vmem:[#allocation8 + $0x60c] sm:$0xff]
    %v2260 = vld [vmem:[#allocation8 + $0x614] sm:$0xff]
    %v2261 = vld [vmem:[#allocation8 + $0x61c] sm:$0xf]
    %v2262 = vld [vmem:[#allocation8 + $0x620] sm:$0xff]
    %v2263 = vld [vmem:[#allocation8 + $0x628] sm:$0xff]
    %v2264 = vld [vmem:[#allocation8 + $0x630] sm:$0xff]
    %v2265 = vld [vmem:[#allocation8 + $0x638] sm:$0xf]
    %v2266 = vld [vmem:[#allocation8 + $0x63c] sm:$0xff]
    %v2267 = vld [vmem:[#allocation8 + $0x644] sm:$0xff]
    %v2268 = vld [vmem:[#allocation8 + $0x64c] sm:$0xff]
    %v2269 = vld [vmem:[#allocation8 + $0x654] sm:$0xf]
    %v2270 = vld [vmem:[#allocation8 + $0x658] sm:$0xff]
    %v2271 = vld [vmem:[#allocation8 + $0x660] sm:$0xff]
    %v2272 = vld [vmem:[#allocation8 + $0x668] sm:$0xff]
    %v2273 = vld [vmem:[#allocation8 + $0x670] sm:$0xf]
    %v2274 = vld [vmem:[#allocation8 + $0x674] sm:$0xff]
    %v2275 = vld [vmem:[#allocation8 + $0x67c] sm:$0xff]
    %v2276 = vld [vmem:[#allocation8 + $0x684] sm:$0xff]
    %v2277 = vld [vmem:[#allocation8 + $0x68c] sm:$0xf]
    %v2278 = vld [vmem:[#allocation8 + $0x690] sm:$0xff]
    %v2279 = vld [vmem:[#allocation8 + $0x698] sm:$0xff]
    %v2280 = vld [vmem:[#allocation8 + $0x6a0] sm:$0xff]
    %v2281 = vld [vmem:[#allocation8 + $0x6a8] sm:$0xf]
    %v2282 = vld [vmem:[#allocation8 + $0x6ac] sm:$0xff]
    %v2283 = vld [vmem:[#allocation8 + $0x6b4] sm:$0xff]
    %v2284 = vld [vmem:[#allocation8 + $0x6bc] sm:$0xff]
    %v2285 = vld [vmem:[#allocation8 + $0x6c4] sm:$0xf]
    %v2286 = vld [vmem:[#allocation8 + $0x6c8] sm:$0xff]
    %v2287 = vld [vmem:[#allocation8 + $0x6d0] sm:$0xff]
    %v2288 = vld [vmem:[#allocation8 + $0x6d8] sm:$0xff]
    %v2289 = vld [vmem:[#allocation8 + $0x6e0] sm:$0xf]
    %v2290 = vld [vmem:[#allocation8 + $0x6e4] sm:$0xff]
    %v2291 = vld [vmem:[#allocation8 + $0x6ec] sm:$0xff]
    %v2292 = vld [vmem:[#allocation8 + $0x6f4] sm:$0xff]
    %v2293 = vld [vmem:[#allocation8 + $0x6fc] sm:$0xf]
    %v2294 = vld [vmem:[#allocation8 + $0x700] sm:$0xff]
    %v2295 = vld [vmem:[#allocation8 + $0x708] sm:$0xff]
    %v2296 = vld [vmem:[#allocation8 + $0x710] sm:$0xff]
    %v2297 = vld [vmem:[#allocation8 + $0x718] sm:$0xf]
    %v2298 = vld [vmem:[#allocation8 + $0x71c] sm:$0xff]
    %v2299 = vld [vmem:[#allocation8 + $0x724] sm:$0xff]
    %v2300 = vld [vmem:[#allocation8 + $0x72c] sm:$0xff]
    %v2301 = vld [vmem:[#allocation8 + $0x734] sm:$0xf]
    %v2302 = vld [vmem:[#allocation8 + $0x738] sm:$0xff]
    %v2303 = vld [vmem:[#allocation8 + $0x740] sm:$0xff]
    %v2304 = vld [vmem:[#allocation8 + $0x748] sm:$0xff]
    %v2305 = vld [vmem:[#allocation8 + $0x750] sm:$0xf]
    %v2306 = vld [vmem:[#allocation8 + $0x754] sm:$0xff]
    %v2307 = vld [vmem:[#allocation8 + $0x75c] sm:$0xff]
    %v2308 = vld [vmem:[#allocation8 + $0x764] sm:$0xff]
    %v2309 = vld [vmem:[#allocation8 + $0x76c] sm:$0xf]
    %v2310 = vld [vmem:[#allocation8 + $0x770] sm:$0xff]
    %v2311 = vld [vmem:[#allocation8 + $0x778] sm:$0xff]
    %v2312 = vld [vmem:[#allocation8 + $0x780] sm:$0xff]
    %v2313 = vld [vmem:[#allocation8 + $0x788] sm:$0xf]
    %v2314 = vld [vmem:[#allocation8 + $0x78c] sm:$0xff]
    %v2315 = vld [vmem:[#allocation8 + $0x794] sm:$0xff]
    %v2316 = vld [vmem:[#allocation8 + $0x79c] sm:$0xff]
    %v2317 = vld [vmem:[#allocation8 + $0x7a4] sm:$0xf]
    %v2318 = vld [vmem:[#allocation8 + $0x7a8] sm:$0xff]
    %v2319 = vld [vmem:[#allocation8 + $0x7b0] sm:$0xff]
    %v2320 = vld [vmem:[#allocation8 + $0x7b8] sm:$0xff]
    %v2321 = vld [vmem:[#allocation8 + $0x7c0] sm:$0xf]
    %v2322 = vld [vmem:[#allocation8 + $0x7c4] sm:$0xff]
    %v2323 = vld [vmem:[#allocation8 + $0x7cc] sm:$0xff]
    %v2324 = vld [vmem:[#allocation8 + $0x7d4] sm:$0xff]
    %v2325 = vld [vmem:[#allocation8 + $0x7dc] sm:$0xf]
    %v2326 = vld [vmem:[#allocation8 + $0x7e0] sm:$0xff]
    %v2327 = vld [vmem:[#allocation8 + $0x7e8] sm:$0xff]
    %v2328 = vld [vmem:[#allocation8 + $0x7f0] sm:$0xff]
    %v2329 = vld [vmem:[#allocation8 + $0x7f8] sm:$0xf]
    %v2330 = vld [vmem:[#allocation8 + $0x7fc] sm:$0xff]
    %v2331 = vld [vmem:[#allocation8 + $0x804] sm:$0xff]
    %v2332 = vld [vmem:[#allocation8 + $0x80c] sm:$0xff]
    %v2333 = vld [vmem:[#allocation8 + $0x814] sm:$0xf]
    %v2334 = vld [vmem:[#allocation8 + $0x818] sm:$0xff]
    %v2335 = vld [vmem:[#allocation8 + $0x820] sm:$0xff]
    %v2336 = vld [vmem:[#allocation8 + $0x828] sm:$0xff]
    %v2337 = vld [vmem:[#allocation8 + $0x830] sm:$0xf]
    %v2338 = vld [vmem:[#allocation8 + $0x834] sm:$0xff]
    %v2339 = vld [vmem:[#allocation8 + $0x83c] sm:$0xff]
    %v2340 = vld [vmem:[#allocation8 + $0x844] sm:$0xff]
    %v2341 = vld [vmem:[#allocation8 + $0x84c] sm:$0xf]
    %v2342 = vld [vmem:[#allocation8 + $0x850] sm:$0xff]
    %v2343 = vld [vmem:[#allocation8 + $0x858] sm:$0xff]
    %v2344 = vld [vmem:[#allocation8 + $0x860] sm:$0xff]
    %v2345 = vld [vmem:[#allocation8 + $0x868] sm:$0xf]
    %v2346 = vld [vmem:[#allocation8 + $0x86c] sm:$0xff]
    %v2347 = vld [vmem:[#allocation8 + $0x874] sm:$0xff]
    %v2348 = vld [vmem:[#allocation8 + $0x87c] sm:$0xff]
    %v2349 = vld [vmem:[#allocation8 + $0x884] sm:$0xf]
    %v2350 = vld [vmem:[#allocation8 + $0x888] sm:$0xff]
    %v2351 = vld [vmem:[#allocation8 + $0x890] sm:$0xff]
    %v2352 = vld [vmem:[#allocation8 + $0x898] sm:$0xff]
    %v2353 = vld [vmem:[#allocation8 + $0x8a0] sm:$0xf]
    %v2354 = vld [vmem:[#allocation8 + $0x8a4] sm:$0xff]
    %v2355 = vld [vmem:[#allocation8 + $0x8ac] sm:$0xff]
    %v2356 = vld [vmem:[#allocation8 + $0x8b4] sm:$0xff]
    %v2357 = vld [vmem:[#allocation8 + $0x8bc] sm:$0xf]
    %v2358 = vld [vmem:[#allocation8 + $0x8c0] sm:$0xff]
    %v2359 = vld [vmem:[#allocation8 + $0x8c8] sm:$0xff]
    %v2360 = vld [vmem:[#allocation8 + $0x8d0] sm:$0xff]
    %v2361 = vld [vmem:[#allocation8 + $0x8d8] sm:$0xf]
    %v2362 = vld [vmem:[#allocation8 + $0x8dc] sm:$0xff]
    %v2363 = vld [vmem:[#allocation8 + $0x8e4] sm:$0xff]
    %v2364 = vld [vmem:[#allocation8 + $0x8ec] sm:$0xff]
    %v2365 = vld [vmem:[#allocation8 + $0x8f4] sm:$0xf]
    %v2366 = vld [vmem:[#allocation8 + $0x8f8] sm:$0xff]
    %v2367 = vld [vmem:[#allocation8 + $0x900] sm:$0xff]
    %v2368 = vld [vmem:[#allocation8 + $0x908] sm:$0xff]
    %v2369 = vld [vmem:[#allocation8 + $0x910] sm:$0xf]
    %v2370 = vld [vmem:[#allocation8 + $0x914] sm:$0xff]
    %v2371 = vld [vmem:[#allocation8 + $0x91c] sm:$0xff]
    %v2372 = vld [vmem:[#allocation8 + $0x924] sm:$0xff]
    %v2373 = vld [vmem:[#allocation8 + $0x92c] sm:$0xf]
    %v2374 = vld [vmem:[#allocation8 + $0x930] sm:$0xff]
    %v2375 = vld [vmem:[#allocation8 + $0x938] sm:$0xff]
    %v2376 = vld [vmem:[#allocation8 + $0x940] sm:$0xff]
    %v2377 = vld [vmem:[#allocation8 + $0x948] sm:$0xf]
    %v2378 = vld [vmem:[#allocation8 + $0x94c] sm:$0xff]
    %v2379 = vld [vmem:[#allocation8 + $0x954] sm:$0xff]
    %v2380 = vld [vmem:[#allocation8 + $0x95c] sm:$0xff]
    %v2381 = vld [vmem:[#allocation8 + $0x964] sm:$0xf]
    %v2382 = vld [vmem:[#allocation8 + $0x968] sm:$0xff]
    %v2383 = vld [vmem:[#allocation8 + $0x970] sm:$0xff]
    %v2384 = vld [vmem:[#allocation8 + $0x978] sm:$0xff]
    %v2385 = vld [vmem:[#allocation8 + $0x980] sm:$0xf]
    %v2386 = vld [vmem:[#allocation8 + $0x984] sm:$0xff]
    %v2387 = vld [vmem:[#allocation8 + $0x98c] sm:$0xff]
    %v2388 = vld [vmem:[#allocation8 + $0x994] sm:$0xff]
    %v2389 = vld [vmem:[#allocation8 + $0x99c] sm:$0xf]
    %v2390 = vld [vmem:[#allocation8 + $0x9a0] sm:$0xff]
    %v2391 = vld [vmem:[#allocation8 + $0x9a8] sm:$0xff]
    %v2392 = vld [vmem:[#allocation8 + $0x9b0] sm:$0xff]
    %v2393 = vld [vmem:[#allocation8 + $0x9b8] sm:$0xf]
    %v2394 = vld [vmem:[#allocation8 + $0x9bc] sm:$0xff]
    %v2395 = vld [vmem:[#allocation8 + $0x9c4] sm:$0xff]
    %v2396 = vld [vmem:[#allocation8 + $0x9cc] sm:$0xff]
    %v2397 = vld [vmem:[#allocation8 + $0x9d4] sm:$0xf]
    %v2398 = vld [vmem:[#allocation8 + $0x9d8] sm:$0xff]
    %v2399 = vld [vmem:[#allocation8 + $0x9e0] sm:$0xff]
    %v2400 = vld [vmem:[#allocation8 + $0x9e8] sm:$0xff]
    %v2401 = vld [vmem:[#allocation8 + $0x9f0] sm:$0xf]
    %v2402 = vld [vmem:[#allocation8 + $0x9f4] sm:$0xff]
    %v2403 = vld [vmem:[#allocation8 + $0x9fc] sm:$0xff]
    %v2404 = vld [vmem:[#allocation8 + $0xa04] sm:$0xff]
    %v2405 = vld [vmem:[#allocation8 + $0xa0c] sm:$0xf]
    %v2406 = vld [vmem:[#allocation8 + $0xa10] sm:$0xff]
    %v2407 = vld [vmem:[#allocation8 + $0xa18] sm:$0xff]
    %v2408 = vld [vmem:[#allocation8 + $0xa20] sm:$0xff]
    %v2409 = vld [vmem:[#allocation8 + $0xa28] sm:$0xf]
    %v2410 = vld [vmem:[#allocation8 + $0xa2c] sm:$0xff]
    %v2411 = vld [vmem:[#allocation8 + $0xa34] sm:$0xff]
    %v2412 = vld [vmem:[#allocation8 + $0xa3c] sm:$0xff]
    %v2413 = vld [vmem:[#allocation8 + $0xa44] sm:$0xf]
    %v2414 = vld [vmem:[#allocation8 + $0xa48] sm:$0xff]
    %v2415 = vld [vmem:[#allocation8 + $0xa50] sm:$0xff]
    %v2416 = vld [vmem:[#allocation8 + $0xa58] sm:$0xff]
    %v2417 = vld [vmem:[#allocation8 + $0xa60] sm:$0xf]
    %v2418 = vld [vmem:[#allocation8 + $0xa64] sm:$0xff]
    %v2419 = vld [vmem:[#allocation8 + $0xa6c] sm:$0xff]
    %v2420 = vld [vmem:[#allocation8 + $0xa74] sm:$0xff]
    %v2421 = vld [vmem:[#allocation8 + $0xa7c] sm:$0xf]
    %v2422 = vld [vmem:[#allocation8 + $0xa80] sm:$0xff]
    %v2423 = vld [vmem:[#allocation8 + $0xa88] sm:$0xff]
    %v2424 = vld [vmem:[#allocation8 + $0xa90] sm:$0xff]
    %v2425 = vld [vmem:[#allocation8 + $0xa98] sm:$0xf]
    %v2426 = vld [vmem:[#allocation8 + $0xa9c] sm:$0xff]
    %v2427 = vld [vmem:[#allocation8 + $0xaa4] sm:$0xff]
    %v2428 = vld [vmem:[#allocation8 + $0xaac] sm:$0xff]
    %v2429 = vld [vmem:[#allocation8 + $0xab4] sm:$0xf]
    %v2430 = vld [vmem:[#allocation8 + $0xab8] sm:$0xff]
    %v2431 = vld [vmem:[#allocation8 + $0xac0] sm:$0xff]
    %v2432 = vld [vmem:[#allocation8 + $0xac8] sm:$0xff]
    %v2433 = vld [vmem:[#allocation8 + $0xad0] sm:$0xf]
    %v2434 = vld [vmem:[#allocation8 + $0xad4] sm:$0xff]
    %v2435 = vld [vmem:[#allocation8 + $0xadc] sm:$0xff]
    %v2436 = vld [vmem:[#allocation8 + $0xae4] sm:$0xff]
    %v2437 = vld [vmem:[#allocation8 + $0xaec] sm:$0xf]
    %v2438 = vld [vmem:[#allocation8 + $0xaf0] sm:$0xff]
    %v2439 = vld [vmem:[#allocation8 + $0xaf8] sm:$0xff]
    %v2440 = vld [vmem:[#allocation8 + $0xb00] sm:$0xff]
    %v2441 = vld [vmem:[#allocation8 + $0xb08] sm:$0xf]
    %v2442 = vld [vmem:[#allocation8 + $0xb0c] sm:$0xff]
    %v2443 = vld [vmem:[#allocation8 + $0xb14] sm:$0xff]
    %v2444 = vld [vmem:[#allocation8 + $0xb1c] sm:$0xff]
    %v2445 = vld [vmem:[#allocation8 + $0xb24] sm:$0xf]
    %v2446 = vld [vmem:[#allocation8 + $0xb28] sm:$0xff]
    %v2447 = vld [vmem:[#allocation8 + $0xb30] sm:$0xff]
    %v2448 = vld [vmem:[#allocation8 + $0xb38] sm:$0xff]
    %v2449 = vld [vmem:[#allocation8 + $0xb40] sm:$0xf]
    %v2450 = vld [vmem:[#allocation8 + $0xb44] sm:$0xff]
    %v2451 = vld [vmem:[#allocation8 + $0xb4c] sm:$0xff]
    %v2452 = vld [vmem:[#allocation8 + $0xb54] sm:$0xff]
    %v2453 = vld [vmem:[#allocation8 + $0xb5c] sm:$0xf]
    %v2454 = vld [vmem:[#allocation8 + $0xb60] sm:$0xff]
    %v2455 = vld [vmem:[#allocation8 + $0xb68] sm:$0xff]
    %v2456 = vld [vmem:[#allocation8 + $0xb70] sm:$0xff]
    %v2457 = vld [vmem:[#allocation8 + $0xb78] sm:$0xf]
    %v2458 = vld [vmem:[#allocation8 + $0xb7c] sm:$0xff]
    %v2459 = vld [vmem:[#allocation8 + $0xb84] sm:$0xff]
    %v2460 = vld [vmem:[#allocation8 + $0xb8c] sm:$0xff]
    %v2461 = vld [vmem:[#allocation8 + $0xb94] sm:$0xf]
    %v2462 = vld [vmem:[#allocation8 + $0xb98] sm:$0xff]
    %v2463 = vld [vmem:[#allocation8 + $0xba0] sm:$0xff]
    %v2464 = vld [vmem:[#allocation8 + $0xba8] sm:$0xff]
    %v2465 = vld [vmem:[#allocation8 + $0xbb0] sm:$0xf]
    %v2466 = vld [vmem:[#allocation8 + $0xbb4] sm:$0xff]
    %v2467 = vld [vmem:[#allocation8 + $0xbbc] sm:$0xff]
    %v2468 = vld [vmem:[#allocation8 + $0xbc4] sm:$0xff]
    %v2469 = vld [vmem:[#allocation8 + $0xbcc] sm:$0xf]
    %v2470 = vld [vmem:[#allocation8 + $0xbd0] sm:$0xff]
    %v2471 = vld [vmem:[#allocation8 + $0xbd8] sm:$0xff]
    %v2472 = vld [vmem:[#allocation8 + $0xbe0] sm:$0xff]
    %v2473 = vld [vmem:[#allocation8 + $0xbe8] sm:$0xf]
    %v2474 = vld [vmem:[#allocation8 + $0xbec] sm:$0xff]
    %v2475 = vld [vmem:[#allocation8 + $0xbf4] sm:$0xff]
    %v2476 = vld [vmem:[#allocation8 + $0xbfc] sm:$0xff]
    %v2477 = vld [vmem:[#allocation8 + $0xc04] sm:$0xf]
    %v2478 = vld [vmem:[#allocation8 + $0xc08] sm:$0xff]
    %v2479 = vld [vmem:[#allocation8 + $0xc10] sm:$0xff]
    %v2480 = vld [vmem:[#allocation8 + $0xc18] sm:$0xff]
    %v2481 = vld [vmem:[#allocation8 + $0xc20] sm:$0xf]
    %v2482 = vld [vmem:[#allocation8 + $0xc24] sm:$0xff]
    %v2483 = vld [vmem:[#allocation8 + $0xc2c] sm:$0xff]
    %v2484 = vld [vmem:[#allocation8 + $0xc34] sm:$0xff]
    %v2485 = vld [vmem:[#allocation8 + $0xc3c] sm:$0xf]
    %v2486 = vld [vmem:[#allocation8 + $0xc40] sm:$0xff]
    %v2487 = vld [vmem:[#allocation8 + $0xc48] sm:$0xff]
    %v2488 = vld [vmem:[#allocation8 + $0xc50] sm:$0xff]
    %v2489 = vld [vmem:[#allocation8 + $0xc58] sm:$0xf]
    %v2490 = vld [vmem:[#allocation8 + $0xc5c] sm:$0xff]
    %v2491 = vld [vmem:[#allocation8 + $0xc64] sm:$0xff]
    %v2492 = vld [vmem:[#allocation8 + $0xc6c] sm:$0xff]
    %v2493 = vld [vmem:[#allocation8 + $0xc74] sm:$0xf]
    %v2494 = vld [vmem:[#allocation8 + $0xc78] sm:$0xff]
    %v2495 = vld [vmem:[#allocation8 + $0xc80] sm:$0xff]
    %v2496 = vld [vmem:[#allocation8 + $0xc88] sm:$0xff]
    %v2497 = vld [vmem:[#allocation8 + $0xc90] sm:$0xf]
    %v2498 = vld [vmem:[#allocation8 + $0xc94] sm:$0xff]
    %v2499 = vld [vmem:[#allocation8 + $0xc9c] sm:$0xff]
    %v2500 = vld [vmem:[#allocation8 + $0xca4] sm:$0xff]
    %v2501 = vld [vmem:[#allocation8 + $0xcac] sm:$0xf]
    %v2502 = vld [vmem:[#allocation8 + $0xcb0] sm:$0xff]
    %v2503 = vld [vmem:[#allocation8 + $0xcb8] sm:$0xff]
    %v2504 = vld [vmem:[#allocation8 + $0xcc0] sm:$0xff]
    %v2505 = vld [vmem:[#allocation8 + $0xcc8] sm:$0xf]
    %v2506 = vld [vmem:[#allocation8 + $0xccc] sm:$0xff]
    %v2507 = vld [vmem:[#allocation8 + $0xcd4] sm:$0xff]
    %v2508 = vld [vmem:[#allocation8 + $0xcdc] sm:$0xff]
    %v2509 = vld [vmem:[#allocation8 + $0xce4] sm:$0xf]
    %v2510 = vld [vmem:[#allocation8 + $0xce8] sm:$0xff]
    %v2511 = vld [vmem:[#allocation8 + $0xcf0] sm:$0xff]
    %v2512 = vld [vmem:[#allocation8 + $0xcf8] sm:$0xff]
    %v2513 = vld [vmem:[#allocation8 + $0xd00] sm:$0xf]
    %v2514 = vld [vmem:[#allocation8 + $0xd04] sm:$0xff]
    %v2515 = vld [vmem:[#allocation8 + $0xd0c] sm:$0xff]
    %v2516 = vld [vmem:[#allocation8 + $0xd14] sm:$0xff]
    %v2517 = vld [vmem:[#allocation8 + $0xd1c] sm:$0xf]
    %v2518 = vld [vmem:[#allocation8 + $0xd20] sm:$0xff]
    %v2519 = vld [vmem:[#allocation8 + $0xd28] sm:$0xff]
    %v2520 = vld [vmem:[#allocation8 + $0xd30] sm:$0xff]
    %v2521 = vld [vmem:[#allocation8 + $0xd38] sm:$0xf]
    %v2522 = vld [vmem:[#allocation8 + $0xd3c] sm:$0xff]
    %v2523 = vld [vmem:[#allocation8 + $0xd44] sm:$0xff]
    %v2524 = vld [vmem:[#allocation8 + $0xd4c] sm:$0xff]
    %v2525 = vld [vmem:[#allocation8 + $0xd54] sm:$0xf]
    %v2526 = vld [vmem:[#allocation8 + $0xd58] sm:$0xff]
    %v2527 = vld [vmem:[#allocation8 + $0xd60] sm:$0xff]
    %v2528 = vld [vmem:[#allocation8 + $0xd68] sm:$0xff]
    %v2529 = vld [vmem:[#allocation8 + $0xd70] sm:$0xf]
    %v2530 = vld [vmem:[#allocation8 + $0xd74] sm:$0xff]
    %v2531 = vld [vmem:[#allocation8 + $0xd7c] sm:$0xff]
    %v2532 = vld [vmem:[#allocation8 + $0xd84] sm:$0xff]
    %v2533 = vld [vmem:[#allocation8 + $0xd8c] sm:$0xf]
    %v2534 = vld [vmem:[#allocation8 + $0xd90] sm:$0xff]
    %v2535 = vld [vmem:[#allocation8 + $0xd98] sm:$0xff]
    %v2536 = vld [vmem:[#allocation8 + $0xda0] sm:$0xff]
    %v2537 = vld [vmem:[#allocation8 + $0xda8] sm:$0xf]
    %v2538 = vld [vmem:[#allocation8 + $0xdac] sm:$0xff]
    %v2539 = vld [vmem:[#allocation8 + $0xdb4] sm:$0xff]
    %v2540 = vld [vmem:[#allocation8 + $0xdbc] sm:$0xff]
    %v2541 = vld [vmem:[#allocation8 + $0xdc4] sm:$0xf]
    %v2542 = vld [vmem:[#allocation8 + $0xdc8] sm:$0xff]
    %v2543 = vld [vmem:[#allocation8 + $0xdd0] sm:$0xff]
    %v2544 = vld [vmem:[#allocation8 + $0xdd8] sm:$0xff]
    %v2545 = vld [vmem:[#allocation8 + $0xde0] sm:$0xf]
    %v2546 = vld [vmem:[#allocation8 + $0xde4] sm:$0xff]
    %v2547 = vld [vmem:[#allocation8 + $0xdec] sm:$0xff]
    %v2548 = vld [vmem:[#allocation8 + $0xdf4] sm:$0xff]
    %v2549 = vld [vmem:[#allocation8 + $0xdfc] sm:$0xf]
    %v2550 = vld [vmem:[#allocation10] sm:$0xff]
    %v2552 = vlaneseq
    %v2553 = vshrl.u32 %v2552, 7
    %v2554 = vsub.s32 0, %v2553
    %v2555 = vrot.slane %v2550, %v2554
    %v2556 = vlaneseq
    %v2557 = vshrl.u32 %v2556, 7
    %v2558 = vsub.s32 1, %v2557
    %v2559 = vrot.slane %v2550, %v2558
    %v2560 = vlaneseq
    %v2561 = vshrl.u32 %v2560, 7
    %v2562 = vsub.s32 2, %v2561
    %v2563 = vrot.slane %v2550, %v2562
    %v2564 = vlaneseq
    %v2565 = vshrl.u32 %v2564, 7
    %v2566 = vsub.s32 3, %v2565
    %v2567 = vrot.slane %v2550, %v2566
    %v2568 = vlaneseq
    %v2569 = vshrl.u32 %v2568, 7
    %v2570 = vsub.s32 4, %v2569
    %v2571 = vrot.slane %v2550, %v2570
    %v2572 = vlaneseq
    %v2573 = vshrl.u32 %v2572, 7
    %v2574 = vsub.s32 5, %v2573
    %v2575 = vrot.slane %v2550, %v2574
    %v2576 = vlaneseq
    %v2577 = vshrl.u32 %v2576, 7
    %v2578 = vsub.s32 6, %v2577
    %v2579 = vrot.slane %v2550, %v2578
    %v3099 = vunpack.c.l.b16 %v2038
    %v3100 = vunpack.c.h.b16 %v2038
    %v3101 = vunpack.c.l.b16 %v2039
    %v3102 = vunpack.c.h.b16 %v2039
    %v3103 = vunpack.c.l.b16 %v2040
    %v3104 = vunpack.c.h.b16 %v2040
    %v3105 = vunpack.c.l.b16 %v2041
    %v3106 = vunpack.c.l.b16 %v2042
    %v3107 = vunpack.c.h.b16 %v2042
    %v3108 = vunpack.c.l.b16 %v2043
    %v3109 = vunpack.c.h.b16 %v2043
    %v3110 = vunpack.c.l.b16 %v2044
    %v3111 = vunpack.c.h.b16 %v2044
    %v3112 = vunpack.c.l.b16 %v2045
    %v3113 = vunpack.c.l.b16 %v2046
    %v3114 = vunpack.c.h.b16 %v2046
    %v3115 = vunpack.c.l.b16 %v2047
    %v3116 = vunpack.c.h.b16 %v2047
    %v3117 = vunpack.c.l.b16 %v2048
    %v3118 = vunpack.c.h.b16 %v2048
    %v3119 = vunpack.c.l.b16 %v2049
    %v3120 = vunpack.c.l.b16 %v2050
    %v3121 = vunpack.c.h.b16 %v2050
    %v3122 = vunpack.c.l.b16 %v2051
    %v3123 = vunpack.c.h.b16 %v2051
    %v3124 = vunpack.c.l.b16 %v2052
    %v3125 = vunpack.c.h.b16 %v2052
    %v3126 = vunpack.c.l.b16 %v2053
    %v3127 = vunpack.c.l.b16 %v2054
    %v3128 = vunpack.c.h.b16 %v2054
    %v3129 = vunpack.c.l.b16 %v2055
    %v3130 = vunpack.c.h.b16 %v2055
    %v3131 = vunpack.c.l.b16 %v2056
    %v3132 = vunpack.c.h.b16 %v2056
    %v3133 = vunpack.c.l.b16 %v2057
    %v3134 = vunpack.c.l.b16 %v2058
    %v3135 = vunpack.c.h.b16 %v2058
    %v3136 = vunpack.c.l.b16 %v2059
    %v3137 = vunpack.c.h.b16 %v2059
    %v3138 = vunpack.c.l.b16 %v2060
    %v3139 = vunpack.c.h.b16 %v2060
    %v3140 = vunpack.c.l.b16 %v2061
    %v3141 = vunpack.c.l.b16 %v2062
    %v3142 = vunpack.c.h.b16 %v2062
    %v3143 = vunpack.c.l.b16 %v2063
    %v3144 = vunpack.c.h.b16 %v2063
    %v3145 = vunpack.c.l.b16 %v2064
    %v3146 = vunpack.c.h.b16 %v2064
    %v3147 = vunpack.c.l.b16 %v2065
    %v3148 = vunpack.c.l.b16 %v2066
    %v3149 = vunpack.c.h.b16 %v2066
    %v3150 = vunpack.c.l.b16 %v2067
    %v3151 = vunpack.c.h.b16 %v2067
    %v3152 = vunpack.c.l.b16 %v2068
    %v3153 = vunpack.c.h.b16 %v2068
    %v3154 = vunpack.c.l.b16 %v2069
    %v3155 = vunpack.c.l.b16 %v2070
    %v3156 = vunpack.c.h.b16 %v2070
    %v3157 = vunpack.c.l.b16 %v2071
    %v3158 = vunpack.c.h.b16 %v2071
    %v3159 = vunpack.c.l.b16 %v2072
    %v3160 = vunpack.c.h.b16 %v2072
    %v3161 = vunpack.c.l.b16 %v2073
    %v3162 = vunpack.c.l.b16 %v2074
    %v3163 = vunpack.c.h.b16 %v2074
    %v3164 = vunpack.c.l.b16 %v2075
    %v3165 = vunpack.c.h.b16 %v2075
    %v3166 = vunpack.c.l.b16 %v2076
    %v3167 = vunpack.c.h.b16 %v2076
    %v3168 = vunpack.c.l.b16 %v2077
    %v3169 = vunpack.c.l.b16 %v2078
    %v3170 = vunpack.c.h.b16 %v2078
    %v3171 = vunpack.c.l.b16 %v2079
    %v3172 = vunpack.c.h.b16 %v2079
    %v3173 = vunpack.c.l.b16 %v2080
    %v3174 = vunpack.c.h.b16 %v2080
    %v3175 = vunpack.c.l.b16 %v2081
    %v3176 = vunpack.c.l.b16 %v2082
    %v3177 = vunpack.c.h.b16 %v2082
    %v3178 = vunpack.c.l.b16 %v2083
    %v3179 = vunpack.c.h.b16 %v2083
    %v3180 = vunpack.c.l.b16 %v2084
    %v3181 = vunpack.c.h.b16 %v2084
    %v3182 = vunpack.c.l.b16 %v2085
    %v3183 = vunpack.c.l.b16 %v2086
    %v3184 = vunpack.c.h.b16 %v2086
    %v3185 = vunpack.c.l.b16 %v2087
    %v3186 = vunpack.c.h.b16 %v2087
    %v3187 = vunpack.c.l.b16 %v2088
    %v3188 = vunpack.c.h.b16 %v2088
    %v3189 = vunpack.c.l.b16 %v2089
    %v3190 = vunpack.c.l.b16 %v2090
    %v3191 = vunpack.c.h.b16 %v2090
    %v3192 = vunpack.c.l.b16 %v2091
    %v3193 = vunpack.c.h.b16 %v2091
    %v3194 = vunpack.c.l.b16 %v2092
    %v3195 = vunpack.c.h.b16 %v2092
    %v3196 = vunpack.c.l.b16 %v2093
    %v3197 = vunpack.c.l.b16 %v2094
    %v3198 = vunpack.c.h.b16 %v2094
    %v3199 = vunpack.c.l.b16 %v2095
    %v3200 = vunpack.c.h.b16 %v2095
    %v3201 = vunpack.c.l.b16 %v2096
    %v3202 = vunpack.c.h.b16 %v2096
    %v3203 = vunpack.c.l.b16 %v2097
    %v3204 = vunpack.c.l.b16 %v2098
    %v3205 = vunpack.c.h.b16 %v2098
    %v3206 = vunpack.c.l.b16 %v2099
    %v3207 = vunpack.c.h.b16 %v2099
    %v3208 = vunpack.c.l.b16 %v2100
    %v3209 = vunpack.c.h.b16 %v2100
    %v3210 = vunpack.c.l.b16 %v2101
    %v3211 = vunpack.c.l.b16 %v2102
    %v3212 = vunpack.c.h.b16 %v2102
    %v3213 = vunpack.c.l.b16 %v2103
    %v3214 = vunpack.c.h.b16 %v2103
    %v3215 = vunpack.c.l.b16 %v2104
    %v3216 = vunpack.c.h.b16 %v2104
    %v3217 = vunpack.c.l.b16 %v2105
    %v3218 = vunpack.c.l.b16 %v2106
    %v3219 = vunpack.c.h.b16 %v2106
    %v3220 = vunpack.c.l.b16 %v2107
    %v3221 = vunpack.c.h.b16 %v2107
    %v3222 = vunpack.c.l.b16 %v2108
    %v3223 = vunpack.c.h.b16 %v2108
    %v3224 = vunpack.c.l.b16 %v2109
    %v3225 = vunpack.c.l.b16 %v2110
    %v3226 = vunpack.c.h.b16 %v2110
    %v3227 = vunpack.c.l.b16 %v2111
    %v3228 = vunpack.c.h.b16 %v2111
    %v3229 = vunpack.c.l.b16 %v2112
    %v3230 = vunpack.c.h.b16 %v2112
    %v3231 = vunpack.c.l.b16 %v2113
    %v3232 = vunpack.c.l.b16 %v2114
    %v3233 = vunpack.c.h.b16 %v2114
    %v3234 = vunpack.c.l.b16 %v2115
    %v3235 = vunpack.c.h.b16 %v2115
    %v3236 = vunpack.c.l.b16 %v2116
    %v3237 = vunpack.c.h.b16 %v2116
    %v3238 = vunpack.c.l.b16 %v2117
    %v3239 = vunpack.c.l.b16 %v2118
    %v3240 = vunpack.c.h.b16 %v2118
    %v3241 = vunpack.c.l.b16 %v2119
    %v3242 = vunpack.c.h.b16 %v2119
    %v3243 = vunpack.c.l.b16 %v2120
    %v3244 = vunpack.c.h.b16 %v2120
    %v3245 = vunpack.c.l.b16 %v2121
    %v3246 = vunpack.c.l.b16 %v2122
    %v3247 = vunpack.c.h.b16 %v2122
    %v3248 = vunpack.c.l.b16 %v2123
    %v3249 = vunpack.c.h.b16 %v2123
    %v3250 = vunpack.c.l.b16 %v2124
    %v3251 = vunpack.c.h.b16 %v2124
    %v3252 = vunpack.c.l.b16 %v2125
    %v3253 = vunpack.c.l.b16 %v2126
    %v3254 = vunpack.c.h.b16 %v2126
    %v3255 = vunpack.c.l.b16 %v2127
    %v3256 = vunpack.c.h.b16 %v2127
    %v3257 = vunpack.c.l.b16 %v2128
    %v3258 = vunpack.c.h.b16 %v2128
    %v3259 = vunpack.c.l.b16 %v2129
    %v3260 = vunpack.c.l.b16 %v2130
    %v3261 = vunpack.c.h.b16 %v2130
    %v3262 = vunpack.c.l.b16 %v2131
    %v3263 = vunpack.c.h.b16 %v2131
    %v3264 = vunpack.c.l.b16 %v2132
    %v3265 = vunpack.c.h.b16 %v2132
    %v3266 = vunpack.c.l.b16 %v2133
    %v3267 = vunpack.c.l.b16 %v2134
    %v3268 = vunpack.c.h.b16 %v2134
    %v3269 = vunpack.c.l.b16 %v2135
    %v3270 = vunpack.c.h.b16 %v2135
    %v3271 = vunpack.c.l.b16 %v2136
    %v3272 = vunpack.c.h.b16 %v2136
    %v3273 = vunpack.c.l.b16 %v2137
    %v3274 = vunpack.c.l.b16 %v2138
    %v3275 = vunpack.c.h.b16 %v2138
    %v3276 = vunpack.c.l.b16 %v2139
    %v3277 = vunpack.c.h.b16 %v2139
    %v3278 = vunpack.c.l.b16 %v2140
    %v3279 = vunpack.c.h.b16 %v2140
    %v3280 = vunpack.c.l.b16 %v2141
    %v3281 = vunpack.c.l.b16 %v2142
    %v3282 = vunpack.c.h.b16 %v2142
    %v3283 = vunpack.c.l.b16 %v2143
    %v3284 = vunpack.c.h.b16 %v2143
    %v3285 = vunpack.c.l.b16 %v2144
    %v3286 = vunpack.c.h.b16 %v2144
    %v3287 = vunpack.c.l.b16 %v2145
    %v3288 = vunpack.c.l.b16 %v2146
    %v3289 = vunpack.c.h.b16 %v2146
    %v3290 = vunpack.c.l.b16 %v2147
    %v3291 = vunpack.c.h.b16 %v2147
    %v3292 = vunpack.c.l.b16 %v2148
    %v3293 = vunpack.c.h.b16 %v2148
    %v3294 = vunpack.c.l.b16 %v2149
    %v3295 = vunpack.c.l.b16 %v2150
    %v3296 = vunpack.c.h.b16 %v2150
    %v3297 = vunpack.c.l.b16 %v2151
    %v3298 = vunpack.c.h.b16 %v2151
    %v3299 = vunpack.c.l.b16 %v2152
    %v3300 = vunpack.c.h.b16 %v2152
    %v3301 = vunpack.c.l.b16 %v2153
    %v3302 = vunpack.c.l.b16 %v2154
    %v3303 = vunpack.c.h.b16 %v2154
    %v3304 = vunpack.c.l.b16 %v2155
    %v3305 = vunpack.c.h.b16 %v2155
    %v3306 = vunpack.c.l.b16 %v2156
    %v3307 = vunpack.c.h.b16 %v2156
    %v3308 = vunpack.c.l.b16 %v2157
    %v3309 = vunpack.c.l.b16 %v2158
    %v3310 = vunpack.c.h.b16 %v2158
    %v3311 = vunpack.c.l.b16 %v2159
    %v3312 = vunpack.c.h.b16 %v2159
    %v3313 = vunpack.c.l.b16 %v2160
    %v3314 = vunpack.c.h.b16 %v2160
    %v3315 = vunpack.c.l.b16 %v2161
    %v3316 = vunpack.c.l.b16 %v2162
    %v3317 = vunpack.c.h.b16 %v2162
    %v3318 = vunpack.c.l.b16 %v2163
    %v3319 = vunpack.c.h.b16 %v2163
    %v3320 = vunpack.c.l.b16 %v2164
    %v3321 = vunpack.c.h.b16 %v2164
    %v3322 = vunpack.c.l.b16 %v2165
    %v3323 = vunpack.c.l.b16 %v2166
    %v3324 = vunpack.c.h.b16 %v2166
    %v3325 = vunpack.c.l.b16 %v2167
    %v3326 = vunpack.c.h.b16 %v2167
    %v3327 = vunpack.c.l.b16 %v2168
    %v3328 = vunpack.c.h.b16 %v2168
    %v3329 = vunpack.c.l.b16 %v2169
    %v3330 = vunpack.c.l.b16 %v2170
    %v3331 = vunpack.c.h.b16 %v2170
    %v3332 = vunpack.c.l.b16 %v2171
    %v3333 = vunpack.c.h.b16 %v2171
    %v3334 = vunpack.c.l.b16 %v2172
    %v3335 = vunpack.c.h.b16 %v2172
    %v3336 = vunpack.c.l.b16 %v2173
    %v3337 = vunpack.c.l.b16 %v2174
    %v3338 = vunpack.c.h.b16 %v2174
    %v3339 = vunpack.c.l.b16 %v2175
    %v3340 = vunpack.c.h.b16 %v2175
    %v3341 = vunpack.c.l.b16 %v2176
    %v3342 = vunpack.c.h.b16 %v2176
    %v3343 = vunpack.c.l.b16 %v2177
    %v3344 = vunpack.c.l.b16 %v2178
    %v3345 = vunpack.c.h.b16 %v2178
    %v3346 = vunpack.c.l.b16 %v2179
    %v3347 = vunpack.c.h.b16 %v2179
    %v3348 = vunpack.c.l.b16 %v2180
    %v3349 = vunpack.c.h.b16 %v2180
    %v3350 = vunpack.c.l.b16 %v2181
    %v3351 = vunpack.c.l.b16 %v2182
    %v3352 = vunpack.c.h.b16 %v2182
    %v3353 = vunpack.c.l.b16 %v2183
    %v3354 = vunpack.c.h.b16 %v2183
    %v3355 = vunpack.c.l.b16 %v2184
    %v3356 = vunpack.c.h.b16 %v2184
    %v3357 = vunpack.c.l.b16 %v2185
    %v3358 = vunpack.c.l.b16 %v2186
    %v3359 = vunpack.c.h.b16 %v2186
    %v3360 = vunpack.c.l.b16 %v2187
    %v3361 = vunpack.c.h.b16 %v2187
    %v3362 = vunpack.c.l.b16 %v2188
    %v3363 = vunpack.c.h.b16 %v2188
    %v3364 = vunpack.c.l.b16 %v2189
    %v3365 = vunpack.c.l.b16 %v2190
    %v3366 = vunpack.c.h.b16 %v2190
    %v3367 = vunpack.c.l.b16 %v2191
    %v3368 = vunpack.c.h.b16 %v2191
    %v3369 = vunpack.c.l.b16 %v2192
    %v3370 = vunpack.c.h.b16 %v2192
    %v3371 = vunpack.c.l.b16 %v2193
    %v3372 = vunpack.c.l.b16 %v2194
    %v3373 = vunpack.c.h.b16 %v2194
    %v3374 = vunpack.c.l.b16 %v2195
    %v3375 = vunpack.c.h.b16 %v2195
    %v3376 = vunpack.c.l.b16 %v2196
    %v3377 = vunpack.c.h.b16 %v2196
    %v3378 = vunpack.c.l.b16 %v2197
    %v3379 = vunpack.c.l.b16 %v2198
    %v3380 = vunpack.c.h.b16 %v2198
    %v3381 = vunpack.c.l.b16 %v2199
    %v3382 = vunpack.c.h.b16 %v2199
    %v3383 = vunpack.c.l.b16 %v2200
    %v3384 = vunpack.c.h.b16 %v2200
    %v3385 = vunpack.c.l.b16 %v2201
    %v3386 = vunpack.c.l.b16 %v2202
    %v3387 = vunpack.c.h.b16 %v2202
    %v3388 = vunpack.c.l.b16 %v2203
    %v3389 = vunpack.c.h.b16 %v2203
    %v3390 = vunpack.c.l.b16 %v2204
    %v3391 = vunpack.c.h.b16 %v2204
    %v3392 = vunpack.c.l.b16 %v2205
    %v3393 = vunpack.c.l.b16 %v2206
    %v3394 = vunpack.c.h.b16 %v2206
    %v3395 = vunpack.c.l.b16 %v2207
    %v3396 = vunpack.c.h.b16 %v2207
    %v3397 = vunpack.c.l.b16 %v2208
    %v3398 = vunpack.c.h.b16 %v2208
    %v3399 = vunpack.c.l.b16 %v2209
    %v3400 = vunpack.c.l.b16 %v2210
    %v3401 = vunpack.c.h.b16 %v2210
    %v3402 = vunpack.c.l.b16 %v2211
    %v3403 = vunpack.c.h.b16 %v2211
    %v3404 = vunpack.c.l.b16 %v2212
    %v3405 = vunpack.c.h.b16 %v2212
    %v3406 = vunpack.c.l.b16 %v2213
    %v3407 = vunpack.c.l.b16 %v2214
    %v3408 = vunpack.c.h.b16 %v2214
    %v3409 = vunpack.c.l.b16 %v2215
    %v3410 = vunpack.c.h.b16 %v2215
    %v3411 = vunpack.c.l.b16 %v2216
    %v3412 = vunpack.c.h.b16 %v2216
    %v3413 = vunpack.c.l.b16 %v2217
    %v3414 = vunpack.c.l.b16 %v2218
    %v3415 = vunpack.c.h.b16 %v2218
    %v3416 = vunpack.c.l.b16 %v2219
    %v3417 = vunpack.c.h.b16 %v2219
    %v3418 = vunpack.c.l.b16 %v2220
    %v3419 = vunpack.c.h.b16 %v2220
    %v3420 = vunpack.c.l.b16 %v2221
    %v3421 = vunpack.c.l.b16 %v2222
    %v3422 = vunpack.c.h.b16 %v2222
    %v3423 = vunpack.c.l.b16 %v2223
    %v3424 = vunpack.c.h.b16 %v2223
    %v3425 = vunpack.c.l.b16 %v2224
    %v3426 = vunpack.c.h.b16 %v2224
    %v3427 = vunpack.c.l.b16 %v2225
    %v3428 = vunpack.c.l.b16 %v2226
    %v3429 = vunpack.c.h.b16 %v2226
    %v3430 = vunpack.c.l.b16 %v2227
    %v3431 = vunpack.c.h.b16 %v2227
    %v3432 = vunpack.c.l.b16 %v2228
    %v3433 = vunpack.c.h.b16 %v2228
    %v3434 = vunpack.c.l.b16 %v2229
    %v3435 = vunpack.c.l.b16 %v2230
    %v3436 = vunpack.c.h.b16 %v2230
    %v3437 = vunpack.c.l.b16 %v2231
    %v3438 = vunpack.c.h.b16 %v2231
    %v3439 = vunpack.c.l.b16 %v2232
    %v3440 = vunpack.c.h.b16 %v2232
    %v3441 = vunpack.c.l.b16 %v2233
    %v3442 = vunpack.c.l.b16 %v2234
    %v3443 = vunpack.c.h.b16 %v2234
    %v3444 = vunpack.c.l.b16 %v2235
    %v3445 = vunpack.c.h.b16 %v2235
    %v3446 = vunpack.c.l.b16 %v2236
    %v3447 = vunpack.c.h.b16 %v2236
    %v3448 = vunpack.c.l.b16 %v2237
    %v3449 = vunpack.c.l.b16 %v2238
    %v3450 = vunpack.c.h.b16 %v2238
    %v3451 = vunpack.c.l.b16 %v2239
    %v3452 = vunpack.c.h.b16 %v2239
    %v3453 = vunpack.c.l.b16 %v2240
    %v3454 = vunpack.c.h.b16 %v2240
    %v3455 = vunpack.c.l.b16 %v2241
    %v3456 = vunpack.c.l.b16 %v2242
    %v3457 = vunpack.c.h.b16 %v2242
    %v3458 = vunpack.c.l.b16 %v2243
    %v3459 = vunpack.c.h.b16 %v2243
    %v3460 = vunpack.c.l.b16 %v2244
    %v3461 = vunpack.c.h.b16 %v2244
    %v3462 = vunpack.c.l.b16 %v2245
    %v3463 = vunpack.c.l.b16 %v2246
    %v3464 = vunpack.c.h.b16 %v2246
    %v3465 = vunpack.c.l.b16 %v2247
    %v3466 = vunpack.c.h.b16 %v2247
    %v3467 = vunpack.c.l.b16 %v2248
    %v3468 = vunpack.c.h.b16 %v2248
    %v3469 = vunpack.c.l.b16 %v2249
    %v3470 = vunpack.c.l.b16 %v2250
    %v3471 = vunpack.c.h.b16 %v2250
    %v3472 = vunpack.c.l.b16 %v2251
    %v3473 = vunpack.c.h.b16 %v2251
    %v3474 = vunpack.c.l.b16 %v2252
    %v3475 = vunpack.c.h.b16 %v2252
    %v3476 = vunpack.c.l.b16 %v2253
    %v3477 = vunpack.c.l.b16 %v2254
    %v3478 = vunpack.c.h.b16 %v2254
    %v3479 = vunpack.c.l.b16 %v2255
    %v3480 = vunpack.c.h.b16 %v2255
    %v3481 = vunpack.c.l.b16 %v2256
    %v3482 = vunpack.c.h.b16 %v2256
    %v3483 = vunpack.c.l.b16 %v2257
    %v3484 = vunpack.c.l.b16 %v2258
    %v3485 = vunpack.c.h.b16 %v2258
    %v3486 = vunpack.c.l.b16 %v2259
    %v3487 = vunpack.c.h.b16 %v2259
    %v3488 = vunpack.c.l.b16 %v2260
    %v3489 = vunpack.c.h.b16 %v2260
    %v3490 = vunpack.c.l.b16 %v2261
    %v3491 = vunpack.c.l.b16 %v2262
    %v3492 = vunpack.c.h.b16 %v2262
    %v3493 = vunpack.c.l.b16 %v2263
    %v3494 = vunpack.c.h.b16 %v2263
    %v3495 = vunpack.c.l.b16 %v2264
    %v3496 = vunpack.c.h.b16 %v2264
    %v3497 = vunpack.c.l.b16 %v2265
    %v3498 = vunpack.c.l.b16 %v2266
    %v3499 = vunpack.c.h.b16 %v2266
    %v3500 = vunpack.c.l.b16 %v2267
    %v3501 = vunpack.c.h.b16 %v2267
    %v3502 = vunpack.c.l.b16 %v2268
    %v3503 = vunpack.c.h.b16 %v2268
    %v3504 = vunpack.c.l.b16 %v2269
    %v3505 = vunpack.c.l.b16 %v2270
    %v3506 = vunpack.c.h.b16 %v2270
    %v3507 = vunpack.c.l.b16 %v2271
    %v3508 = vunpack.c.h.b16 %v2271
    %v3509 = vunpack.c.l.b16 %v2272
    %v3510 = vunpack.c.h.b16 %v2272
    %v3511 = vunpack.c.l.b16 %v2273
    %v3512 = vunpack.c.l.b16 %v2274
    %v3513 = vunpack.c.h.b16 %v2274
    %v3514 = vunpack.c.l.b16 %v2275
    %v3515 = vunpack.c.h.b16 %v2275
    %v3516 = vunpack.c.l.b16 %v2276
    %v3517 = vunpack.c.h.b16 %v2276
    %v3518 = vunpack.c.l.b16 %v2277
    %v3519 = vunpack.c.l.b16 %v2278
    %v3520 = vunpack.c.h.b16 %v2278
    %v3521 = vunpack.c.l.b16 %v2279
    %v3522 = vunpack.c.h.b16 %v2279
    %v3523 = vunpack.c.l.b16 %v2280
    %v3524 = vunpack.c.h.b16 %v2280
    %v3525 = vunpack.c.l.b16 %v2281
    %v3526 = vunpack.c.l.b16 %v2282
    %v3527 = vunpack.c.h.b16 %v2282
    %v3528 = vunpack.c.l.b16 %v2283
    %v3529 = vunpack.c.h.b16 %v2283
    %v3530 = vunpack.c.l.b16 %v2284
    %v3531 = vunpack.c.h.b16 %v2284
    %v3532 = vunpack.c.l.b16 %v2285
    %v3533 = vunpack.c.l.b16 %v2286
    %v3534 = vunpack.c.h.b16 %v2286
    %v3535 = vunpack.c.l.b16 %v2287
    %v3536 = vunpack.c.h.b16 %v2287
    %v3537 = vunpack.c.l.b16 %v2288
    %v3538 = vunpack.c.h.b16 %v2288
    %v3539 = vunpack.c.l.b16 %v2289
    %v3540 = vunpack.c.l.b16 %v2290
    %v3541 = vunpack.c.h.b16 %v2290
    %v3542 = vunpack.c.l.b16 %v2291
    %v3543 = vunpack.c.h.b16 %v2291
    %v3544 = vunpack.c.l.b16 %v2292
    %v3545 = vunpack.c.h.b16 %v2292
    %v3546 = vunpack.c.l.b16 %v2293
    %v3547 = vunpack.c.l.b16 %v2294
    %v3548 = vunpack.c.h.b16 %v2294
    %v3549 = vunpack.c.l.b16 %v2295
    %v3550 = vunpack.c.h.b16 %v2295
    %v3551 = vunpack.c.l.b16 %v2296
    %v3552 = vunpack.c.h.b16 %v2296
    %v3553 = vunpack.c.l.b16 %v2297
    %v3554 = vunpack.c.l.b16 %v2298
    %v3555 = vunpack.c.h.b16 %v2298
    %v3556 = vunpack.c.l.b16 %v2299
    %v3557 = vunpack.c.h.b16 %v2299
    %v3558 = vunpack.c.l.b16 %v2300
    %v3559 = vunpack.c.h.b16 %v2300
    %v3560 = vunpack.c.l.b16 %v2301
    %v3561 = vunpack.c.l.b16 %v2302
    %v3562 = vunpack.c.h.b16 %v2302
    %v3563 = vunpack.c.l.b16 %v2303
    %v3564 = vunpack.c.h.b16 %v2303
    %v3565 = vunpack.c.l.b16 %v2304
    %v3566 = vunpack.c.h.b16 %v2304
    %v3567 = vunpack.c.l.b16 %v2305
    %v3568 = vunpack.c.l.b16 %v2306
    %v3569 = vunpack.c.h.b16 %v2306
    %v3570 = vunpack.c.l.b16 %v2307
    %v3571 = vunpack.c.h.b16 %v2307
    %v3572 = vunpack.c.l.b16 %v2308
    %v3573 = vunpack.c.h.b16 %v2308
    %v3574 = vunpack.c.l.b16 %v2309
    %v3575 = vunpack.c.l.b16 %v2310
    %v3576 = vunpack.c.h.b16 %v2310
    %v3577 = vunpack.c.l.b16 %v2311
    %v3578 = vunpack.c.h.b16 %v2311
    %v3579 = vunpack.c.l.b16 %v2312
    %v3580 = vunpack.c.h.b16 %v2312
    %v3581 = vunpack.c.l.b16 %v2313
    %v3582 = vunpack.c.l.b16 %v2314
    %v3583 = vunpack.c.h.b16 %v2314
    %v3584 = vunpack.c.l.b16 %v2315
    %v3585 = vunpack.c.h.b16 %v2315
    %v3586 = vunpack.c.l.b16 %v2316
    %v3587 = vunpack.c.h.b16 %v2316
    %v3588 = vunpack.c.l.b16 %v2317
    %v3589 = vunpack.c.l.b16 %v2318
    %v3590 = vunpack.c.h.b16 %v2318
    %v3591 = vunpack.c.l.b16 %v2319
    %v3592 = vunpack.c.h.b16 %v2319
    %v3593 = vunpack.c.l.b16 %v2320
    %v3594 = vunpack.c.h.b16 %v2320
    %v3595 = vunpack.c.l.b16 %v2321
    %v3596 = vunpack.c.l.b16 %v2322
    %v3597 = vunpack.c.h.b16 %v2322
    %v3598 = vunpack.c.l.b16 %v2323
    %v3599 = vunpack.c.h.b16 %v2323
    %v3600 = vunpack.c.l.b16 %v2324
    %v3601 = vunpack.c.h.b16 %v2324
    %v3602 = vunpack.c.l.b16 %v2325
    %v3603 = vunpack.c.l.b16 %v2326
    %v3604 = vunpack.c.h.b16 %v2326
    %v3605 = vunpack.c.l.b16 %v2327
    %v3606 = vunpack.c.h.b16 %v2327
    %v3607 = vunpack.c.l.b16 %v2328
    %v3608 = vunpack.c.h.b16 %v2328
    %v3609 = vunpack.c.l.b16 %v2329
    %v3610 = vunpack.c.l.b16 %v2330
    %v3611 = vunpack.c.h.b16 %v2330
    %v3612 = vunpack.c.l.b16 %v2331
    %v3613 = vunpack.c.h.b16 %v2331
    %v3614 = vunpack.c.l.b16 %v2332
    %v3615 = vunpack.c.h.b16 %v2332
    %v3616 = vunpack.c.l.b16 %v2333
    %v3617 = vunpack.c.l.b16 %v2334
    %v3618 = vunpack.c.h.b16 %v2334
    %v3619 = vunpack.c.l.b16 %v2335
    %v3620 = vunpack.c.h.b16 %v2335
    %v3621 = vunpack.c.l.b16 %v2336
    %v3622 = vunpack.c.h.b16 %v2336
    %v3623 = vunpack.c.l.b16 %v2337
    %v3624 = vunpack.c.l.b16 %v2338
    %v3625 = vunpack.c.h.b16 %v2338
    %v3626 = vunpack.c.l.b16 %v2339
    %v3627 = vunpack.c.h.b16 %v2339
    %v3628 = vunpack.c.l.b16 %v2340
    %v3629 = vunpack.c.h.b16 %v2340
    %v3630 = vunpack.c.l.b16 %v2341
    %v3631 = vunpack.c.l.b16 %v2342
    %v3632 = vunpack.c.h.b16 %v2342
    %v3633 = vunpack.c.l.b16 %v2343
    %v3634 = vunpack.c.h.b16 %v2343
    %v3635 = vunpack.c.l.b16 %v2344
    %v3636 = vunpack.c.h.b16 %v2344
    %v3637 = vunpack.c.l.b16 %v2345
    %v3638 = vunpack.c.l.b16 %v2346
    %v3639 = vunpack.c.h.b16 %v2346
    %v3640 = vunpack.c.l.b16 %v2347
    %v3641 = vunpack.c.h.b16 %v2347
    %v3642 = vunpack.c.l.b16 %v2348
    %v3643 = vunpack.c.h.b16 %v2348
    %v3644 = vunpack.c.l.b16 %v2349
    %v3645 = vunpack.c.l.b16 %v2350
    %v3646 = vunpack.c.h.b16 %v2350
    %v3647 = vunpack.c.l.b16 %v2351
    %v3648 = vunpack.c.h.b16 %v2351
    %v3649 = vunpack.c.l.b16 %v2352
    %v3650 = vunpack.c.h.b16 %v2352
    %v3651 = vunpack.c.l.b16 %v2353
    %v3652 = vunpack.c.l.b16 %v2354
    %v3653 = vunpack.c.h.b16 %v2354
    %v3654 = vunpack.c.l.b16 %v2355
    %v3655 = vunpack.c.h.b16 %v2355
    %v3656 = vunpack.c.l.b16 %v2356
    %v3657 = vunpack.c.h.b16 %v2356
    %v3658 = vunpack.c.l.b16 %v2357
    %v3659 = vunpack.c.l.b16 %v2358
    %v3660 = vunpack.c.h.b16 %v2358
    %v3661 = vunpack.c.l.b16 %v2359
    %v3662 = vunpack.c.h.b16 %v2359
    %v3663 = vunpack.c.l.b16 %v2360
    %v3664 = vunpack.c.h.b16 %v2360
    %v3665 = vunpack.c.l.b16 %v2361
    %v3666 = vunpack.c.l.b16 %v2362
    %v3667 = vunpack.c.h.b16 %v2362
    %v3668 = vunpack.c.l.b16 %v2363
    %v3669 = vunpack.c.h.b16 %v2363
    %v3670 = vunpack.c.l.b16 %v2364
    %v3671 = vunpack.c.h.b16 %v2364
    %v3672 = vunpack.c.l.b16 %v2365
    %v3673 = vunpack.c.l.b16 %v2366
    %v3674 = vunpack.c.h.b16 %v2366
    %v3675 = vunpack.c.l.b16 %v2367
    %v3676 = vunpack.c.h.b16 %v2367
    %v3677 = vunpack.c.l.b16 %v2368
    %v3678 = vunpack.c.h.b16 %v2368
    %v3679 = vunpack.c.l.b16 %v2369
    %v3680 = vunpack.c.l.b16 %v2370
    %v3681 = vunpack.c.h.b16 %v2370
    %v3682 = vunpack.c.l.b16 %v2371
    %v3683 = vunpack.c.h.b16 %v2371
    %v3684 = vunpack.c.l.b16 %v2372
    %v3685 = vunpack.c.h.b16 %v2372
    %v3686 = vunpack.c.l.b16 %v2373
    %v3687 = vunpack.c.l.b16 %v2374
    %v3688 = vunpack.c.h.b16 %v2374
    %v3689 = vunpack.c.l.b16 %v2375
    %v3690 = vunpack.c.h.b16 %v2375
    %v3691 = vunpack.c.l.b16 %v2376
    %v3692 = vunpack.c.h.b16 %v2376
    %v3693 = vunpack.c.l.b16 %v2377
    %v3694 = vunpack.c.l.b16 %v2378
    %v3695 = vunpack.c.h.b16 %v2378
    %v3696 = vunpack.c.l.b16 %v2379
    %v3697 = vunpack.c.h.b16 %v2379
    %v3698 = vunpack.c.l.b16 %v2380
    %v3699 = vunpack.c.h.b16 %v2380
    %v3700 = vunpack.c.l.b16 %v2381
    %v3701 = vunpack.c.l.b16 %v2382
    %v3702 = vunpack.c.h.b16 %v2382
    %v3703 = vunpack.c.l.b16 %v2383
    %v3704 = vunpack.c.h.b16 %v2383
    %v3705 = vunpack.c.l.b16 %v2384
    %v3706 = vunpack.c.h.b16 %v2384
    %v3707 = vunpack.c.l.b16 %v2385
    %v3708 = vunpack.c.l.b16 %v2386
    %v3709 = vunpack.c.h.b16 %v2386
    %v3710 = vunpack.c.l.b16 %v2387
    %v3711 = vunpack.c.h.b16 %v2387
    %v3712 = vunpack.c.l.b16 %v2388
    %v3713 = vunpack.c.h.b16 %v2388
    %v3714 = vunpack.c.l.b16 %v2389
    %v3715 = vunpack.c.l.b16 %v2390
    %v3716 = vunpack.c.h.b16 %v2390
    %v3717 = vunpack.c.l.b16 %v2391
    %v3718 = vunpack.c.h.b16 %v2391
    %v3719 = vunpack.c.l.b16 %v2392
    %v3720 = vunpack.c.h.b16 %v2392
    %v3721 = vunpack.c.l.b16 %v2393
    %v3722 = vunpack.c.l.b16 %v2394
    %v3723 = vunpack.c.h.b16 %v2394
    %v3724 = vunpack.c.l.b16 %v2395
    %v3725 = vunpack.c.h.b16 %v2395
    %v3726 = vunpack.c.l.b16 %v2396
    %v3727 = vunpack.c.h.b16 %v2396
    %v3728 = vunpack.c.l.b16 %v2397
    %v3729 = vunpack.c.l.b16 %v2398
    %v3730 = vunpack.c.h.b16 %v2398
    %v3731 = vunpack.c.l.b16 %v2399
    %v3732 = vunpack.c.h.b16 %v2399
    %v3733 = vunpack.c.l.b16 %v2400
    %v3734 = vunpack.c.h.b16 %v2400
    %v3735 = vunpack.c.l.b16 %v2401
    %v3736 = vunpack.c.l.b16 %v2402
    %v3737 = vunpack.c.h.b16 %v2402
    %v3738 = vunpack.c.l.b16 %v2403
    %v3739 = vunpack.c.h.b16 %v2403
    %v3740 = vunpack.c.l.b16 %v2404
    %v3741 = vunpack.c.h.b16 %v2404
    %v3742 = vunpack.c.l.b16 %v2405
    %v3743 = vunpack.c.l.b16 %v2406
    %v3744 = vunpack.c.h.b16 %v2406
    %v3745 = vunpack.c.l.b16 %v2407
    %v3746 = vunpack.c.h.b16 %v2407
    %v3747 = vunpack.c.l.b16 %v2408
    %v3748 = vunpack.c.h.b16 %v2408
    %v3749 = vunpack.c.l.b16 %v2409
    %v3750 = vunpack.c.l.b16 %v2410
    %v3751 = vunpack.c.h.b16 %v2410
    %v3752 = vunpack.c.l.b16 %v2411
    %v3753 = vunpack.c.h.b16 %v2411
    %v3754 = vunpack.c.l.b16 %v2412
    %v3755 = vunpack.c.h.b16 %v2412
    %v3756 = vunpack.c.l.b16 %v2413
    %v3757 = vunpack.c.l.b16 %v2414
    %v3758 = vunpack.c.h.b16 %v2414
    %v3759 = vunpack.c.l.b16 %v2415
    %v3760 = vunpack.c.h.b16 %v2415
    %v3761 = vunpack.c.l.b16 %v2416
    %v3762 = vunpack.c.h.b16 %v2416
    %v3763 = vunpack.c.l.b16 %v2417
    %v3764 = vunpack.c.l.b16 %v2418
    %v3765 = vunpack.c.h.b16 %v2418
    %v3766 = vunpack.c.l.b16 %v2419
    %v3767 = vunpack.c.h.b16 %v2419
    %v3768 = vunpack.c.l.b16 %v2420
    %v3769 = vunpack.c.h.b16 %v2420
    %v3770 = vunpack.c.l.b16 %v2421
    %v3771 = vunpack.c.l.b16 %v2422
    %v3772 = vunpack.c.h.b16 %v2422
    %v3773 = vunpack.c.l.b16 %v2423
    %v3774 = vunpack.c.h.b16 %v2423
    %v3775 = vunpack.c.l.b16 %v2424
    %v3776 = vunpack.c.h.b16 %v2424
    %v3777 = vunpack.c.l.b16 %v2425
    %v3778 = vunpack.c.l.b16 %v2426
    %v3779 = vunpack.c.h.b16 %v2426
    %v3780 = vunpack.c.l.b16 %v2427
    %v3781 = vunpack.c.h.b16 %v2427
    %v3782 = vunpack.c.l.b16 %v2428
    %v3783 = vunpack.c.h.b16 %v2428
    %v3784 = vunpack.c.l.b16 %v2429
    %v3785 = vunpack.c.l.b16 %v2430
    %v3786 = vunpack.c.h.b16 %v2430
    %v3787 = vunpack.c.l.b16 %v2431
    %v3788 = vunpack.c.h.b16 %v2431
    %v3789 = vunpack.c.l.b16 %v2432
    %v3790 = vunpack.c.h.b16 %v2432
    %v3791 = vunpack.c.l.b16 %v2433
    %v3792 = vunpack.c.l.b16 %v2434
    %v3793 = vunpack.c.h.b16 %v2434
    %v3794 = vunpack.c.l.b16 %v2435
    %v3795 = vunpack.c.h.b16 %v2435
    %v3796 = vunpack.c.l.b16 %v2436
    %v3797 = vunpack.c.h.b16 %v2436
    %v3798 = vunpack.c.l.b16 %v2437
    %v3799 = vunpack.c.l.b16 %v2438
    %v3800 = vunpack.c.h.b16 %v2438
    %v3801 = vunpack.c.l.b16 %v2439
    %v3802 = vunpack.c.h.b16 %v2439
    %v3803 = vunpack.c.l.b16 %v2440
    %v3804 = vunpack.c.h.b16 %v2440
    %v3805 = vunpack.c.l.b16 %v2441
    %v3806 = vunpack.c.l.b16 %v2442
    %v3807 = vunpack.c.h.b16 %v2442
    %v3808 = vunpack.c.l.b16 %v2443
    %v3809 = vunpack.c.h.b16 %v2443
    %v3810 = vunpack.c.l.b16 %v2444
    %v3811 = vunpack.c.h.b16 %v2444
    %v3812 = vunpack.c.l.b16 %v2445
    %v3813 = vunpack.c.l.b16 %v2446
    %v3814 = vunpack.c.h.b16 %v2446
    %v3815 = vunpack.c.l.b16 %v2447
    %v3816 = vunpack.c.h.b16 %v2447
    %v3817 = vunpack.c.l.b16 %v2448
    %v3818 = vunpack.c.h.b16 %v2448
    %v3819 = vunpack.c.l.b16 %v2449
    %v3820 = vunpack.c.l.b16 %v2450
    %v3821 = vunpack.c.h.b16 %v2450
    %v3822 = vunpack.c.l.b16 %v2451
    %v3823 = vunpack.c.h.b16 %v2451
    %v3824 = vunpack.c.l.b16 %v2452
    %v3825 = vunpack.c.h.b16 %v2452
    %v3826 = vunpack.c.l.b16 %v2453
    %v3827 = vunpack.c.l.b16 %v2454
    %v3828 = vunpack.c.h.b16 %v2454
    %v3829 = vunpack.c.l.b16 %v2455
    %v3830 = vunpack.c.h.b16 %v2455
    %v3831 = vunpack.c.l.b16 %v2456
    %v3832 = vunpack.c.h.b16 %v2456
    %v3833 = vunpack.c.l.b16 %v2457
    %v3834 = vunpack.c.l.b16 %v2458
    %v3835 = vunpack.c.h.b16 %v2458
    %v3836 = vunpack.c.l.b16 %v2459
    %v3837 = vunpack.c.h.b16 %v2459
    %v3838 = vunpack.c.l.b16 %v2460
    %v3839 = vunpack.c.h.b16 %v2460
    %v3840 = vunpack.c.l.b16 %v2461
    %v3841 = vunpack.c.l.b16 %v2462
    %v3842 = vunpack.c.h.b16 %v2462
    %v3843 = vunpack.c.l.b16 %v2463
    %v3844 = vunpack.c.h.b16 %v2463
    %v3845 = vunpack.c.l.b16 %v2464
    %v3846 = vunpack.c.h.b16 %v2464
    %v3847 = vunpack.c.l.b16 %v2465
    %v3848 = vunpack.c.l.b16 %v2466
    %v3849 = vunpack.c.h.b16 %v2466
    %v3850 = vunpack.c.l.b16 %v2467
    %v3851 = vunpack.c.h.b16 %v2467
    %v3852 = vunpack.c.l.b16 %v2468
    %v3853 = vunpack.c.h.b16 %v2468
    %v3854 = vunpack.c.l.b16 %v2469
    %v3855 = vunpack.c.l.b16 %v2470
    %v3856 = vunpack.c.h.b16 %v2470
    %v3857 = vunpack.c.l.b16 %v2471
    %v3858 = vunpack.c.h.b16 %v2471
    %v3859 = vunpack.c.l.b16 %v2472
    %v3860 = vunpack.c.h.b16 %v2472
    %v3861 = vunpack.c.l.b16 %v2473
    %v3862 = vunpack.c.l.b16 %v2474
    %v3863 = vunpack.c.h.b16 %v2474
    %v3864 = vunpack.c.l.b16 %v2475
    %v3865 = vunpack.c.h.b16 %v2475
    %v3866 = vunpack.c.l.b16 %v2476
    %v3867 = vunpack.c.h.b16 %v2476
    %v3868 = vunpack.c.l.b16 %v2477
    %v3869 = vunpack.c.l.b16 %v2478
    %v3870 = vunpack.c.h.b16 %v2478
    %v3871 = vunpack.c.l.b16 %v2479
    %v3872 = vunpack.c.h.b16 %v2479
    %v3873 = vunpack.c.l.b16 %v2480
    %v3874 = vunpack.c.h.b16 %v2480
    %v3875 = vunpack.c.l.b16 %v2481
    %v3876 = vunpack.c.l.b16 %v2482
    %v3877 = vunpack.c.h.b16 %v2482
    %v3878 = vunpack.c.l.b16 %v2483
    %v3879 = vunpack.c.h.b16 %v2483
    %v3880 = vunpack.c.l.b16 %v2484
    %v3881 = vunpack.c.h.b16 %v2484
    %v3882 = vunpack.c.l.b16 %v2485
    %v3883 = vunpack.c.l.b16 %v2486
    %v3884 = vunpack.c.h.b16 %v2486
    %v3885 = vunpack.c.l.b16 %v2487
    %v3886 = vunpack.c.h.b16 %v2487
    %v3887 = vunpack.c.l.b16 %v2488
    %v3888 = vunpack.c.h.b16 %v2488
    %v3889 = vunpack.c.l.b16 %v2489
    %v3890 = vunpack.c.l.b16 %v2490
    %v3891 = vunpack.c.h.b16 %v2490
    %v3892 = vunpack.c.l.b16 %v2491
    %v3893 = vunpack.c.h.b16 %v2491
    %v3894 = vunpack.c.l.b16 %v2492
    %v3895 = vunpack.c.h.b16 %v2492
    %v3896 = vunpack.c.l.b16 %v2493
    %v3897 = vunpack.c.l.b16 %v2494
    %v3898 = vunpack.c.h.b16 %v2494
    %v3899 = vunpack.c.l.b16 %v2495
    %v3900 = vunpack.c.h.b16 %v2495
    %v3901 = vunpack.c.l.b16 %v2496
    %v3902 = vunpack.c.h.b16 %v2496
    %v3903 = vunpack.c.l.b16 %v2497
    %v3904 = vunpack.c.l.b16 %v2498
    %v3905 = vunpack.c.h.b16 %v2498
    %v3906 = vunpack.c.l.b16 %v2499
    %v3907 = vunpack.c.h.b16 %v2499
    %v3908 = vunpack.c.l.b16 %v2500
    %v3909 = vunpack.c.h.b16 %v2500
    %v3910 = vunpack.c.l.b16 %v2501
    %v3911 = vunpack.c.l.b16 %v2502
    %v3912 = vunpack.c.h.b16 %v2502
    %v3913 = vunpack.c.l.b16 %v2503
    %v3914 = vunpack.c.h.b16 %v2503
    %v3915 = vunpack.c.l.b16 %v2504
    %v3916 = vunpack.c.h.b16 %v2504
    %v3917 = vunpack.c.l.b16 %v2505
    %v3918 = vunpack.c.l.b16 %v2506
    %v3919 = vunpack.c.h.b16 %v2506
    %v3920 = vunpack.c.l.b16 %v2507
    %v3921 = vunpack.c.h.b16 %v2507
    %v3922 = vunpack.c.l.b16 %v2508
    %v3923 = vunpack.c.h.b16 %v2508
    %v3924 = vunpack.c.l.b16 %v2509
    %v3925 = vunpack.c.l.b16 %v2510
    %v3926 = vunpack.c.h.b16 %v2510
    %v3927 = vunpack.c.l.b16 %v2511
    %v3928 = vunpack.c.h.b16 %v2511
    %v3929 = vunpack.c.l.b16 %v2512
    %v3930 = vunpack.c.h.b16 %v2512
    %v3931 = vunpack.c.l.b16 %v2513
    %v3932 = vunpack.c.l.b16 %v2514
    %v3933 = vunpack.c.h.b16 %v2514
    %v3934 = vunpack.c.l.b16 %v2515
    %v3935 = vunpack.c.h.b16 %v2515
    %v3936 = vunpack.c.l.b16 %v2516
    %v3937 = vunpack.c.h.b16 %v2516
    %v3938 = vunpack.c.l.b16 %v2517
    %v3939 = vunpack.c.l.b16 %v2518
    %v3940 = vunpack.c.h.b16 %v2518
    %v3941 = vunpack.c.l.b16 %v2519
    %v3942 = vunpack.c.h.b16 %v2519
    %v3943 = vunpack.c.l.b16 %v2520
    %v3944 = vunpack.c.h.b16 %v2520
    %v3945 = vunpack.c.l.b16 %v2521
    %v3946 = vunpack.c.l.b16 %v2522
    %v3947 = vunpack.c.h.b16 %v2522
    %v3948 = vunpack.c.l.b16 %v2523
    %v3949 = vunpack.c.h.b16 %v2523
    %v3950 = vunpack.c.l.b16 %v2524
    %v3951 = vunpack.c.h.b16 %v2524
    %v3952 = vunpack.c.l.b16 %v2525
    %v3953 = vunpack.c.l.b16 %v2526
    %v3954 = vunpack.c.h.b16 %v2526
    %v3955 = vunpack.c.l.b16 %v2527
    %v3956 = vunpack.c.h.b16 %v2527
    %v3957 = vunpack.c.l.b16 %v2528
    %v3958 = vunpack.c.h.b16 %v2528
    %v3959 = vunpack.c.l.b16 %v2529
    %v3960 = vunpack.c.l.b16 %v2530
    %v3961 = vunpack.c.h.b16 %v2530
    %v3962 = vunpack.c.l.b16 %v2531
    %v3963 = vunpack.c.h.b16 %v2531
    %v3964 = vunpack.c.l.b16 %v2532
    %v3965 = vunpack.c.h.b16 %v2532
    %v3966 = vunpack.c.l.b16 %v2533
    %v3967 = vunpack.c.l.b16 %v2534
    %v3968 = vunpack.c.h.b16 %v2534
    %v3969 = vunpack.c.l.b16 %v2535
    %v3970 = vunpack.c.h.b16 %v2535
    %v3971 = vunpack.c.l.b16 %v2536
    %v3972 = vunpack.c.h.b16 %v2536
    %v3973 = vunpack.c.l.b16 %v2537
    %v3974 = vunpack.c.l.b16 %v2538
    %v3975 = vunpack.c.h.b16 %v2538
    %v3976 = vunpack.c.l.b16 %v2539
    %v3977 = vunpack.c.h.b16 %v2539
    %v3978 = vunpack.c.l.b16 %v2540
    %v3979 = vunpack.c.h.b16 %v2540
    %v3980 = vunpack.c.l.b16 %v2541
    %v3981 = vunpack.c.l.b16 %v2542
    %v3982 = vunpack.c.h.b16 %v2542
    %v3983 = vunpack.c.l.b16 %v2543
    %v3984 = vunpack.c.h.b16 %v2543
    %v3985 = vunpack.c.l.b16 %v2544
    %v3986 = vunpack.c.h.b16 %v2544
    %v3987 = vunpack.c.l.b16 %v2545
    %v3988 = vunpack.c.l.b16 %v2546
    %v3989 = vunpack.c.h.b16 %v2546
    %v3990 = vunpack.c.l.b16 %v2547
    %v3991 = vunpack.c.h.b16 %v2547
    %v3992 = vunpack.c.l.b16 %v2548
    %v3993 = vunpack.c.h.b16 %v2548
    %v3994 = vunpack.c.l.b16 %v2549
    %v3995 = vpack.c.b16 %v3106, %v3099
    %v3996 = vpack.c.b16 %v3107, %v3100
    %v3997 = vpack.c.b16 %v3108, %v3101
    %v3998 = vpack.c.b16 %v3109, %v3102
    %v3999 = vpack.c.b16 %v3110, %v3103
    %v4000 = vpack.c.b16 %v3111, %v3104
    %v4001 = vpack.c.b16 %v3112, %v3105
    %v4002 = vpack.c.b16 %v3120, %v3113
    %v4003 = vpack.c.b16 %v3121, %v3114
    %v4004 = vpack.c.b16 %v3122, %v3115
    %v4005 = vpack.c.b16 %v3123, %v3116
    %v4006 = vpack.c.b16 %v3124, %v3117
    %v4007 = vpack.c.b16 %v3125, %v3118
    %v4008 = vpack.c.b16 %v3126, %v3119
    %v4009 = vpack.c.b16 %v3134, %v3127
    %v4010 = vpack.c.b16 %v3135, %v3128
    %v4011 = vpack.c.b16 %v3136, %v3129
    %v4012 = vpack.c.b16 %v3137, %v3130
    %v4013 = vpack.c.b16 %v3138, %v3131
    %v4014 = vpack.c.b16 %v3139, %v3132
    %v4015 = vpack.c.b16 %v3140, %v3133
    %v4016 = vpack.c.b16 %v3148, %v3141
    %v4017 = vpack.c.b16 %v3149, %v3142
    %v4018 = vpack.c.b16 %v3150, %v3143
    %v4019 = vpack.c.b16 %v3151, %v3144
    %v4020 = vpack.c.b16 %v3152, %v3145
    %v4021 = vpack.c.b16 %v3153, %v3146
    %v4022 = vpack.c.b16 %v3154, %v3147
    %v4023 = vpack.c.b16 %v3162, %v3155
    %v4024 = vpack.c.b16 %v3163, %v3156
    %v4025 = vpack.c.b16 %v3164, %v3157
    %v4026 = vpack.c.b16 %v3165, %v3158
    %v4027 = vpack.c.b16 %v3166, %v3159
    %v4028 = vpack.c.b16 %v3167, %v3160
    %v4029 = vpack.c.b16 %v3168, %v3161
    %v4030 = vpack.c.b16 %v3176, %v3169
    %v4031 = vpack.c.b16 %v3177, %v3170
    %v4032 = vpack.c.b16 %v3178, %v3171
    %v4033 = vpack.c.b16 %v3179, %v3172
    %v4034 = vpack.c.b16 %v3180, %v3173
    %v4035 = vpack.c.b16 %v3181, %v3174
    %v4036 = vpack.c.b16 %v3182, %v3175
    %v4037 = vpack.c.b16 %v3190, %v3183
    %v4038 = vpack.c.b16 %v3191, %v3184
    %v4039 = vpack.c.b16 %v3192, %v3185
    %v4040 = vpack.c.b16 %v3193, %v3186
    %v4041 = vpack.c.b16 %v3194, %v3187
    %v4042 = vpack.c.b16 %v3195, %v3188
    %v4043 = vpack.c.b16 %v3196, %v3189
    %v4044 = vpack.c.b16 %v3204, %v3197
    %v4045 = vpack.c.b16 %v3205, %v3198
    %v4046 = vpack.c.b16 %v3206, %v3199
    %v4047 = vpack.c.b16 %v3207, %v3200
    %v4048 = vpack.c.b16 %v3208, %v3201
    %v4049 = vpack.c.b16 %v3209, %v3202
    %v4050 = vpack.c.b16 %v3210, %v3203
    %v4051 = vpack.c.b16 %v3218, %v3211
    %v4052 = vpack.c.b16 %v3219, %v3212
    %v4053 = vpack.c.b16 %v3220, %v3213
    %v4054 = vpack.c.b16 %v3221, %v3214
    %v4055 = vpack.c.b16 %v3222, %v3215
    %v4056 = vpack.c.b16 %v3223, %v3216
    %v4057 = vpack.c.b16 %v3224, %v3217
    %v4058 = vpack.c.b16 %v3232, %v3225
    %v4059 = vpack.c.b16 %v3233, %v3226
    %v4060 = vpack.c.b16 %v3234, %v3227
    %v4061 = vpack.c.b16 %v3235, %v3228
    %v4062 = vpack.c.b16 %v3236, %v3229
    %v4063 = vpack.c.b16 %v3237, %v3230
    %v4064 = vpack.c.b16 %v3238, %v3231
    %v4065 = vpack.c.b16 %v3246, %v3239
    %v4066 = vpack.c.b16 %v3247, %v3240
    %v4067 = vpack.c.b16 %v3248, %v3241
    %v4068 = vpack.c.b16 %v3249, %v3242
    %v4069 = vpack.c.b16 %v3250, %v3243
    %v4070 = vpack.c.b16 %v3251, %v3244
    %v4071 = vpack.c.b16 %v3252, %v3245
    %v4072 = vpack.c.b16 %v3260, %v3253
    %v4073 = vpack.c.b16 %v3261, %v3254
    %v4074 = vpack.c.b16 %v3262, %v3255
    %v4075 = vpack.c.b16 %v3263, %v3256
    %v4076 = vpack.c.b16 %v3264, %v3257
    %v4077 = vpack.c.b16 %v3265, %v3258
    %v4078 = vpack.c.b16 %v3266, %v3259
    %v4079 = vpack.c.b16 %v3274, %v3267
    %v4080 = vpack.c.b16 %v3275, %v3268
    %v4081 = vpack.c.b16 %v3276, %v3269
    %v4082 = vpack.c.b16 %v3277, %v3270
    %v4083 = vpack.c.b16 %v3278, %v3271
    %v4084 = vpack.c.b16 %v3279, %v3272
    %v4085 = vpack.c.b16 %v3280, %v3273
    %v4086 = vpack.c.b16 %v3288, %v3281
    %v4087 = vpack.c.b16 %v3289, %v3282
    %v4088 = vpack.c.b16 %v3290, %v3283
    %v4089 = vpack.c.b16 %v3291, %v3284
    %v4090 = vpack.c.b16 %v3292, %v3285
    %v4091 = vpack.c.b16 %v3293, %v3286
    %v4092 = vpack.c.b16 %v3294, %v3287
    %v4093 = vpack.c.b16 %v3302, %v3295
    %v4094 = vpack.c.b16 %v3303, %v3296
    %v4095 = vpack.c.b16 %v3304, %v3297
    %v4096 = vpack.c.b16 %v3305, %v3298
    %v4097 = vpack.c.b16 %v3306, %v3299
    %v4098 = vpack.c.b16 %v3307, %v3300
    %v4099 = vpack.c.b16 %v3308, %v3301
    %v4100 = vpack.c.b16 %v3316, %v3309
    %v4101 = vpack.c.b16 %v3317, %v3310
    %v4102 = vpack.c.b16 %v3318, %v3311
    %v4103 = vpack.c.b16 %v3319, %v3312
    %v4104 = vpack.c.b16 %v3320, %v3313
    %v4105 = vpack.c.b16 %v3321, %v3314
    %v4106 = vpack.c.b16 %v3322, %v3315
    %v4107 = vpack.c.b16 %v3330, %v3323
    %v4108 = vpack.c.b16 %v3331, %v3324
    %v4109 = vpack.c.b16 %v3332, %v3325
    %v4110 = vpack.c.b16 %v3333, %v3326
    %v4111 = vpack.c.b16 %v3334, %v3327
    %v4112 = vpack.c.b16 %v3335, %v3328
    %v4113 = vpack.c.b16 %v3336, %v3329
    %v4114 = vpack.c.b16 %v3344, %v3337
    %v4115 = vpack.c.b16 %v3345, %v3338
    %v4116 = vpack.c.b16 %v3346, %v3339
    %v4117 = vpack.c.b16 %v3347, %v3340
    %v4118 = vpack.c.b16 %v3348, %v3341
    %v4119 = vpack.c.b16 %v3349, %v3342
    %v4120 = vpack.c.b16 %v3350, %v3343
    %v4121 = vpack.c.b16 %v3358, %v3351
    %v4122 = vpack.c.b16 %v3359, %v3352
    %v4123 = vpack.c.b16 %v3360, %v3353
    %v4124 = vpack.c.b16 %v3361, %v3354
    %v4125 = vpack.c.b16 %v3362, %v3355
    %v4126 = vpack.c.b16 %v3363, %v3356
    %v4127 = vpack.c.b16 %v3364, %v3357
    %v4128 = vpack.c.b16 %v3372, %v3365
    %v4129 = vpack.c.b16 %v3373, %v3366
    %v4130 = vpack.c.b16 %v3374, %v3367
    %v4131 = vpack.c.b16 %v3375, %v3368
    %v4132 = vpack.c.b16 %v3376, %v3369
    %v4133 = vpack.c.b16 %v3377, %v3370
    %v4134 = vpack.c.b16 %v3378, %v3371
    %v4135 = vpack.c.b16 %v3386, %v3379
    %v4136 = vpack.c.b16 %v3387, %v3380
    %v4137 = vpack.c.b16 %v3388, %v3381
    %v4138 = vpack.c.b16 %v3389, %v3382
    %v4139 = vpack.c.b16 %v3390, %v3383
    %v4140 = vpack.c.b16 %v3391, %v3384
    %v4141 = vpack.c.b16 %v3392, %v3385
    %v4142 = vpack.c.b16 %v3400, %v3393
    %v4143 = vpack.c.b16 %v3401, %v3394
    %v4144 = vpack.c.b16 %v3402, %v3395
    %v4145 = vpack.c.b16 %v3403, %v3396
    %v4146 = vpack.c.b16 %v3404, %v3397
    %v4147 = vpack.c.b16 %v3405, %v3398
    %v4148 = vpack.c.b16 %v3406, %v3399
    %v4149 = vpack.c.b16 %v3414, %v3407
    %v4150 = vpack.c.b16 %v3415, %v3408
    %v4151 = vpack.c.b16 %v3416, %v3409
    %v4152 = vpack.c.b16 %v3417, %v3410
    %v4153 = vpack.c.b16 %v3418, %v3411
    %v4154 = vpack.c.b16 %v3419, %v3412
    %v4155 = vpack.c.b16 %v3420, %v3413
    %v4156 = vpack.c.b16 %v3428, %v3421
    %v4157 = vpack.c.b16 %v3429, %v3422
    %v4158 = vpack.c.b16 %v3430, %v3423
    %v4159 = vpack.c.b16 %v3431, %v3424
    %v4160 = vpack.c.b16 %v3432, %v3425
    %v4161 = vpack.c.b16 %v3433, %v3426
    %v4162 = vpack.c.b16 %v3434, %v3427
    %v4163 = vpack.c.b16 %v3442, %v3435
    %v4164 = vpack.c.b16 %v3443, %v3436
    %v4165 = vpack.c.b16 %v3444, %v3437
    %v4166 = vpack.c.b16 %v3445, %v3438
    %v4167 = vpack.c.b16 %v3446, %v3439
    %v4168 = vpack.c.b16 %v3447, %v3440
    %v4169 = vpack.c.b16 %v3448, %v3441
    %v4170 = vpack.c.b16 %v3456, %v3449
    %v4171 = vpack.c.b16 %v3457, %v3450
    %v4172 = vpack.c.b16 %v3458, %v3451
    %v4173 = vpack.c.b16 %v3459, %v3452
    %v4174 = vpack.c.b16 %v3460, %v3453
    %v4175 = vpack.c.b16 %v3461, %v3454
    %v4176 = vpack.c.b16 %v3462, %v3455
    %v4177 = vpack.c.b16 %v3470, %v3463
    %v4178 = vpack.c.b16 %v3471, %v3464
    %v4179 = vpack.c.b16 %v3472, %v3465
    %v4180 = vpack.c.b16 %v3473, %v3466
    %v4181 = vpack.c.b16 %v3474, %v3467
    %v4182 = vpack.c.b16 %v3475, %v3468
    %v4183 = vpack.c.b16 %v3476, %v3469
    %v4184 = vpack.c.b16 %v3484, %v3477
    %v4185 = vpack.c.b16 %v3485, %v3478
    %v4186 = vpack.c.b16 %v3486, %v3479
    %v4187 = vpack.c.b16 %v3487, %v3480
    %v4188 = vpack.c.b16 %v3488, %v3481
    %v4189 = vpack.c.b16 %v3489, %v3482
    %v4190 = vpack.c.b16 %v3490, %v3483
    %v4191 = vpack.c.b16 %v3498, %v3491
    %v4192 = vpack.c.b16 %v3499, %v3492
    %v4193 = vpack.c.b16 %v3500, %v3493
    %v4194 = vpack.c.b16 %v3501, %v3494
    %v4195 = vpack.c.b16 %v3502, %v3495
    %v4196 = vpack.c.b16 %v3503, %v3496
    %v4197 = vpack.c.b16 %v3504, %v3497
    %v4198 = vpack.c.b16 %v3512, %v3505
    %v4199 = vpack.c.b16 %v3513, %v3506
    %v4200 = vpack.c.b16 %v3514, %v3507
    %v4201 = vpack.c.b16 %v3515, %v3508
    %v4202 = vpack.c.b16 %v3516, %v3509
    %v4203 = vpack.c.b16 %v3517, %v3510
    %v4204 = vpack.c.b16 %v3518, %v3511
    %v4205 = vpack.c.b16 %v3526, %v3519
    %v4206 = vpack.c.b16 %v3527, %v3520
    %v4207 = vpack.c.b16 %v3528, %v3521
    %v4208 = vpack.c.b16 %v3529, %v3522
    %v4209 = vpack.c.b16 %v3530, %v3523
    %v4210 = vpack.c.b16 %v3531, %v3524
    %v4211 = vpack.c.b16 %v3532, %v3525
    %v4212 = vpack.c.b16 %v3540, %v3533
    %v4213 = vpack.c.b16 %v3541, %v3534
    %v4214 = vpack.c.b16 %v3542, %v3535
    %v4215 = vpack.c.b16 %v3543, %v3536
    %v4216 = vpack.c.b16 %v3544, %v3537
    %v4217 = vpack.c.b16 %v3545, %v3538
    %v4218 = vpack.c.b16 %v3546, %v3539
    %v4219 = vpack.c.b16 %v3554, %v3547
    %v4220 = vpack.c.b16 %v3555, %v3548
    %v4221 = vpack.c.b16 %v3556, %v3549
    %v4222 = vpack.c.b16 %v3557, %v3550
    %v4223 = vpack.c.b16 %v3558, %v3551
    %v4224 = vpack.c.b16 %v3559, %v3552
    %v4225 = vpack.c.b16 %v3560, %v3553
    %v4226 = vpack.c.b16 %v3568, %v3561
    %v4227 = vpack.c.b16 %v3569, %v3562
    %v4228 = vpack.c.b16 %v3570, %v3563
    %v4229 = vpack.c.b16 %v3571, %v3564
    %v4230 = vpack.c.b16 %v3572, %v3565
    %v4231 = vpack.c.b16 %v3573, %v3566
    %v4232 = vpack.c.b16 %v3574, %v3567
    %v4233 = vpack.c.b16 %v3582, %v3575
    %v4234 = vpack.c.b16 %v3583, %v3576
    %v4235 = vpack.c.b16 %v3584, %v3577
    %v4236 = vpack.c.b16 %v3585, %v3578
    %v4237 = vpack.c.b16 %v3586, %v3579
    %v4238 = vpack.c.b16 %v3587, %v3580
    %v4239 = vpack.c.b16 %v3588, %v3581
    %v4240 = vpack.c.b16 %v3596, %v3589
    %v4241 = vpack.c.b16 %v3597, %v3590
    %v4242 = vpack.c.b16 %v3598, %v3591
    %v4243 = vpack.c.b16 %v3599, %v3592
    %v4244 = vpack.c.b16 %v3600, %v3593
    %v4245 = vpack.c.b16 %v3601, %v3594
    %v4246 = vpack.c.b16 %v3602, %v3595
    %v4247 = vpack.c.b16 %v3610, %v3603
    %v4248 = vpack.c.b16 %v3611, %v3604
    %v4249 = vpack.c.b16 %v3612, %v3605
    %v4250 = vpack.c.b16 %v3613, %v3606
    %v4251 = vpack.c.b16 %v3614, %v3607
    %v4252 = vpack.c.b16 %v3615, %v3608
    %v4253 = vpack.c.b16 %v3616, %v3609
    %v4254 = vpack.c.b16 %v3624, %v3617
    %v4255 = vpack.c.b16 %v3625, %v3618
    %v4256 = vpack.c.b16 %v3626, %v3619
    %v4257 = vpack.c.b16 %v3627, %v3620
    %v4258 = vpack.c.b16 %v3628, %v3621
    %v4259 = vpack.c.b16 %v3629, %v3622
    %v4260 = vpack.c.b16 %v3630, %v3623
    %v4261 = vpack.c.b16 %v3638, %v3631
    %v4262 = vpack.c.b16 %v3639, %v3632
    %v4263 = vpack.c.b16 %v3640, %v3633
    %v4264 = vpack.c.b16 %v3641, %v3634
    %v4265 = vpack.c.b16 %v3642, %v3635
    %v4266 = vpack.c.b16 %v3643, %v3636
    %v4267 = vpack.c.b16 %v3644, %v3637
    %v4268 = vpack.c.b16 %v3652, %v3645
    %v4269 = vpack.c.b16 %v3653, %v3646
    %v4270 = vpack.c.b16 %v3654, %v3647
    %v4271 = vpack.c.b16 %v3655, %v3648
    %v4272 = vpack.c.b16 %v3656, %v3649
    %v4273 = vpack.c.b16 %v3657, %v3650
    %v4274 = vpack.c.b16 %v3658, %v3651
    %v4275 = vpack.c.b16 %v3666, %v3659
    %v4276 = vpack.c.b16 %v3667, %v3660
    %v4277 = vpack.c.b16 %v3668, %v3661
    %v4278 = vpack.c.b16 %v3669, %v3662
    %v4279 = vpack.c.b16 %v3670, %v3663
    %v4280 = vpack.c.b16 %v3671, %v3664
    %v4281 = vpack.c.b16 %v3672, %v3665
    %v4282 = vpack.c.b16 %v3680, %v3673
    %v4283 = vpack.c.b16 %v3681, %v3674
    %v4284 = vpack.c.b16 %v3682, %v3675
    %v4285 = vpack.c.b16 %v3683, %v3676
    %v4286 = vpack.c.b16 %v3684, %v3677
    %v4287 = vpack.c.b16 %v3685, %v3678
    %v4288 = vpack.c.b16 %v3686, %v3679
    %v4289 = vpack.c.b16 %v3694, %v3687
    %v4290 = vpack.c.b16 %v3695, %v3688
    %v4291 = vpack.c.b16 %v3696, %v3689
    %v4292 = vpack.c.b16 %v3697, %v3690
    %v4293 = vpack.c.b16 %v3698, %v3691
    %v4294 = vpack.c.b16 %v3699, %v3692
    %v4295 = vpack.c.b16 %v3700, %v3693
    %v4296 = vpack.c.b16 %v3708, %v3701
    %v4297 = vpack.c.b16 %v3709, %v3702
    %v4298 = vpack.c.b16 %v3710, %v3703
    %v4299 = vpack.c.b16 %v3711, %v3704
    %v4300 = vpack.c.b16 %v3712, %v3705
    %v4301 = vpack.c.b16 %v3713, %v3706
    %v4302 = vpack.c.b16 %v3714, %v3707
    %v4303 = vpack.c.b16 %v3722, %v3715
    %v4304 = vpack.c.b16 %v3723, %v3716
    %v4305 = vpack.c.b16 %v3724, %v3717
    %v4306 = vpack.c.b16 %v3725, %v3718
    %v4307 = vpack.c.b16 %v3726, %v3719
    %v4308 = vpack.c.b16 %v3727, %v3720
    %v4309 = vpack.c.b16 %v3728, %v3721
    %v4310 = vpack.c.b16 %v3736, %v3729
    %v4311 = vpack.c.b16 %v3737, %v3730
    %v4312 = vpack.c.b16 %v3738, %v3731
    %v4313 = vpack.c.b16 %v3739, %v3732
    %v4314 = vpack.c.b16 %v3740, %v3733
    %v4315 = vpack.c.b16 %v3741, %v3734
    %v4316 = vpack.c.b16 %v3742, %v3735
    %v4317 = vpack.c.b16 %v3750, %v3743
    %v4318 = vpack.c.b16 %v3751, %v3744
    %v4319 = vpack.c.b16 %v3752, %v3745
    %v4320 = vpack.c.b16 %v3753, %v3746
    %v4321 = vpack.c.b16 %v3754, %v3747
    %v4322 = vpack.c.b16 %v3755, %v3748
    %v4323 = vpack.c.b16 %v3756, %v3749
    %v4324 = vpack.c.b16 %v3764, %v3757
    %v4325 = vpack.c.b16 %v3765, %v3758
    %v4326 = vpack.c.b16 %v3766, %v3759
    %v4327 = vpack.c.b16 %v3767, %v3760
    %v4328 = vpack.c.b16 %v3768, %v3761
    %v4329 = vpack.c.b16 %v3769, %v3762
    %v4330 = vpack.c.b16 %v3770, %v3763
    %v4331 = vpack.c.b16 %v3778, %v3771
    %v4332 = vpack.c.b16 %v3779, %v3772
    %v4333 = vpack.c.b16 %v3780, %v3773
    %v4334 = vpack.c.b16 %v3781, %v3774
    %v4335 = vpack.c.b16 %v3782, %v3775
    %v4336 = vpack.c.b16 %v3783, %v3776
    %v4337 = vpack.c.b16 %v3784, %v3777
    %v4338 = vpack.c.b16 %v3792, %v3785
    %v4339 = vpack.c.b16 %v3793, %v3786
    %v4340 = vpack.c.b16 %v3794, %v3787
    %v4341 = vpack.c.b16 %v3795, %v3788
    %v4342 = vpack.c.b16 %v3796, %v3789
    %v4343 = vpack.c.b16 %v3797, %v3790
    %v4344 = vpack.c.b16 %v3798, %v3791
    %v4345 = vpack.c.b16 %v3806, %v3799
    %v4346 = vpack.c.b16 %v3807, %v3800
    %v4347 = vpack.c.b16 %v3808, %v3801
    %v4348 = vpack.c.b16 %v3809, %v3802
    %v4349 = vpack.c.b16 %v3810, %v3803
    %v4350 = vpack.c.b16 %v3811, %v3804
    %v4351 = vpack.c.b16 %v3812, %v3805
    %v4352 = vpack.c.b16 %v3820, %v3813
    %v4353 = vpack.c.b16 %v3821, %v3814
    %v4354 = vpack.c.b16 %v3822, %v3815
    %v4355 = vpack.c.b16 %v3823, %v3816
    %v4356 = vpack.c.b16 %v3824, %v3817
    %v4357 = vpack.c.b16 %v3825, %v3818
    %v4358 = vpack.c.b16 %v3826, %v3819
    %v4359 = vpack.c.b16 %v3834, %v3827
    %v4360 = vpack.c.b16 %v3835, %v3828
    %v4361 = vpack.c.b16 %v3836, %v3829
    %v4362 = vpack.c.b16 %v3837, %v3830
    %v4363 = vpack.c.b16 %v3838, %v3831
    %v4364 = vpack.c.b16 %v3839, %v3832
    %v4365 = vpack.c.b16 %v3840, %v3833
    %v4366 = vpack.c.b16 %v3848, %v3841
    %v4367 = vpack.c.b16 %v3849, %v3842
    %v4368 = vpack.c.b16 %v3850, %v3843
    %v4369 = vpack.c.b16 %v3851, %v3844
    %v4370 = vpack.c.b16 %v3852, %v3845
    %v4371 = vpack.c.b16 %v3853, %v3846
    %v4372 = vpack.c.b16 %v3854, %v3847
    %v4373 = vpack.c.b16 %v3862, %v3855
    %v4374 = vpack.c.b16 %v3863, %v3856
    %v4375 = vpack.c.b16 %v3864, %v3857
    %v4376 = vpack.c.b16 %v3865, %v3858
    %v4377 = vpack.c.b16 %v3866, %v3859
    %v4378 = vpack.c.b16 %v3867, %v3860
    %v4379 = vpack.c.b16 %v3868, %v3861
    %v4380 = vpack.c.b16 %v3876, %v3869
    %v4381 = vpack.c.b16 %v3877, %v3870
    %v4382 = vpack.c.b16 %v3878, %v3871
    %v4383 = vpack.c.b16 %v3879, %v3872
    %v4384 = vpack.c.b16 %v3880, %v3873
    %v4385 = vpack.c.b16 %v3881, %v3874
    %v4386 = vpack.c.b16 %v3882, %v3875
    %v4387 = vpack.c.b16 %v3890, %v3883
    %v4388 = vpack.c.b16 %v3891, %v3884
    %v4389 = vpack.c.b16 %v3892, %v3885
    %v4390 = vpack.c.b16 %v3893, %v3886
    %v4391 = vpack.c.b16 %v3894, %v3887
    %v4392 = vpack.c.b16 %v3895, %v3888
    %v4393 = vpack.c.b16 %v3896, %v3889
    %v4394 = vpack.c.b16 %v3904, %v3897
    %v4395 = vpack.c.b16 %v3905, %v3898
    %v4396 = vpack.c.b16 %v3906, %v3899
    %v4397 = vpack.c.b16 %v3907, %v3900
    %v4398 = vpack.c.b16 %v3908, %v3901
    %v4399 = vpack.c.b16 %v3909, %v3902
    %v4400 = vpack.c.b16 %v3910, %v3903
    %v4401 = vpack.c.b16 %v3918, %v3911
    %v4402 = vpack.c.b16 %v3919, %v3912
    %v4403 = vpack.c.b16 %v3920, %v3913
    %v4404 = vpack.c.b16 %v3921, %v3914
    %v4405 = vpack.c.b16 %v3922, %v3915
    %v4406 = vpack.c.b16 %v3923, %v3916
    %v4407 = vpack.c.b16 %v3924, %v3917
    %v4408 = vpack.c.b16 %v3932, %v3925
    %v4409 = vpack.c.b16 %v3933, %v3926
    %v4410 = vpack.c.b16 %v3934, %v3927
    %v4411 = vpack.c.b16 %v3935, %v3928
    %v4412 = vpack.c.b16 %v3936, %v3929
    %v4413 = vpack.c.b16 %v3937, %v3930
    %v4414 = vpack.c.b16 %v3938, %v3931
    %v4415 = vpack.c.b16 %v3946, %v3939
    %v4416 = vpack.c.b16 %v3947, %v3940
    %v4417 = vpack.c.b16 %v3948, %v3941
    %v4418 = vpack.c.b16 %v3949, %v3942
    %v4419 = vpack.c.b16 %v3950, %v3943
    %v4420 = vpack.c.b16 %v3951, %v3944
    %v4421 = vpack.c.b16 %v3952, %v3945
    %v4422 = vpack.c.b16 %v3960, %v3953
    %v4423 = vpack.c.b16 %v3961, %v3954
    %v4424 = vpack.c.b16 %v3962, %v3955
    %v4425 = vpack.c.b16 %v3963, %v3956
    %v4426 = vpack.c.b16 %v3964, %v3957
    %v4427 = vpack.c.b16 %v3965, %v3958
    %v4428 = vpack.c.b16 %v3966, %v3959
    %v4429 = vpack.c.b16 %v3974, %v3967
    %v4430 = vpack.c.b16 %v3975, %v3968
    %v4431 = vpack.c.b16 %v3976, %v3969
    %v4432 = vpack.c.b16 %v3977, %v3970
    %v4433 = vpack.c.b16 %v3978, %v3971
    %v4434 = vpack.c.b16 %v3979, %v3972
    %v4435 = vpack.c.b16 %v3980, %v3973
    %v4436 = vpack.c.b16 %v3988, %v3981
    %v4437 = vpack.c.b16 %v3989, %v3982
    %v4438 = vpack.c.b16 %v3990, %v3983
    %v4439 = vpack.c.b16 %v3991, %v3984
    %v4440 = vpack.c.b16 %v3992, %v3985
    %v4441 = vpack.c.b16 %v3993, %v3986
    %v4442 = vpack.c.b16 %v3994, %v3987
    %4891 = vmatprep.subr.bf16.mxu0 %v3996
    %4892 = vmatpush1.bf16.msra.mxu0 %v3995
    %4893 = vmatprep.subr.bf16.mxu0 %v4003
    %4894 = vmatpush1.bf16.msra.mxu0 %v4002
    %4895 = vmatprep.subr.bf16.mxu0 %v4010
    %4896 = vmatpush1.bf16.msra.mxu0 %v4009
    %4897 = vmatprep.subr.bf16.mxu0 %v4017
    %4898 = vmatpush1.bf16.msra.mxu0 %v4016
    %4899 = vmatprep.subr.bf16.mxu0 %v4024
    %4900 = vmatpush1.bf16.msra.mxu0 %v4023
    %4901 = vmatprep.subr.bf16.mxu0 %v4031
    %4902 = vmatpush1.bf16.msra.mxu0 %v4030
    %4903 = vmatprep.subr.bf16.mxu0 %v4038
    %4904 = vmatpush1.bf16.msra.mxu0 %v4037
    %4905 = vmatprep.subr.bf16.mxu0 %v4045
    %4906 = vmatpush1.bf16.msra.mxu0 %v4044
    %4907 = vmatprep.subr.bf16.mxu0 %v4052
    %4908 = vmatpush1.bf16.msra.mxu0 %v4051
    %4909 = vmatprep.subr.bf16.mxu0 %v4059
    %4910 = vmatpush1.bf16.msra.mxu0 %v4058
    %4911 = vmatprep.subr.bf16.mxu0 %v4066
    %4912 = vmatpush1.bf16.msra.mxu0 %v4065
    %4913 = vmatprep.subr.bf16.mxu0 %v4073
    %4914 = vmatpush1.bf16.msra.mxu0 %v4072
    %4915 = vmatprep.subr.bf16.mxu0 %v4080
    %4916 = vmatpush1.bf16.msra.mxu0 %v4079
    %4917 = vmatprep.subr.bf16.mxu0 %v4087
    %4918 = vmatpush1.bf16.msra.mxu0 %v4086
    %4919 = vmatprep.subr.bf16.mxu0 %v4094
    %4920 = vmatpush1.bf16.msra.mxu0 %v4093
    %4921 = vmatprep.subr.bf16.mxu0 %v4101
    %4922 = vmatpush1.bf16.msra.mxu0 %v4100
    %4923 = vmatprep.mubr.bf16.mxu0 %v2031
    %4924 = vmatmul.mubr.bf16.gmra.mrb[0].mxu0 %v2030
    %v4925 = vpop.f32.mrb[0].mxu0
    %v4926 = vadd.f32 %v2555, %v4925
    %v4927 = vpop.f32.mrb[0].mxu0
    %v4928 = vadd.f32 %v2559, %v4927
    %v4929 = vpop.f32.mrb[0].mxu0
    %v4930 = vpop.f32.mrb[0].mxu0
    %4931 = vdwg.mxu0
    %4932 = vmatprep.subr.bf16.mxu0 %v4108
    %4933 = vmatpush1.bf16.msra.mxu0 %v4107
    %4934 = vmatprep.subr.bf16.mxu0 %v4115
    %4935 = vmatpush1.bf16.msra.mxu0 %v4114
    %4936 = vmatprep.subr.bf16.mxu0 %v4122
    %4937 = vmatpush1.bf16.msra.mxu0 %v4121
    %4938 = vmatprep.subr.bf16.mxu0 %v4129
    %4939 = vmatpush1.bf16.msra.mxu0 %v4128
    %4940 = vmatprep.subr.bf16.mxu0 %v4136
    %4941 = vmatpush1.bf16.msra.mxu0 %v4135
    %4942 = vmatprep.subr.bf16.mxu0 %v4143
    %4943 = vmatpush1.bf16.msra.mxu0 %v4142
    %4944 = vmatprep.subr.bf16.mxu0 %v4150
    %4945 = vmatpush1.bf16.msra.mxu0 %v4149
    %4946 = vmatprep.subr.bf16.mxu0 %v4157
    %4947 = vmatpush1.bf16.msra.mxu0 %v4156
    %4948 = vmatprep.subr.bf16.mxu0 %v4164
    %4949 = vmatpush1.bf16.msra.mxu0 %v4163
    %4950 = vmatprep.subr.bf16.mxu0 %v4171
    %4951 = vmatpush1.bf16.msra.mxu0 %v4170
    %4952 = vmatprep.subr.bf16.mxu0 %v4178
    %4953 = vmatpush1.bf16.msra.mxu0 %v4177
    %4954 = vmatprep.subr.bf16.mxu0 %v4185
    %4955 = vmatpush1.bf16.msra.mxu0 %v4184
    %4956 = vmatprep.subr.bf16.mxu0 %v4192
    %4957 = vmatpush1.bf16.msra.mxu0 %v4191
    %4958 = vmatprep.subr.bf16.mxu0 %v4199
    %4959 = vmatpush1.bf16.msra.mxu0 %v4198
    %4960 = vmatprep.subr.bf16.mxu0 %v4206
    %4961 = vmatpush1.bf16.msra.mxu0 %v4205
    %4962 = vmatprep.subr.bf16.mxu0 %v4213
    %4963 = vmatpush1.bf16.msra.mxu0 %v4212
    %4964 = vmatprep.mubr.bf16.mxu0 %v2033
    %4965 = vmatmul.mubr.bf16.gmra.mrb[0].mxu0 %v2032
    %v4966 = vpop.f32.mrb[0].mxu0
    %v4967 = vadd.f32 %v4926, %v4966
    %v4968 = vpop.f32.mrb[0].mxu0
    %v4969 = vadd.f32 %v4928, %v4968
    %v4970 = vpop.f32.mrb[0].mxu0
    %v4971 = vpop.f32.mrb[0].mxu0
    %4972 = vdwg.mxu0
    %4973 = vmatprep.subr.bf16.mxu0 %v4220
    %4974 = vmatpush1.bf16.msra.mxu0 %v4219
    %4975 = vmatprep.subr.bf16.mxu0 %v4227
    %4976 = vmatpush1.bf16.msra.mxu0 %v4226
    %4977 = vmatprep.subr.bf16.mxu0 %v4234
    %4978 = vmatpush1.bf16.msra.mxu0 %v4233
    %4979 = vmatprep.subr.bf16.mxu0 %v4241
    %4980 = vmatpush1.bf16.msra.mxu0 %v4240
    %4981 = vmatprep.subr.bf16.mxu0 %v4248
    %4982 = vmatpush1.bf16.msra.mxu0 %v4247
    %4983 = vmatprep.subr.bf16.mxu0 %v4255
    %4984 = vmatpush1.bf16.msra.mxu0 %v4254
    %4985 = vmatprep.subr.bf16.mxu0 %v4262
    %4986 = vmatpush1.bf16.msra.mxu0 %v4261
    %4987 = vmatprep.subr.bf16.mxu0 %v4269
    %4988 = vmatpush1.bf16.msra.mxu0 %v4268
    %4989 = vmatprep.subr.bf16.mxu0 %v4276
    %4990 = vmatpush1.bf16.msra.mxu0 %v4275
    %4991 = vmatprep.subr.bf16.mxu0 %v4283
    %4992 = vmatpush1.bf16.msra.mxu0 %v4282
    %4993 = vmatprep.subr.bf16.mxu0 %v4290
    %4994 = vmatpush1.bf16.msra.mxu0 %v4289
    %4995 = vmatprep.subr.bf16.mxu0 %v4297
    %4996 = vmatpush1.bf16.msra.mxu0 %v4296
    %4997 = vmatprep.subr.bf16.mxu0 %v4304
    %4998 = vmatpush1.bf16.msra.mxu0 %v4303
    %4999 = vmatprep.subr.bf16.mxu0 %v4311
    %5000 = vmatpush1.bf16.msra.mxu0 %v4310
    %5001 = vmatprep.subr.bf16.mxu0 %v4318
    %5002 = vmatpush1.bf16.msra.mxu0 %v4317
    %5003 = vmatprep.subr.bf16.mxu0 %v4325
    %5004 = vmatpush1.bf16.msra.mxu0 %v4324
    %5005 = vmatprep.mubr.bf16.mxu0 %v2035
    %5006 = vmatmul.mubr.bf16.gmra.mrb[0].mxu0 %v2034
    %v5007 = vpop.f32.mrb[0].mxu0
    %v5008 = vadd.f32 %v4967, %v5007
    %v5009 = vpop.f32.mrb[0].mxu0
    %v5010 = vadd.f32 %v4969, %v5009
    %v5011 = vpop.f32.mrb[0].mxu0
    %v5012 = vpop.f32.mrb[0].mxu0
    %5013 = vdwg.mxu0
    %5014 = vmatprep.subr.bf16.mxu0 %v4332
    %5015 = vmatpush1.bf16.msra.mxu0 %v4331
    %5016 = vmatprep.subr.bf16.mxu0 %v4339
    %5017 = vmatpush1.bf16.msra.mxu0 %v4338
    %5018 = vmatprep.subr.bf16.mxu0 %v4346
    %5019 = vmatpush1.bf16.msra.mxu0 %v4345
    %5020 = vmatprep.subr.bf16.mxu0 %v4353
    %5021 = vmatpush1.bf16.msra.mxu0 %v4352
    %5022 = vmatprep.subr.bf16.mxu0 %v4360
    %5023 = vmatpush1.bf16.msra.mxu0 %v4359
    %5024 = vmatprep.subr.bf16.mxu0 %v4367
    %5025 = vmatpush1.bf16.msra.mxu0 %v4366
    %5026 = vmatprep.subr.bf16.mxu0 %v4374
    %5027 = vmatpush1.bf16.msra.mxu0 %v4373
    %5028 = vmatprep.subr.bf16.mxu0 %v4381
    %5029 = vmatpush1.bf16.msra.mxu0 %v4380
    %5030 = vmatprep.subr.bf16.mxu0 %v4388
    %5031 = vmatpush1.bf16.msra.mxu0 %v4387
    %5032 = vmatprep.subr.bf16.mxu0 %v4395
    %5033 = vmatpush1.bf16.msra.mxu0 %v4394
    %5034 = vmatprep.subr.bf16.mxu0 %v4402
    %5035 = vmatpush1.bf16.msra.mxu0 %v4401
    %5036 = vmatprep.subr.bf16.mxu0 %v4409
    %5037 = vmatpush1.bf16.msra.mxu0 %v4408
    %5038 = vmatprep.subr.bf16.mxu0 %v4416
    %5039 = vmatpush1.bf16.msra.mxu0 %v4415
    %5040 = vmatprep.subr.bf16.mxu0 %v4423
    %5041 = vmatpush1.bf16.msra.mxu0 %v4422
    %5042 = vmatprep.subr.bf16.mxu0 %v4430
    %5043 = vmatpush1.bf16.msra.mxu0 %v4429
    %5044 = vmatprep.subr.bf16.mxu0 %v4437
    %5045 = vmatpush1.bf16.msra.mxu0 %v4436
    %5046 = vmatprep.mubr.bf16.mxu0 %v2037
    %5047 = vmatmul.mubr.bf16.gmra.mrb[0].mxu0 %v2036
    %v5048 = vpop.f32.mrb[0].mxu0
    %v5049 = vadd.f32 %v5008, %v5048
    %v5050 = vpop.f32.mrb[0].mxu0
    %v5051 = vadd.f32 %v5010, %v5050
    %v5052 = vpop.f32.mrb[0].mxu0
    %v5053 = vpop.f32.mrb[0].mxu0
    %5054 = vdwg.mxu0
    %5055 = vmatprep.subr.bf16.mxu0 %v3998
    %5056 = vmatpush1.bf16.msra.mxu0 %v3997
    %5057 = vmatprep.subr.bf16.mxu0 %v4005
    %5058 = vmatpush1.bf16.msra.mxu0 %v4004
    %5059 = vmatprep.subr.bf16.mxu0 %v4012
    %5060 = vmatpush1.bf16.msra.mxu0 %v4011
    %5061 = vmatprep.subr.bf16.mxu0 %v4019
    %5062 = vmatpush1.bf16.msra.mxu0 %v4018
    %5063 = vmatprep.subr.bf16.mxu0 %v4026
    %5064 = vmatpush1.bf16.msra.mxu0 %v4025
    %5065 = vmatprep.subr.bf16.mxu0 %v4033
    %5066 = vmatpush1.bf16.msra.mxu0 %v4032
    %5067 = vmatprep.subr.bf16.mxu0 %v4040
    %5068 = vmatpush1.bf16.msra.mxu0 %v4039
    %5069 = vmatprep.subr.bf16.mxu0 %v4047
    %5070 = vmatpush1.bf16.msra.mxu0 %v4046
    %5071 = vmatprep.subr.bf16.mxu0 %v4054
    %5072 = vmatpush1.bf16.msra.mxu0 %v4053
    %5073 = vmatprep.subr.bf16.mxu0 %v4061
    %5074 = vmatpush1.bf16.msra.mxu0 %v4060
    %5075 = vmatprep.subr.bf16.mxu0 %v4068
    %5076 = vmatpush1.bf16.msra.mxu0 %v4067
    %5077 = vmatprep.subr.bf16.mxu0 %v4075
    %5078 = vmatpush1.bf16.msra.mxu0 %v4074
    %5079 = vmatprep.subr.bf16.mxu0 %v4082
    %5080 = vmatpush1.bf16.msra.mxu0 %v4081
    %5081 = vmatprep.subr.bf16.mxu0 %v4089
    %5082 = vmatpush1.bf16.msra.mxu0 %v4088
    %5083 = vmatprep.subr.bf16.mxu0 %v4096
    %5084 = vmatpush1.bf16.msra.mxu0 %v4095
    %5085 = vmatprep.subr.bf16.mxu0 %v4103
    %5086 = vmatpush1.bf16.msra.mxu0 %v4102
    %5087 = vmatprep.mubr.bf16.mxu0 %v2031
    %5088 = vmatmul.mubr.bf16.gmra.mrb[0].mxu0 %v2030
    %v5089 = vpop.f32.mrb[0].mxu0
    %v5090 = vadd.f32 %v2563, %v5089
    %v5091 = vpop.f32.mrb[0].mxu0
    %v5092 = vadd.f32 %v2567, %v5091
    %v5093 = vpop.f32.mrb[0].mxu0
    %v5094 = vpop.f32.mrb[0].mxu0
    %5095 = vdwg.mxu0
    %5096 = vmatprep.subr.bf16.mxu0 %v4110
    %5097 = vmatpush1.bf16.msra.mxu0 %v4109
    %5098 = vmatprep.subr.bf16.mxu0 %v4117
    %5099 = vmatpush1.bf16.msra.mxu0 %v4116
    %5100 = vmatprep.subr.bf16.mxu0 %v4124
    %5101 = vmatpush1.bf16.msra.mxu0 %v4123
    %5102 = vmatprep.subr.bf16.mxu0 %v4131
    %5103 = vmatpush1.bf16.msra.mxu0 %v4130
    %5104 = vmatprep.subr.bf16.mxu0 %v4138
    %5105 = vmatpush1.bf16.msra.mxu0 %v4137
    %5106 = vmatprep.subr.bf16.mxu0 %v4145
    %5107 = vmatpush1.bf16.msra.mxu0 %v4144
    %5108 = vmatprep.subr.bf16.mxu0 %v4152
    %5109 = vmatpush1.bf16.msra.mxu0 %v4151
    %5110 = vmatprep.subr.bf16.mxu0 %v4159
    %5111 = vmatpush1.bf16.msra.mxu0 %v4158
    %5112 = vmatprep.subr.bf16.mxu0 %v4166
    %5113 = vmatpush1.bf16.msra.mxu0 %v4165
    %5114 = vmatprep.subr.bf16.mxu0 %v4173
    %5115 = vmatpush1.bf16.msra.mxu0 %v4172
    %5116 = vmatprep.subr.bf16.mxu0 %v4180
    %5117 = vmatpush1.bf16.msra.mxu0 %v4179
    %5118 = vmatprep.subr.bf16.mxu0 %v4187
    %5119 = vmatpush1.bf16.msra.mxu0 %v4186
    %5120 = vmatprep.subr.bf16.mxu0 %v4194
    %5121 = vmatpush1.bf16.msra.mxu0 %v4193
    %5122 = vmatprep.subr.bf16.mxu0 %v4201
    %5123 = vmatpush1.bf16.msra.mxu0 %v4200
    %5124 = vmatprep.subr.bf16.mxu0 %v4208
    %5125 = vmatpush1.bf16.msra.mxu0 %v4207
    %5126 = vmatprep.subr.bf16.mxu0 %v4215
    %5127 = vmatpush1.bf16.msra.mxu0 %v4214
    %5128 = vmatprep.mubr.bf16.mxu0 %v2033
    %5129 = vmatmul.mubr.bf16.gmra.mrb[0].mxu0 %v2032
    %v5130 = vpop.f32.mrb[0].mxu0
    %v5131 = vadd.f32 %v5090, %v5130
    %v5132 = vpop.f32.mrb[0].mxu0
    %v5133 = vadd.f32 %v5092, %v5132
    %v5134 = vpop.f32.mrb[0].mxu0
    %v5135 = vpop.f32.mrb[0].mxu0
    %5136 = vdwg.mxu0
    %5137 = vmatprep.subr.bf16.mxu0 %v4222
    %5138 = vmatpush1.bf16.msra.mxu0 %v4221
    %5139 = vmatprep.subr.bf16.mxu0 %v4229
    %5140 = vmatpush1.bf16.msra.mxu0 %v4228
    %5141 = vmatprep.subr.bf16.mxu0 %v4236
    %5142 = vmatpush1.bf16.msra.mxu0 %v4235
    %5143 = vmatprep.subr.bf16.mxu0 %v4243
    %5144 = vmatpush1.bf16.msra.mxu0 %v4242
    %5145 = vmatprep.subr.bf16.mxu0 %v4250
    %5146 = vmatpush1.bf16.msra.mxu0 %v4249
    %5147 = vmatprep.subr.bf16.mxu0 %v4257
    %5148 = vmatpush1.bf16.msra.mxu0 %v4256
    %5149 = vmatprep.subr.bf16.mxu0 %v4264
    %5150 = vmatpush1.bf16.msra.mxu0 %v4263
    %5151 = vmatprep.subr.bf16.mxu0 %v4271
    %5152 = vmatpush1.bf16.msra.mxu0 %v4270
    %5153 = vmatprep.subr.bf16.mxu0 %v4278
    %5154 = vmatpush1.bf16.msra.mxu0 %v4277
    %5155 = vmatprep.subr.bf16.mxu0 %v4285
    %5156 = vmatpush1.bf16.msra.mxu0 %v4284
    %5157 = vmatprep.subr.bf16.mxu0 %v4292
    %5158 = vmatpush1.bf16.msra.mxu0 %v4291
    %5159 = vmatprep.subr.bf16.mxu0 %v4299
    %5160 = vmatpush1.bf16.msra.mxu0 %v4298
    %5161 = vmatprep.subr.bf16.mxu0 %v4306
    %5162 = vmatpush1.bf16.msra.mxu0 %v4305
    %5163 = vmatprep.subr.bf16.mxu0 %v4313
    %5164 = vmatpush1.bf16.msra.mxu0 %v4312
    %5165 = vmatprep.subr.bf16.mxu0 %v4320
    %5166 = vmatpush1.bf16.msra.mxu0 %v4319
    %5167 = vmatprep.subr.bf16.mxu0 %v4327
    %5168 = vmatpush1.bf16.msra.mxu0 %v4326
    %5169 = vmatprep.mubr.bf16.mxu0 %v2035
    %5170 = vmatmul.mubr.bf16.gmra.mrb[0].mxu0 %v2034
    %v5171 = vpop.f32.mrb[0].mxu0
    %v5172 = vadd.f32 %v5131, %v5171
    %v5173 = vpop.f32.mrb[0].mxu0
    %v5174 = vadd.f32 %v5133, %v5173
    %v5175 = vpop.f32.mrb[0].mxu0
    %v5176 = vpop.f32.mrb[0].mxu0
    %5177 = vdwg.mxu0
    %5178 = vmatprep.subr.bf16.mxu0 %v4334
    %5179 = vmatpush1.bf16.msra.mxu0 %v4333
    %5180 = vmatprep.subr.bf16.mxu0 %v4341
    %5181 = vmatpush1.bf16.msra.mxu0 %v4340
    %5182 = vmatprep.subr.bf16.mxu0 %v4348
    %5183 = vmatpush1.bf16.msra.mxu0 %v4347
    %5184 = vmatprep.subr.bf16.mxu0 %v4355
    %5185 = vmatpush1.bf16.msra.mxu0 %v4354
    %5186 = vmatprep.subr.bf16.mxu0 %v4362
    %5187 = vmatpush1.bf16.msra.mxu0 %v4361
    %5188 = vmatprep.subr.bf16.mxu0 %v4369
    %5189 = vmatpush1.bf16.msra.mxu0 %v4368
    %5190 = vmatprep.subr.bf16.mxu0 %v4376
    %5191 = vmatpush1.bf16.msra.mxu0 %v4375
    %5192 = vmatprep.subr.bf16.mxu0 %v4383
    %5193 = vmatpush1.bf16.msra.mxu0 %v4382
    %5194 = vmatprep.subr.bf16.mxu0 %v4390
    %5195 = vmatpush1.bf16.msra.mxu0 %v4389
    %5196 = vmatprep.subr.bf16.mxu0 %v4397
    %5197 = vmatpush1.bf16.msra.mxu0 %v4396
    %5198 = vmatprep.subr.bf16.mxu0 %v4404
    %5199 = vmatpush1.bf16.msra.mxu0 %v4403
    %5200 = vmatprep.subr.bf16.mxu0 %v4411
    %5201 = vmatpush1.bf16.msra.mxu0 %v4410
    %5202 = vmatprep.subr.bf16.mxu0 %v4418
    %5203 = vmatpush1.bf16.msra.mxu0 %v4417
    %5204 = vmatprep.subr.bf16.mxu0 %v4425
    %5205 = vmatpush1.bf16.msra.mxu0 %v4424
    %5206 = vmatprep.subr.bf16.mxu0 %v4432
    %5207 = vmatpush1.bf16.msra.mxu0 %v4431
    %5208 = vmatprep.subr.bf16.mxu0 %v4439
    %5209 = vmatpush1.bf16.msra.mxu0 %v4438
    %5210 = vmatprep.mubr.bf16.mxu0 %v2037
    %5211 = vmatmul.mubr.bf16.gmra.mrb[0].mxu0 %v2036
    %v5212 = vpop.f32.mrb[0].mxu0
    %v5213 = vadd.f32 %v5172, %v5212
    %v5214 = vpop.f32.mrb[0].mxu0
    %v5215 = vadd.f32 %v5174, %v5214
    %v5216 = vpop.f32.mrb[0].mxu0
    %v5217 = vpop.f32.mrb[0].mxu0
    %5218 = vdwg.mxu0
    %5219 = vmatprep.subr.bf16.mxu0 %v4000
    %5220 = vmatpush1.bf16.msra.mxu0 %v3999
    %5221 = vmatprep.subr.bf16.mxu0 %v4007
    %5222 = vmatpush1.bf16.msra.mxu0 %v4006
    %5223 = vmatprep.subr.bf16.mxu0 %v4014
    %5224 = vmatpush1.bf16.msra.mxu0 %v4013
    %5225 = vmatprep.subr.bf16.mxu0 %v4021
    %5226 = vmatpush1.bf16.msra.mxu0 %v4020
    %5227 = vmatprep.subr.bf16.mxu0 %v4028
    %5228 = vmatpush1.bf16.msra.mxu0 %v4027
    %5229 = vmatprep.subr.bf16.mxu0 %v4035
    %5230 = vmatpush1.bf16.msra.mxu0 %v4034
    %5231 = vmatprep.subr.bf16.mxu0 %v4042
    %5232 = vmatpush1.bf16.msra.mxu0 %v4041
    %5233 = vmatprep.subr.bf16.mxu0 %v4049
    %5234 = vmatpush1.bf16.msra.mxu0 %v4048
    %5235 = vmatprep.subr.bf16.mxu0 %v4056
    %5236 = vmatpush1.bf16.msra.mxu0 %v4055
    %5237 = vmatprep.subr.bf16.mxu0 %v4063
    %5238 = vmatpush1.bf16.msra.mxu0 %v4062
    %5239 = vmatprep.subr.bf16.mxu0 %v4070
    %5240 = vmatpush1.bf16.msra.mxu0 %v4069
    %5241 = vmatprep.subr.bf16.mxu0 %v4077
    %5242 = vmatpush1.bf16.msra.mxu0 %v4076
    %5243 = vmatprep.subr.bf16.mxu0 %v4084
    %5244 = vmatpush1.bf16.msra.mxu0 %v4083
    %5245 = vmatprep.subr.bf16.mxu0 %v4091
    %5246 = vmatpush1.bf16.msra.mxu0 %v4090
    %5247 = vmatprep.subr.bf16.mxu0 %v4098
    %5248 = vmatpush1.bf16.msra.mxu0 %v4097
    %5249 = vmatprep.subr.bf16.mxu0 %v4105
    %5250 = vmatpush1.bf16.msra.mxu0 %v4104
    %5251 = vmatprep.mubr.bf16.mxu0 %v2031
    %5252 = vmatmul.mubr.bf16.gmra.mrb[0].mxu0 %v2030
    %v5253 = vpop.f32.mrb[0].mxu0
    %v5254 = vadd.f32 %v2571, %v5253
    %v5255 = vpop.f32.mrb[0].mxu0
    %v5256 = vadd.f32 %v2575, %v5255
    %v5257 = vpop.f32.mrb[0].mxu0
    %v5258 = vpop.f32.mrb[0].mxu0
    %5259 = vdwg.mxu0
    %5260 = vmatprep.subr.bf16.mxu0 %v4112
    %5261 = vmatpush1.bf16.msra.mxu0 %v4111
    %5262 = vmatprep.subr.bf16.mxu0 %v4119
    %5263 = vmatpush1.bf16.msra.mxu0 %v4118
    %5264 = vmatprep.subr.bf16.mxu0 %v4126
    %5265 = vmatpush1.bf16.msra.mxu0 %v4125
    %5266 = vmatprep.subr.bf16.mxu0 %v4133
    %5267 = vmatpush1.bf16.msra.mxu0 %v4132
    %5268 = vmatprep.subr.bf16.mxu0 %v4140
    %5269 = vmatpush1.bf16.msra.mxu0 %v4139
    %5270 = vmatprep.subr.bf16.mxu0 %v4147
    %5271 = vmatpush1.bf16.msra.mxu0 %v4146
    %5272 = vmatprep.subr.bf16.mxu0 %v4154
    %5273 = vmatpush1.bf16.msra.mxu0 %v4153
    %5274 = vmatprep.subr.bf16.mxu0 %v4161
    %5275 = vmatpush1.bf16.msra.mxu0 %v4160
    %5276 = vmatprep.subr.bf16.mxu0 %v4168
    %5277 = vmatpush1.bf16.msra.mxu0 %v4167
    %5278 = vmatprep.subr.bf16.mxu0 %v4175
    %5279 = vmatpush1.bf16.msra.mxu0 %v4174
    %5280 = vmatprep.subr.bf16.mxu0 %v4182
    %5281 = vmatpush1.bf16.msra.mxu0 %v4181
    %5282 = vmatprep.subr.bf16.mxu0 %v4189
    %5283 = vmatpush1.bf16.msra.mxu0 %v4188
    %5284 = vmatprep.subr.bf16.mxu0 %v4196
    %5285 = vmatpush1.bf16.msra.mxu0 %v4195
    %5286 = vmatprep.subr.bf16.mxu0 %v4203
    %5287 = vmatpush1.bf16.msra.mxu0 %v4202
    %5288 = vmatprep.subr.bf16.mxu0 %v4210
    %5289 = vmatpush1.bf16.msra.mxu0 %v4209
    %5290 = vmatprep.subr.bf16.mxu0 %v4217
    %5291 = vmatpush1.bf16.msra.mxu0 %v4216
    %5292 = vmatprep.mubr.bf16.mxu0 %v2033
    %5293 = vmatmul.mubr.bf16.gmra.mrb[0].mxu0 %v2032
    %v5294 = vpop.f32.mrb[0].mxu0
    %v5295 = vadd.f32 %v5254, %v5294
    %v5296 = vpop.f32.mrb[0].mxu0
    %v5297 = vadd.f32 %v5256, %v5296
    %v5298 = vpop.f32.mrb[0].mxu0
    %v5299 = vpop.f32.mrb[0].mxu0
    %5300 = vdwg.mxu0
    %5301 = vmatprep.subr.bf16.mxu0 %v4224
    %5302 = vmatpush1.bf16.msra.mxu0 %v4223
    %5303 = vmatprep.subr.bf16.mxu0 %v4231
    %5304 = vmatpush1.bf16.msra.mxu0 %v4230
    %5305 = vmatprep.subr.bf16.mxu0 %v4238
    %5306 = vmatpush1.bf16.msra.mxu0 %v4237
    %5307 = vmatprep.subr.bf16.mxu0 %v4245
    %5308 = vmatpush1.bf16.msra.mxu0 %v4244
    %5309 = vmatprep.subr.bf16.mxu0 %v4252
    %5310 = vmatpush1.bf16.msra.mxu0 %v4251
    %5311 = vmatprep.subr.bf16.mxu0 %v4259
    %5312 = vmatpush1.bf16.msra.mxu0 %v4258
    %5313 = vmatprep.subr.bf16.mxu0 %v4266
    %5314 = vmatpush1.bf16.msra.mxu0 %v4265
    %5315 = vmatprep.subr.bf16.mxu0 %v4273
    %5316 = vmatpush1.bf16.msra.mxu0 %v4272
    %5317 = vmatprep.subr.bf16.mxu0 %v4280
    %5318 = vmatpush1.bf16.msra.mxu0 %v4279
    %5319 = vmatprep.subr.bf16.mxu0 %v4287
    %5320 = vmatpush1.bf16.msra.mxu0 %v4286
    %5321 = vmatprep.subr.bf16.mxu0 %v4294
    %5322 = vmatpush1.bf16.msra.mxu0 %v4293
    %5323 = vmatprep.subr.bf16.mxu0 %v4301
    %5324 = vmatpush1.bf16.msra.mxu0 %v4300
    %5325 = vmatprep.subr.bf16.mxu0 %v4308
    %5326 = vmatpush1.bf16.msra.mxu0 %v4307
    %5327 = vmatprep.subr.bf16.mxu0 %v4315
    %5328 = vmatpush1.bf16.msra.mxu0 %v4314
    %5329 = vmatprep.subr.bf16.mxu0 %v4322
    %5330 = vmatpush1.bf16.msra.mxu0 %v4321
    %5331 = vmatprep.subr.bf16.mxu0 %v4329
    %5332 = vmatpush1.bf16.msra.mxu0 %v4328
    %5333 = vmatprep.mubr.bf16.mxu0 %v2035
    %5334 = vmatmul.mubr.bf16.gmra.mrb[0].mxu0 %v2034
    %v5335 = vpop.f32.mrb[0].mxu0
    %v5336 = vadd.f32 %v5295, %v5335
    %v5337 = vpop.f32.mrb[0].mxu0
    %v5338 = vadd.f32 %v5297, %v5337
    %v5339 = vpop.f32.mrb[0].mxu0
    %v5340 = vpop.f32.mrb[0].mxu0
    %5341 = vdwg.mxu0
    %5342 = vmatprep.subr.bf16.mxu0 %v4336
    %5343 = vmatpush1.bf16.msra.mxu0 %v4335
    %5344 = vmatprep.subr.bf16.mxu0 %v4343
    %5345 = vmatpush1.bf16.msra.mxu0 %v4342
    %5346 = vmatprep.subr.bf16.mxu0 %v4350
    %5347 = vmatpush1.bf16.msra.mxu0 %v4349
    %5348 = vmatprep.subr.bf16.mxu0 %v4357
    %5349 = vmatpush1.bf16.msra.mxu0 %v4356
    %5350 = vmatprep.subr.bf16.mxu0 %v4364
    %5351 = vmatpush1.bf16.msra.mxu0 %v4363
    %5352 = vmatprep.subr.bf16.mxu0 %v4371
    %5353 = vmatpush1.bf16.msra.mxu0 %v4370
    %5354 = vmatprep.subr.bf16.mxu0 %v4378
    %5355 = vmatpush1.bf16.msra.mxu0 %v4377
    %5356 = vmatprep.subr.bf16.mxu0 %v4385
    %5357 = vmatpush1.bf16.msra.mxu0 %v4384
    %5358 = vmatprep.subr.bf16.mxu0 %v4392
    %5359 = vmatpush1.bf16.msra.mxu0 %v4391
    %5360 = vmatprep.subr.bf16.mxu0 %v4399
    %5361 = vmatpush1.bf16.msra.mxu0 %v4398
    %5362 = vmatprep.subr.bf16.mxu0 %v4406
    %5363 = vmatpush1.bf16.msra.mxu0 %v4405
    %5364 = vmatprep.subr.bf16.mxu0 %v4413
    %5365 = vmatpush1.bf16.msra.mxu0 %v4412
    %5366 = vmatprep.subr.bf16.mxu0 %v4420
    %5367 = vmatpush1.bf16.msra.mxu0 %v4419
    %5368 = vmatprep.subr.bf16.mxu0 %v4427
    %5369 = vmatpush1.bf16.msra.mxu0 %v4426
    %5370 = vmatprep.subr.bf16.mxu0 %v4434
    %5371 = vmatpush1.bf16.msra.mxu0 %v4433
    %5372 = vmatprep.subr.bf16.mxu0 %v4441
    %5373 = vmatpush1.bf16.msra.mxu0 %v4440
    %5374 = vmatprep.mubr.bf16.mxu0 %v2037
    %5375 = vmatmul.mubr.bf16.gmra.mrb[0].mxu0 %v2036
    %v5376 = vpop.f32.mrb[0].mxu0
    %v5377 = vadd.f32 %v5336, %v5376
    %v5378 = vpop.f32.mrb[0].mxu0
    %v5379 = vadd.f32 %v5338, %v5378
    %v5380 = vpop.f32.mrb[0].mxu0
    %v5381 = vpop.f32.mrb[0].mxu0
    %5382 = vdwg.mxu0
    %5383 = vmatprep.subr.bf16.mxu0 0
    %5384 = vmatpush1.bf16.msra.mxu0 %v4001
    %5385 = vmatprep.subr.bf16.mxu0 0
    %5386 = vmatpush1.bf16.msra.mxu0 %v4008
    %5387 = vmatprep.subr.bf16.mxu0 0
    %5388 = vmatpush1.bf16.msra.mxu0 %v4015
    %5389 = vmatprep.subr.bf16.mxu0 0
    %5390 = vmatpush1.bf16.msra.mxu0 %v4022
    %5391 = vmatprep.subr.bf16.mxu0 0
    %5392 = vmatpush1.bf16.msra.mxu0 %v4029
    %5393 = vmatprep.subr.bf16.mxu0 0
    %5394 = vmatpush1.bf16.msra.mxu0 %v4036
    %5395 = vmatprep.subr.bf16.mxu0 0
    %5396 = vmatpush1.bf16.msra.mxu0 %v4043
    %5397 = vmatprep.subr.bf16.mxu0 0
    %5398 = vmatpush1.bf16.msra.mxu0 %v4050
    %5399 = vmatprep.subr.bf16.mxu0 0
    %5400 = vmatpush1.bf16.msra.mxu0 %v4057
    %5401 = vmatprep.subr.bf16.mxu0 0
    %5402 = vmatpush1.bf16.msra.mxu0 %v4064
    %5403 = vmatprep.subr.bf16.mxu0 0
    %5404 = vmatpush1.bf16.msra.mxu0 %v4071
    %5405 = vmatprep.subr.bf16.mxu0 0
    %5406 = vmatpush1.bf16.msra.mxu0 %v4078
    %5407 = vmatprep.subr.bf16.mxu0 0
    %5408 = vmatpush1.bf16.msra.mxu0 %v4085
    %5409 = vmatprep.subr.bf16.mxu0 0
    %5410 = vmatpush1.bf16.msra.mxu0 %v4092
    %5411 = vmatprep.subr.bf16.mxu0 0
    %5412 = vmatpush1.bf16.msra.mxu0 %v4099
    %5413 = vmatprep.subr.bf16.mxu0 0
    %5414 = vmatpush1.bf16.msra.mxu0 %v4106
    %5415 = vmatprep.mubr.bf16.mxu0 %v2031
    %5416 = vmatmul.mubr.bf16.gmra.mrb[0].mxu0 %v2030
    %v5417 = vpop.f32.mrb[0].mxu0
    %v5418 = vadd.f32 %v2579, %v5417
    %v5419 = vpop.f32.mrb[0].mxu0
    %v5420 = vpop.f32.mrb[0].mxu0
    %v5421 = vpop.f32.mrb[0].mxu0
    %5422 = vdwg.mxu0
    %5423 = vmatprep.subr.bf16.mxu0 0
    %5424 = vmatpush1.bf16.msra.mxu0 %v4113
    %5425 = vmatprep.subr.bf16.mxu0 0
    %5426 = vmatpush1.bf16.msra.mxu0 %v4120
    %5427 = vmatprep.subr.bf16.mxu0 0
    %5428 = vmatpush1.bf16.msra.mxu0 %v4127
    %5429 = vmatprep.subr.bf16.mxu0 0
    %5430 = vmatpush1.bf16.msra.mxu0 %v4134
    %5431 = vmatprep.subr.bf16.mxu0 0
    %5432 = vmatpush1.bf16.msra.mxu0 %v4141
    %5433 = vmatprep.subr.bf16.mxu0 0
    %5434 = vmatpush1.bf16.msra.mxu0 %v4148
    %5435 = vmatprep.subr.bf16.mxu0 0
    %5436 = vmatpush1.bf16.msra.mxu0 %v4155
    %5437 = vmatprep.subr.bf16.mxu0 0
    %5438 = vmatpush1.bf16.msra.mxu0 %v4162
    %5439 = vmatprep.subr.bf16.mxu0 0
    %5440 = vmatpush1.bf16.msra.mxu0 %v4169
    %5441 = vmatprep.subr.bf16.mxu0 0
    %5442 = vmatpush1.bf16.msra.mxu0 %v4176
    %5443 = vmatprep.subr.bf16.mxu0 0
    %5444 = vmatpush1.bf16.msra.mxu0 %v4183
    %5445 = vmatprep.subr.bf16.mxu0 0
    %5446 = vmatpush1.bf16.msra.mxu0 %v4190
    %5447 = vmatprep.subr.bf16.mxu0 0
    %5448 = vmatpush1.bf16.msra.mxu0 %v4197
    %5449 = vmatprep.subr.bf16.mxu0 0
    %5450 = vmatpush1.bf16.msra.mxu0 %v4204
    %5451 = vmatprep.subr.bf16.mxu0 0
    %5452 = vmatpush1.bf16.msra.mxu0 %v4211
    %5453 = vmatprep.subr.bf16.mxu0 0
    %5454 = vmatpush1.bf16.msra.mxu0 %v4218
    %5455 = vmatprep.mubr.bf16.mxu0 %v2033
    %5456 = vmatmul.mubr.bf16.gmra.mrb[0].mxu0 %v2032
    %v5457 = vpop.f32.mrb[0].mxu0
    %v5458 = vadd.f32 %v5418, %v5457
    %v5459 = vpop.f32.mrb[0].mxu0
    %v5460 = vpop.f32.mrb[0].mxu0
    %v5461 = vpop.f32.mrb[0].mxu0
    %5462 = vdwg.mxu0
    %5463 = vmatprep.subr.bf16.mxu0 0
    %5464 = vmatpush1.bf16.msra.mxu0 %v4225
    %5465 = vmatprep.subr.bf16.mxu0 0
    %5466 = vmatpush1.bf16.msra.mxu0 %v4232
    %5467 = vmatprep.subr.bf16.mxu0 0
    %5468 = vmatpush1.bf16.msra.mxu0 %v4239
    %5469 = vmatprep.subr.bf16.mxu0 0
    %5470 = vmatpush1.bf16.msra.mxu0 %v4246
    %5471 = vmatprep.subr.bf16.mxu0 0
    %5472 = vmatpush1.bf16.msra.mxu0 %v4253
    %5473 = vmatprep.subr.bf16.mxu0 0
    %5474 = vmatpush1.bf16.msra.mxu0 %v4260
    %5475 = vmatprep.subr.bf16.mxu0 0
    %5476 = vmatpush1.bf16.msra.mxu0 %v4267
    %5477 = vmatprep.subr.bf16.mxu0 0
    %5478 = vmatpush1.bf16.msra.mxu0 %v4274
    %5479 = vmatprep.subr.bf16.mxu0 0
    %5480 = vmatpush1.bf16.msra.mxu0 %v4281
    %5481 = vmatprep.subr.bf16.mxu0 0
    %5482 = vmatpush1.bf16.msra.mxu0 %v4288
    %5483 = vmatprep.subr.bf16.mxu0 0
    %5484 = vmatpush1.bf16.msra.mxu0 %v4295
    %5485 = vmatprep.subr.bf16.mxu0 0
    %5486 = vmatpush1.bf16.msra.mxu0 %v4302
    %5487 = vmatprep.subr.bf16.mxu0 0
    %5488 = vmatpush1.bf16.msra.mxu0 %v4309
    %5489 = vmatprep.subr.bf16.mxu0 0
    %5490 = vmatpush1.bf16.msra.mxu0 %v4316
    %5491 = vmatprep.subr.bf16.mxu0 0
    %5492 = vmatpush1.bf16.msra.mxu0 %v4323
    %5493 = vmatprep.subr.bf16.mxu0 0
    %5494 = vmatpush1.bf16.msra.mxu0 %v4330
    %5495 = vmatprep.mubr.bf16.mxu0 %v2035
    %5496 = vmatmul.mubr.bf16.gmra.mrb[0].mxu0 %v2034
    %v5497 = vpop.f32.mrb[0].mxu0
    %v5498 = vadd.f32 %v5458, %v5497
    %v5499 = vpop.f32.mrb[0].mxu0
    %v5500 = vpop.f32.mrb[0].mxu0
    %v5501 = vpop.f32.mrb[0].mxu0
    %5502 = vdwg.mxu0
    %5503 = vmatprep.subr.bf16.mxu0 0
    %5504 = vmatpush1.bf16.msra.mxu0 %v4337
    %5505 = vmatprep.subr.bf16.mxu0 0
    %5506 = vmatpush1.bf16.msra.mxu0 %v4344
    %5507 = vmatprep.subr.bf16.mxu0 0
    %5508 = vmatpush1.bf16.msra.mxu0 %v4351
    %5509 = vmatprep.subr.bf16.mxu0 0
    %5510 = vmatpush1.bf16.msra.mxu0 %v4358
    %5511 = vmatprep.subr.bf16.mxu0 0
    %5512 = vmatpush1.bf16.msra.mxu0 %v4365
    %5513 = vmatprep.subr.bf16.mxu0 0
    %5514 = vmatpush1.bf16.msra.mxu0 %v4372
    %5515 = vmatprep.subr.bf16.mxu0 0
    %5516 = vmatpush1.bf16.msra.mxu0 %v4379
    %5517 = vmatprep.subr.bf16.mxu0 0
    %5518 = vmatpush1.bf16.msra.mxu0 %v4386
    %5519 = vmatprep.subr.bf16.mxu0 0
    %5520 = vmatpush1.bf16.msra.mxu0 %v4393
    %5521 = vmatprep.subr.bf16.mxu0 0
    %5522 = vmatpush1.bf16.msra.mxu0 %v4400
    %5523 = vmatprep.subr.bf16.mxu0 0
    %5524 = vmatpush1.bf16.msra.mxu0 %v4407
    %5525 = vmatprep.subr.bf16.mxu0 0
    %5526 = vmatpush1.bf16.msra.mxu0 %v4414
    %5527 = vmatprep.subr.bf16.mxu0 0
    %5528 = vmatpush1.bf16.msra.mxu0 %v4421
    %5529 = vmatprep.subr.bf16.mxu0 0
    %5530 = vmatpush1.bf16.msra.mxu0 %v4428
    %5531 = vmatprep.subr.bf16.mxu0 0
    %5532 = vmatpush1.bf16.msra.mxu0 %v4435
    %5533 = vmatprep.subr.bf16.mxu0 0
    %5534 = vmatpush1.bf16.msra.mxu0 %v4442
    %5535 = vmatprep.mubr.bf16.mxu0 %v2037
    %5536 = vmatmul.mubr.bf16.gmra.mrb[0].mxu0 %v2036
    %v5537 = vpop.f32.mrb[0].mxu0
    %v5538 = vadd.f32 %v5498, %v5537
    %v5539 = vpop.f32.mrb[0].mxu0
    %v5540 = vpop.f32.mrb[0].mxu0
    %v5541 = vpop.f32.mrb[0].mxu0
    %5542 = vdwg.mxu0
    %5543 = vst [vmem:[#allocation11] sm:$0xff] %v5049
    %5544 = vst [vmem:[#allocation11 + $0x8] sm:$0xff] %v5051
    %5545 = vst [vmem:[#allocation11 + $0x10] sm:$0xff] %v5213
    %5546 = vst [vmem:[#allocation11 + $0x18] sm:$0xff] %v5215
    %5547 = vst [vmem:[#allocation11 + $0x20] sm:$0xff] %v5377
    %5548 = vst [vmem:[#allocation11 + $0x28] sm:$0xff] %v5379
    %5549 = vst [vmem:[#allocation11 + $0x30] sm:$0xff] %v5538
    // Predicated region
    $region42: #{tpu_custom_call.1} parent=1 // pred_check
      _
    $region43: #{tpu_custom_call.1} parent=1 // pred_check_branch
      %5551 = sbr.rel (0) target = $region45
    $region44: #{tpu_custom_call.1} parent=1 // pred_region
      %s5553 = ssub.s32 896, 896
      %5554 = vsyncadd [#allocation4], %s5553
      %s5556 = sshll.u32 [#allocation11], 4
      %s5557 = int_to_ptr.vmem [resolvable:$true] %s5556
      %5559 = dma.vmem_to_hbm [thread:$0]  %s5557, 896, %s5, [#allocation4]
    $region45: #{tpu_custom_call.1} parent=1 // pred_fallthru
      _
    // Predicated region
    $region46: #{tpu_custom_call.1} parent=1 // pred_check
      _
    $region47: #{tpu_custom_call.1} parent=1 // pred_check_branch
      %5561 = sbr.rel (0) target = $region49
    $region48: #{tpu_custom_call.1} parent=1 // pred_region
      %5562 = dma.done [#allocation4], 896
    $region49: #{tpu_custom_call.1} parent=1 // pred_fallthru
      _
    %5563 = vsyncpa [#allocation3], 1
    %5564 = vsyncpa [#allocation6], 1
    %5565 = vsyncpa [#allocation9], 1
    %5566 = vsyncpa [#allocation4], 1

</llo_original>
